<compile_context>
chip_gen: v7x
topology: tpu7x:2x2x1
jax: 0.10.0
libtpu: 0.0.40
codegen_flags: <defaults>
</compile_context>

<pallas_src>
import functools

import jax
import jax.numpy as jnp
from jax.experimental import pallas as pl
from jax.experimental.pallas import tpu as pltpu


# ---------------------------------------------------------------------------
# Fused Block kernel
# ---------------------------------------------------------------------------
def _block_kernel(x_ref,
                  g1_ref, b1_ref,
                  wqkv_ref, bqkv_ref, wproj_ref, bproj_ref,
                  g2_ref, b2_ref,
                  wfc1_ref, bfc1_ref, wfc2_ref, bfc2_ref,
                  out_ref,
                  *, num_heads, head_dim, eps, compute_dtype,
                  gelu_approx, softmax_approx):
    H, D = num_heads, head_dim
    HD = H * D
    cd = compute_dtype

    Bt, N, C = x_ref.shape
    R = Bt * N

    x = x_ref[...].reshape(R, C).astype(jnp.float32)            # (R, C)

    def layer_norm(z, g_ref, b_ref):
        # Two-pass centered statistics (numerically closer to torch LayerNorm
        # than E[x^2]-E[x]^2, same VPU cost).
        mu = jnp.mean(z, axis=-1, keepdims=True)
        cz = z - mu
        var = jnp.mean(cz * cz, axis=-1, keepdims=True)
        return cz * jax.lax.rsqrt(var + eps) * g_ref[...] + b_ref[...]

    # ---- norm1 + fused QKV projection (single lane-dense 2-D MXU call) ----
    fx = layer_norm(x, g1_ref, b1_ref)                           # (R, C) f32
    qkv = jnp.dot(fx.astype(cd), wqkv_ref[...],
                  preferred_element_type=jnp.float32)            # (R, 3*H*D)
    qkv = qkv + bqkv_ref[...]     # attention scale pre-folded into q columns

    # ---- self-attention per (batch row-block, head) -------------------------
    # Unrolled 2-D MXU calls over static lane slices of the qkv slab: identical
    # MXU work to a head-batched dot_general but without broadcasting fx to
    # (3H, N, C) or relayouting qkv into per-head slabs.
    ctx_rows = []
    for b in range(Bt):
        r0 = b * N
        head_ctx = []
        for h in range(H):
            q = qkv[r0:r0 + N, h * D:(h + 1) * D].astype(cd)
            k = qkv[r0:r0 + N, HD + h * D:HD + (h + 1) * D].astype(cd)
            v = qkv[r0:r0 + N, 2 * HD + h * D:2 * HD + (h + 1) * D].astype(cd)

            s = jax.lax.dot_general(q, k, (((1,), (1,)), ((), ())),
                                    preferred_element_type=jnp.float32)  # (N,N)
            s = s - jnp.max(s, axis=-1, keepdims=True)
            p = jnp.exp(s)
            denom = jnp.sum(p, axis=-1, keepdims=True)
            ctx = jnp.dot(p.astype(cd), v,
                          preferred_element_type=jnp.float32)            # (N,D)
            # Normalize the (N, D) context rather than the (N, N) probs:
            # D/N times fewer VPU multiplies; reciprocal runs on the EUP slot.
            if softmax_approx:
                ctx = ctx * pl.reciprocal(denom, approx=True)
            else:
                ctx = ctx / denom
            head_ctx.append(ctx)
        ctx_rows.append(head_ctx[0] if H == 1
                        else jnp.concatenate(head_ctx, axis=-1))          # (N,HD)
    ctx_all = ctx_rows[0] if Bt == 1 else jnp.concatenate(ctx_rows, axis=0)

    # ---- output projection: single lane-dense matmul; the reduction over
    # heads happens for free inside the MXU accumulator. -----------------------
    proj = jnp.dot(ctx_all.astype(cd), wproj_ref[...],
                   preferred_element_type=jnp.float32) + bproj_ref[...]   # (R,C)
    x1 = x + proj

    # ---- norm2 + MLP ---------------------------------------------------------
    fx2 = layer_norm(x1, g2_ref, b2_ref)
    h1 = jnp.dot(fx2.astype(cd), wfc1_ref[...],
                 preferred_element_type=jnp.float32) + bfc1_ref[...]      # (R,M)
    if gelu_approx:
        # tanh-approximate GELU -> EUP slot (set gelu_approx=False for
        # bit-parity with torch nn.GELU's exact erf form).
        c0 = 0.7978845608028654  # sqrt(2/pi)
        h1 = 0.5 * h1 * (1.0 + jnp.tanh(c0 * (h1 + 0.044715 * (h1 * h1 * h1))))
    else:
        h1 = 0.5 * h1 * (1.0 + jax.lax.erf(h1 * (2.0 ** -0.5)))
    h2 = jnp.dot(h1.astype(cd), wfc2_ref[...],
                 preferred_element_type=jnp.float32) + bfc2_ref[...]      # (R,C)

    out_ref[...] = (x1 + h2).reshape(Bt, N, C).astype(out_ref.dtype)


# ---------------------------------------------------------------------------
# Host-side wrappers
# ---------------------------------------------------------------------------
def _pick_batch_block(B, N, C, HD, M):
    """Largest Bt dividing B that keeps >= 2 grid steps when B >= 2 (both v7x
    TensorCores busy) and a rough f32 live-set under ~8 MiB."""
    budget = 8 * 1024 * 1024
    per_batch = 4 * N * (5 * C + 5 * HD + 2 * M) + 8 * N * N
    best = 1
    for bt in range(1, B + 1):
        if B % bt:
            continue
        if B >= 2 and B // bt < 2:
            continue
        if bt * per_batch <= budget:
            best = bt
    return best


def prepare_params(params, *, num_heads, head_dim, qk_scale=None,
                   compute_dtype=jnp.bfloat16):
    """One-time transform of torch-layout parameters into kernel layouts.

    torch layouts (as in the nn.Module):
      qkv_w (3*H*D, C), qkv_b (3*H*D,)   row index = w*H*D + h*D + d
      proj_w (C, H*D),  proj_b (C,)
      fc1_w (M, C), fc1_b (M,), fc2_w (C, M), fc2_b (C,)
      ln{1,2}_{w,b} (C,)
    Kernel layouts (all lane-dense):
      wqkv (C, 3*H*D) with the attention scale folded into the q columns,
      wproj (H*D, C), wfc1 (C, M), wfc2 (M, C); biases as (1, X) f32 rows.
    Big matmul weights are cast ONCE to `compute_dtype`; accumulation in the
    kernel stays f32.
    """
    H, D = num_heads, head_dim
    HD = H * D
    scale = qk_scale if qk_scale is not None else head_dim ** (-0.5)
    cd = compute_dtype
    f32 = jnp.float32

    col_scale = jnp.concatenate(
        [jnp.full((HD,), scale, f32), jnp.ones((2 * HD,), f32)])

    wqkv = params["qkv_w"].astype(f32).T * col_scale[None, :]       # (C, 3HD)
    bqkv = (params["qkv_b"].astype(f32) * col_scale).reshape(1, 3 * HD)

    return {
        "g1": params["ln1_w"].astype(f32).reshape(1, -1),
        "b1": params["ln1_b"].astype(f32).reshape(1, -1),
        "g2": params["ln2_w"].astype(f32).reshape(1, -1),
        "b2": params["ln2_b"].astype(f32).reshape(1, -1),
        "wqkv": wqkv.astype(cd),
        "bqkv": bqkv,
        "wproj": params["proj_w"].astype(f32).T.astype(cd),         # (HD, C)
        "bproj": params["proj_b"].astype(f32).reshape(1, -1),
        "wfc1": params["fc1_w"].astype(f32).T.astype(cd),           # (C, M)
        "bfc1": params["fc1_b"].astype(f32).reshape(1, -1),
        "wfc2": params["fc2_w"].astype(f32).T.astype(cd),           # (M, C)
        "bfc2": params["fc2_b"].astype(f32).reshape(1, -1),
    }


def block_forward(x, prep, *, num_heads, head_dim, eps=1e-5, batch_block=None,
                  gelu_approx=True, vmem_limit_bytes=48 * 1024 * 1024):
    """Fused Block forward.  x: (B, N, C) float32.
    Returns (x_out, None, None), matching Block.forward(x, None, None)."""
    B, N, C = x.shape
    H, D = num_heads, head_dim
    HD = H * D
    M = prep["wfc1"].shape[1]
    cd = prep["wqkv"].dtype
    softmax_approx = cd != jnp.float32  # exact softmax in "bit-closer" f32 mode

    Bt = batch_block or _pick_batch_block(B, N, C, HD, M)
    assert B % Bt == 0, "batch must be divisible by the batch block"

    kernel = functools.partial(
        _block_kernel, num_heads=H, head_dim=D, eps=eps, compute_dtype=cd,
        gelu_approx=gelu_approx, softmax_approx=softmax_approx)

    # Weights / biases: whole-array VMEM residents -> a single copy for the
    # whole kernel, no double-buffering of never-revisited operands.
    def vmem():
        return pl.BlockSpec(memory_space=pltpu.MemorySpace.VMEM)

    out = pl.pallas_call(
        kernel,
        out_shape=jax.ShapeDtypeStruct((B, N, C), x.dtype),
        grid_spec=pltpu.PrefetchScalarGridSpec(
            num_scalar_prefetch=0,
            grid=(B // Bt,),
            in_specs=[pl.BlockSpec((Bt, N, C), lambda i: (i, 0, 0))]
                     + [vmem() for _ in range(12)],
            out_specs=pl.BlockSpec((Bt, N, C), lambda i: (i, 0, 0)),
        ),
        compiler_params=pltpu.CompilerParams(
            dimension_semantics=("parallel",),
            # Keep well below v7x's 64 MiB physical VMEM per TensorCore.
            vmem_limit_bytes=vmem_limit_bytes),
    )(x,
      prep["g1"], prep["b1"],
      prep["wqkv"], prep["bqkv"], prep["wproj"], prep["bproj"],
      prep["g2"], prep["b2"],
      prep["wfc1"], prep["bfc1"], prep["wfc2"], prep["bfc2"])
    return out, None, None


# ---------------------------------------------------------------------------
# Pure-JAX reference (f32, exact erf GELU / exact softmax) and init
# ---------------------------------------------------------------------------
def block_reference(x, params, *, num_heads, head_dim, qk_scale=None, eps=1e-5):
    B, N, C = x.shape
    H, D = num_heads, head_dim
    scale = qk_scale if qk_scale is not None else head_dim ** (-0.5)

    def ln(z, g, b):
        mu = jnp.mean(z, -1, keepdims=True)
        var = jnp.mean((z - mu) ** 2, -1, keepdims=True)
        return (z - mu) / jnp.sqrt(var + eps) * g + b

    fx = ln(x, params["ln1_w"], params["ln1_b"])
    qkv = fx @ params["qkv_w"].T + params["qkv_b"]
    qkv = qkv.reshape(B, N, 3, H, D).transpose(2, 0, 3, 1, 4)
    q, k, v = qkv[0], qkv[1], qkv[2]
    attn = jnp.einsum("bhqd,bhkd->bhqk", q, k) * scale
    attn = jax.nn.softmax(attn, axis=-1)
    ctx = jnp.einsum("bhqk,bhkd->bhqd", attn, v)
    ctx = ctx.transpose(0, 2, 1, 3).reshape(B, N, H * D)
    x = x + (ctx @ params["proj_w"].T + params["proj_b"])
    fx = ln(x, params["ln2_w"], params["ln2_b"])
    h = fx @ params["fc1_w"].T + params["fc1_b"]
    h = 0.5 * h * (1.0 + jax.lax.erf(h * (2.0 ** -0.5)))   # exact nn.GELU
    x = x + (h @ params["fc2_w"].T + params["fc2_b"])
    return x, None, None


def init_params(key, dim, num_heads, head_dim, mlp_features):
    """Deterministic torch-layout parameters (LayerNorms at torch default)."""
    H, D = num_heads, head_dim
    ks = jax.random.split(key, 8)
    s = 0.02
    f32 = jnp.float32
    return {
        "ln1_w": jnp.ones((dim,), f32), "ln1_b": jnp.zeros((dim,), f32),
        "ln2_w": jnp.ones((dim,), f32), "ln2_b": jnp.zeros((dim,), f32),
        "qkv_w": s * jax.random.normal(ks[0], (3 * H * D, dim), f32),
        "qkv_b": s * jax.random.normal(ks[1], (3 * H * D,), f32),
        "proj_w": s * jax.random.normal(ks[2], (dim, H * D), f32),
        "proj_b": s * jax.random.normal(ks[3], (dim,), f32),
        "fc1_w": s * jax.random.normal(ks[4], (mlp_features, dim), f32),
        "fc1_b": s * jax.random.normal(ks[5], (mlp_features,), f32),
        "fc2_w": s * jax.random.normal(ks[6], (dim, mlp_features), f32),
        "fc2_b": s * jax.random.normal(ks[7], (dim,), f32),
    }


if __name__ == "__main__":
    # Small, lane-dense demo shapes (C, N multiples of 128; head_dim=64 as in
    # the module default).
    B, N = 2, 128
    dim = 128
    num_heads = 2
    head_dim = 64
    mlp_features = 256

    key = jax.random.PRNGKey(0)
    kx, kp = jax.random.split(key)
    x = jax.random.normal(kx, (B, N, dim), jnp.float32)
    params = init_params(kp, dim, num_heads, head_dim, mlp_features)
    prep = prepare_params(params, num_heads=num_heads, head_dim=head_dim,
                          compute_dtype=jnp.bfloat16)

    out, emb_mask, layer_mask = block_forward(
        x, prep, num_heads=num_heads, head_dim=head_dim)
    out = jax.block_until_ready(out)

    assert out.shape == (B, N, dim)
    assert emb_mask is None and layer_mask is None
    assert bool(jnp.all(jnp.isfinite(out)))

    ref, _, _ = block_reference(x, params, num_heads=num_heads,
                                head_dim=head_dim)
    max_err = float(jnp.max(jnp.abs(out - ref)))
    assert max_err < 3e-2, f"kernel/reference mismatch: max_err={max_err}"
    print("KERNEL_OK")
</pallas_src>

<mosaic_0001>
module attributes {stable_mosaic.version = 11 : i64} {
  func.func @_block_kernel(%arg0: i32, %arg1: memref<1x128x128xf32, #tpu.memory_space<vmem>>, %arg2: memref<1x128xf32, #tpu.memory_space<vmem>>, %arg3: memref<1x128xf32, #tpu.memory_space<vmem>>, %arg4: memref<128x384xbf16, #tpu.memory_space<vmem>>, %arg5: memref<1x384xf32, #tpu.memory_space<vmem>>, %arg6: memref<128x128xbf16, #tpu.memory_space<vmem>>, %arg7: memref<1x128xf32, #tpu.memory_space<vmem>>, %arg8: memref<1x128xf32, #tpu.memory_space<vmem>>, %arg9: memref<1x128xf32, #tpu.memory_space<vmem>>, %arg10: memref<128x256xbf16, #tpu.memory_space<vmem>>, %arg11: memref<1x256xf32, #tpu.memory_space<vmem>>, %arg12: memref<256x128xbf16, #tpu.memory_space<vmem>>, %arg13: memref<1x128xf32, #tpu.memory_space<vmem>>, %arg14: memref<1x128x128xf32, #tpu.memory_space<vmem>>) attributes {dimension_semantics = [#tpu.dimension_semantics<parallel>], iteration_bounds = array<i64: 2>, scalar_prefetch = 0 : i64, scratch_operands = 0 : i64, tpu.core_type = #tpu.core_type<tc>, window_params = [{transform_indices = @transform_0, window_bounds = array<i64: 1, 128, 128>}, {pipeline_mode = #tpu.pipeline_mode<synchronous>, transform_indices = @transform_1, window_bounds = array<i64: 1, 128>}, {pipeline_mode = #tpu.pipeline_mode<synchronous>, transform_indices = @transform_2, window_bounds = array<i64: 1, 128>}, {pipeline_mode = #tpu.pipeline_mode<synchronous>, transform_indices = @transform_3, window_bounds = array<i64: 128, 384>}, {pipeline_mode = #tpu.pipeline_mode<synchronous>, transform_indices = @transform_4, window_bounds = array<i64: 1, 384>}, {pipeline_mode = #tpu.pipeline_mode<synchronous>, transform_indices = @transform_5, window_bounds = array<i64: 128, 128>}, {pipeline_mode = #tpu.pipeline_mode<synchronous>, transform_indices = @transform_6, window_bounds = array<i64: 1, 128>}, {pipeline_mode = #tpu.pipeline_mode<synchronous>, transform_indices = @transform_7, window_bounds = array<i64: 1, 128>}, {pipeline_mode = #tpu.pipeline_mode<synchronous>, transform_indices = @transform_8, window_bounds = array<i64: 1, 128>}, {pipeline_mode = #tpu.pipeline_mode<synchronous>, transform_indices = @transform_9, window_bounds = array<i64: 128, 256>}, {pipeline_mode = #tpu.pipeline_mode<synchronous>, transform_indices = @transform_10, window_bounds = array<i64: 1, 256>}, {pipeline_mode = #tpu.pipeline_mode<synchronous>, transform_indices = @transform_11, window_bounds = array<i64: 256, 128>}, {pipeline_mode = #tpu.pipeline_mode<synchronous>, transform_indices = @transform_12, window_bounds = array<i64: 1, 128>}, {transform_indices = @transform_13, window_bounds = array<i64: 1, 128, 128>}]} {
    %c0 = arith.constant 0 : index
    %c0_0 = arith.constant 0 : index
    %c0_1 = arith.constant 0 : index
    %0 = vector.load %arg1[%c0, %c0_0, %c0_1] : memref<1x128x128xf32, #tpu.memory_space<vmem>>, vector<1x128x128xf32>
    %1 = vector.shape_cast %0 : vector<1x128x128xf32> to vector<128x128xf32>
    %cst = arith.constant dense<0.000000e+00> : vector<128xf32>
    %2 = vector.multi_reduction <add>, %1, %cst [1] : vector<128x128xf32> to vector<128xf32>
    %3 = vector.shape_cast %2 : vector<128xf32> to vector<128x1xf32>
    %cst_2 = arith.constant 1.280000e+02 : f32
    %4 = vector.broadcast %cst_2 : f32 to vector<128x1xf32>
    %5 = arith.divf %3, %4 : vector<128x1xf32>
    %6 = vector.broadcast %5 : vector<128x1xf32> to vector<128x128xf32>
    %7 = arith.subf %1, %6 : vector<128x128xf32>
    %8 = arith.mulf %7, %7 : vector<128x128xf32>
    %cst_3 = arith.constant dense<0.000000e+00> : vector<128xf32>
    %9 = vector.multi_reduction <add>, %8, %cst_3 [1] : vector<128x128xf32> to vector<128xf32>
    %10 = vector.shape_cast %9 : vector<128xf32> to vector<128x1xf32>
    %cst_4 = arith.constant 1.280000e+02 : f32
    %11 = vector.broadcast %cst_4 : f32 to vector<128x1xf32>
    %12 = arith.divf %10, %11 : vector<128x1xf32>
    %cst_5 = arith.constant 9.99999974E-6 : f32
    %13 = vector.broadcast %cst_5 : f32 to vector<128x1xf32>
    %14 = arith.addf %12, %13 : vector<128x1xf32>
    %15 = math.rsqrt %14 : vector<128x1xf32>
    %16 = vector.broadcast %15 : vector<128x1xf32> to vector<128x128xf32>
    %17 = arith.mulf %7, %16 : vector<128x128xf32>
    %c0_6 = arith.constant 0 : index
    %c0_7 = arith.constant 0 : index
    %18 = vector.load %arg2[%c0_6, %c0_7] : memref<1x128xf32, #tpu.memory_space<vmem>>, vector<1x128xf32>
    %19 = vector.broadcast %18 : vector<1x128xf32> to vector<128x128xf32>
    %20 = arith.mulf %17, %19 : vector<128x128xf32>
    %c0_8 = arith.constant 0 : index
    %c0_9 = arith.constant 0 : index
    %21 = vector.load %arg3[%c0_8, %c0_9] : memref<1x128xf32, #tpu.memory_space<vmem>>, vector<1x128xf32>
    %22 = vector.broadcast %21 : vector<1x128xf32> to vector<128x128xf32>
    %23 = arith.addf %20, %22 : vector<128x128xf32>
    %24 = arith.truncf %23 : vector<128x128xf32> to vector<128x128xbf16>
    %c0_10 = arith.constant 0 : index
    %c0_11 = arith.constant 0 : index
    %25 = vector.load %arg4[%c0_10, %c0_11] : memref<128x384xbf16, #tpu.memory_space<vmem>>, vector<128x384xbf16>
    %cst_12 = arith.constant dense<0.000000e+00> : vector<128x384xf32>
    %26 = tpu.matmul %24, %25, %cst_12 {dimension_numbers = #tpu.dot_dimension_numbers<[1], [0], [0], [1], [0, 0, 1, 1], [], []>} : vector<128x128xbf16>, vector<128x384xbf16>, vector<128x384xf32> -> vector<128x384xf32>
    %c0_13 = arith.constant 0 : index
    %c0_14 = arith.constant 0 : index
    %27 = vector.load %arg5[%c0_13, %c0_14] : memref<1x384xf32, #tpu.memory_space<vmem>>, vector<1x384xf32>
    %28 = vector.broadcast %27 : vector<1x384xf32> to vector<128x384xf32>
    %29 = arith.addf %26, %28 : vector<128x384xf32>
    %30 = vector.extract_strided_slice %29 {offsets = [0, 0], sizes = [128, 64], strides = [1, 1]} : vector<128x384xf32> to vector<128x64xf32>
    %31 = arith.truncf %30 : vector<128x64xf32> to vector<128x64xbf16>
    %32 = vector.extract_strided_slice %29 {offsets = [0, 128], sizes = [128, 64], strides = [1, 1]} : vector<128x384xf32> to vector<128x64xf32>
    %33 = arith.truncf %32 : vector<128x64xf32> to vector<128x64xbf16>
    %34 = vector.extract_strided_slice %29 {offsets = [0, 256], sizes = [128, 64], strides = [1, 1]} : vector<128x384xf32> to vector<128x64xf32>
    %35 = arith.truncf %34 : vector<128x64xf32> to vector<128x64xbf16>
    %cst_15 = arith.constant dense<0.000000e+00> : vector<128x128xf32>
    %36 = tpu.matmul %31, %33, %cst_15 {dimension_numbers = #tpu.dot_dimension_numbers<[1], [1], [0], [0], [0, 0, 1, 0], [], []>} : vector<128x64xbf16>, vector<128x64xbf16>, vector<128x128xf32> -> vector<128x128xf32>
    %cst_16 = arith.constant dense<0xFF800000> : vector<128xf32>
    %37 = vector.multi_reduction <maximumf>, %36, %cst_16 [1] : vector<128x128xf32> to vector<128xf32>
    %38 = vector.shape_cast %37 : vector<128xf32> to vector<128x1xf32>
    %39 = vector.broadcast %38 : vector<128x1xf32> to vector<128x128xf32>
    %40 = arith.subf %36, %39 : vector<128x128xf32>
    %41 = math.exp %40 : vector<128x128xf32>
    %cst_17 = arith.constant dense<0.000000e+00> : vector<128xf32>
    %42 = vector.multi_reduction <add>, %41, %cst_17 [1] : vector<128x128xf32> to vector<128xf32>
    %43 = vector.shape_cast %42 : vector<128xf32> to vector<128x1xf32>
    %44 = arith.truncf %41 : vector<128x128xf32> to vector<128x128xbf16>
    %cst_18 = arith.constant dense<0.000000e+00> : vector<128x64xf32>
    %45 = tpu.matmul %44, %35, %cst_18 {dimension_numbers = #tpu.dot_dimension_numbers<[1], [0], [0], [1], [0, 0, 1, 1], [], []>} : vector<128x128xbf16>, vector<128x64xbf16>, vector<128x64xf32> -> vector<128x64xf32>
    %46 = tpu.reciprocal %43 {approx = true} : vector<128x1xf32> -> vector<128x1xf32>
    %47 = vector.broadcast %46 : vector<128x1xf32> to vector<128x64xf32>
    %48 = arith.mulf %45, %47 : vector<128x64xf32>
    %49 = vector.extract_strided_slice %29 {offsets = [0, 64], sizes = [128, 64], strides = [1, 1]} : vector<128x384xf32> to vector<128x64xf32>
    %50 = arith.truncf %49 : vector<128x64xf32> to vector<128x64xbf16>
    %51 = vector.extract_strided_slice %29 {offsets = [0, 192], sizes = [128, 64], strides = [1, 1]} : vector<128x384xf32> to vector<128x64xf32>
    %52 = arith.truncf %51 : vector<128x64xf32> to vector<128x64xbf16>
    %53 = vector.extract_strided_slice %29 {offsets = [0, 320], sizes = [128, 64], strides = [1, 1]} : vector<128x384xf32> to vector<128x64xf32>
    %54 = arith.truncf %53 : vector<128x64xf32> to vector<128x64xbf16>
    %cst_19 = arith.constant dense<0.000000e+00> : vector<128x128xf32>
    %55 = tpu.matmul %50, %52, %cst_19 {dimension_numbers = #tpu.dot_dimension_numbers<[1], [1], [0], [0], [0, 0, 1, 0], [], []>} : vector<128x64xbf16>, vector<128x64xbf16>, vector<128x128xf32> -> vector<128x128xf32>
    %cst_20 = arith.constant dense<0xFF800000> : vector<128xf32>
    %56 = vector.multi_reduction <maximumf>, %55, %cst_20 [1] : vector<128x128xf32> to vector<128xf32>
    %57 = vector.shape_cast %56 : vector<128xf32> to vector<128x1xf32>
    %58 = vector.broadcast %57 : vector<128x1xf32> to vector<128x128xf32>
    %59 = arith.subf %55, %58 : vector<128x128xf32>
    %60 = math.exp %59 : vector<128x128xf32>
    %cst_21 = arith.constant dense<0.000000e+00> : vector<128xf32>
    %61 = vector.multi_reduction <add>, %60, %cst_21 [1] : vector<128x128xf32> to vector<128xf32>
    %62 = vector.shape_cast %61 : vector<128xf32> to vector<128x1xf32>
    %63 = arith.truncf %60 : vector<128x128xf32> to vector<128x128xbf16>
    %cst_22 = arith.constant dense<0.000000e+00> : vector<128x64xf32>
    %64 = tpu.matmul %63, %54, %cst_22 {dimension_numbers = #tpu.dot_dimension_numbers<[1], [0], [0], [1], [0, 0, 1, 1], [], []>} : vector<128x128xbf16>, vector<128x64xbf16>, vector<128x64xf32> -> vector<128x64xf32>
    %65 = tpu.reciprocal %62 {approx = true} : vector<128x1xf32> -> vector<128x1xf32>
    %66 = vector.broadcast %65 : vector<128x1xf32> to vector<128x64xf32>
    %67 = arith.mulf %64, %66 : vector<128x64xf32>
    %68 = tpu.concatenate %48, %67 in 1 : vector<128x64xf32>, vector<128x64xf32> -> vector<128x128xf32>
    %69 = arith.truncf %68 : vector<128x128xf32> to vector<128x128xbf16>
    %c0_23 = arith.constant 0 : index
    %c0_24 = arith.constant 0 : index
    %70 = vector.load %arg6[%c0_23, %c0_24] : memref<128x128xbf16, #tpu.memory_space<vmem>>, vector<128x128xbf16>
    %cst_25 = arith.constant dense<0.000000e+00> : vector<128x128xf32>
    %71 = tpu.matmul %69, %70, %cst_25 {dimension_numbers = #tpu.dot_dimension_numbers<[1], [0], [0], [1], [0, 0, 1, 1], [], []>} : vector<128x128xbf16>, vector<128x128xbf16>, vector<128x128xf32> -> vector<128x128xf32>
    %c0_26 = arith.constant 0 : index
    %c0_27 = arith.constant 0 : index
    %72 = vector.load %arg7[%c0_26, %c0_27] : memref<1x128xf32, #tpu.memory_space<vmem>>, vector<1x128xf32>
    %73 = vector.broadcast %72 : vector<1x128xf32> to vector<128x128xf32>
    %74 = arith.addf %71, %73 : vector<128x128xf32>
    %75 = arith.addf %1, %74 : vector<128x128xf32>
    %cst_28 = arith.constant dense<0.000000e+00> : vector<128xf32>
    %76 = vector.multi_reduction <add>, %75, %cst_28 [1] : vector<128x128xf32> to vector<128xf32>
    %77 = vector.shape_cast %76 : vector<128xf32> to vector<128x1xf32>
    %cst_29 = arith.constant 1.280000e+02 : f32
    %78 = vector.broadcast %cst_29 : f32 to vector<128x1xf32>
    %79 = arith.divf %77, %78 : vector<128x1xf32>
    %80 = vector.broadcast %79 : vector<128x1xf32> to vector<128x128xf32>
    %81 = arith.subf %75, %80 : vector<128x128xf32>
    %82 = arith.mulf %81, %81 : vector<128x128xf32>
    %cst_30 = arith.constant dense<0.000000e+00> : vector<128xf32>
    %83 = vector.multi_reduction <add>, %82, %cst_30 [1] : vector<128x128xf32> to vector<128xf32>
    %84 = vector.shape_cast %83 : vector<128xf32> to vector<128x1xf32>
    %cst_31 = arith.constant 1.280000e+02 : f32
    %85 = vector.broadcast %cst_31 : f32 to vector<128x1xf32>
    %86 = arith.divf %84, %85 : vector<128x1xf32>
    %cst_32 = arith.constant 9.99999974E-6 : f32
    %87 = vector.broadcast %cst_32 : f32 to vector<128x1xf32>
    %88 = arith.addf %86, %87 : vector<128x1xf32>
    %89 = math.rsqrt %88 : vector<128x1xf32>
    %90 = vector.broadcast %89 : vector<128x1xf32> to vector<128x128xf32>
    %91 = arith.mulf %81, %90 : vector<128x128xf32>
    %c0_33 = arith.constant 0 : index
    %c0_34 = arith.constant 0 : index
    %92 = vector.load %arg8[%c0_33, %c0_34] : memref<1x128xf32, #tpu.memory_space<vmem>>, vector<1x128xf32>
    %93 = vector.broadcast %92 : vector<1x128xf32> to vector<128x128xf32>
    %94 = arith.mulf %91, %93 : vector<128x128xf32>
    %c0_35 = arith.constant 0 : index
    %c0_36 = arith.constant 0 : index
    %95 = vector.load %arg9[%c0_35, %c0_36] : memref<1x128xf32, #tpu.memory_space<vmem>>, vector<1x128xf32>
    %96 = vector.broadcast %95 : vector<1x128xf32> to vector<128x128xf32>
    %97 = arith.addf %94, %96 : vector<128x128xf32>
    %98 = arith.truncf %97 : vector<128x128xf32> to vector<128x128xbf16>
    %c0_37 = arith.constant 0 : index
    %c0_38 = arith.constant 0 : index
    %99 = vector.load %arg10[%c0_37, %c0_38] : memref<128x256xbf16, #tpu.memory_space<vmem>>, vector<128x256xbf16>
    %cst_39 = arith.constant dense<0.000000e+00> : vector<128x256xf32>
    %100 = tpu.matmul %98, %99, %cst_39 {dimension_numbers = #tpu.dot_dimension_numbers<[1], [0], [0], [1], [0, 0, 1, 1], [], []>} : vector<128x128xbf16>, vector<128x256xbf16>, vector<128x256xf32> -> vector<128x256xf32>
    %c0_40 = arith.constant 0 : index
    %c0_41 = arith.constant 0 : index
    %101 = vector.load %arg11[%c0_40, %c0_41] : memref<1x256xf32, #tpu.memory_space<vmem>>, vector<1x256xf32>
    %102 = vector.broadcast %101 : vector<1x256xf32> to vector<128x256xf32>
    %103 = arith.addf %100, %102 : vector<128x256xf32>
    %cst_42 = arith.constant 5.000000e-01 : f32
    %104 = vector.broadcast %cst_42 : f32 to vector<128x256xf32>
    %105 = arith.mulf %104, %103 : vector<128x256xf32>
    %106 = arith.mulf %103, %103 : vector<128x256xf32>
    %107 = arith.mulf %106, %103 : vector<128x256xf32>
    %cst_43 = arith.constant 4.471500e-02 : f32
    %108 = vector.broadcast %cst_43 : f32 to vector<128x256xf32>
    %109 = arith.mulf %108, %107 : vector<128x256xf32>
    %110 = arith.addf %103, %109 : vector<128x256xf32>
    %cst_44 = arith.constant 0.797884583 : f32
    %111 = vector.broadcast %cst_44 : f32 to vector<128x256xf32>
    %112 = arith.mulf %111, %110 : vector<128x256xf32>
    %113 = math.tanh %112 : vector<128x256xf32>
    %cst_45 = arith.constant 1.000000e+00 : f32
    %114 = vector.broadcast %cst_45 : f32 to vector<128x256xf32>
    %115 = arith.addf %114, %113 : vector<128x256xf32>
    %116 = arith.mulf %105, %115 : vector<128x256xf32>
    %117 = arith.truncf %116 : vector<128x256xf32> to vector<128x256xbf16>
    %c0_46 = arith.constant 0 : index
    %c0_47 = arith.constant 0 : index
    %118 = vector.load %arg12[%c0_46, %c0_47] : memref<256x128xbf16, #tpu.memory_space<vmem>>, vector<256x128xbf16>
    %cst_48 = arith.constant dense<0.000000e+00> : vector<128x128xf32>
    %119 = tpu.matmul %117, %118, %cst_48 {dimension_numbers = #tpu.dot_dimension_numbers<[1], [0], [0], [1], [0, 0, 1, 1], [], []>} : vector<128x256xbf16>, vector<256x128xbf16>, vector<128x128xf32> -> vector<128x128xf32>
    %c0_49 = arith.constant 0 : index
    %c0_50 = arith.constant 0 : index
    %120 = vector.load %arg13[%c0_49, %c0_50] : memref<1x128xf32, #tpu.memory_space<vmem>>, vector<1x128xf32>
    %121 = vector.broadcast %120 : vector<1x128xf32> to vector<128x128xf32>
    %122 = arith.addf %119, %121 : vector<128x128xf32>
    %123 = arith.addf %75, %122 : vector<128x128xf32>
    %124 = vector.shape_cast %123 : vector<128x128xf32> to vector<1x128x128xf32>
    %c0_51 = arith.constant 0 : index
    %c0_52 = arith.constant 0 : index
    %c0_53 = arith.constant 0 : index
    %125 = vector.load %arg14[%c0_51, %c0_52, %c0_53] : memref<1x128x128xf32, #tpu.memory_space<vmem>>, vector<1x128x128xf32>
    tpu.vector_store %arg14[%c0_51, %c0_52, %c0_53], %124 {strides = array<i32>} : memref<1x128x128xf32, #tpu.memory_space<vmem>>, vector<1x128x128xf32>,
    return
  }
  func.func @transform_0(%arg0: i32) -> (i32, i32, i32) {
    %c0_i32 = arith.constant 0 : i32
    %c0_i32_0 = arith.constant 0 : i32
    %c0_i32_1 = arith.constant 0 : i32
    return %arg0, %c0_i32, %c0_i32_0 : i32, i32, i32
  }
  func.func @transform_1(%arg0: i32) -> (i32, i32) {
    %c0_i32 = arith.constant 0 : i32
    %c0_i32_0 = arith.constant 0 : i32
    %c0_i32_1 = arith.constant 0 : i32
    return %c0_i32, %c0_i32_0 : i32, i32
  }
  func.func @transform_2(%arg0: i32) -> (i32, i32) {
    %c0_i32 = arith.constant 0 : i32
    %c0_i32_0 = arith.constant 0 : i32
    %c0_i32_1 = arith.constant 0 : i32
    return %c0_i32, %c0_i32_0 : i32, i32
  }
  func.func @transform_3(%arg0: i32) -> (i32, i32) {
    %c0_i32 = arith.constant 0 : i32
    %c0_i32_0 = arith.constant 0 : i32
    %c0_i32_1 = arith.constant 0 : i32
    return %c0_i32, %c0_i32_0 : i32, i32
  }
  func.func @transform_4(%arg0: i32) -> (i32, i32) {
    %c0_i32 = arith.constant 0 : i32
    %c0_i32_0 = arith.constant 0 : i32
    %c0_i32_1 = arith.constant 0 : i32
    return %c0_i32, %c0_i32_0 : i32, i32
  }
  func.func @transform_5(%arg0: i32) -> (i32, i32) {
    %c0_i32 = arith.constant 0 : i32
    %c0_i32_0 = arith.constant 0 : i32
    %c0_i32_1 = arith.constant 0 : i32
    return %c0_i32, %c0_i32_0 : i32, i32
  }
  func.func @transform_6(%arg0: i32) -> (i32, i32) {
    %c0_i32 = arith.constant 0 : i32
    %c0_i32_0 = arith.constant 0 : i32
    %c0_i32_1 = arith.constant 0 : i32
    return %c0_i32, %c0_i32_0 : i32, i32
  }
  func.func @transform_7(%arg0: i32) -> (i32, i32) {
    %c0_i32 = arith.constant 0 : i32
    %c0_i32_0 = arith.constant 0 : i32
    %c0_i32_1 = arith.constant 0 : i32
    return %c0_i32, %c0_i32_0 : i32, i32
  }
  func.func @transform_8(%arg0: i32) -> (i32, i32) {
    %c0_i32 = arith.constant 0 : i32
    %c0_i32_0 = arith.constant 0 : i32
    %c0_i32_1 = arith.constant 0 : i32
    return %c0_i32, %c0_i32_0 : i32, i32
  }
  func.func @transform_9(%arg0: i32) -> (i32, i32) {
    %c0_i32 = arith.constant 0 : i32
    %c0_i32_0 = arith.constant 0 : i32
    %c0_i32_1 = arith.constant 0 : i32
    return %c0_i32, %c0_i32_0 : i32, i32
  }
  func.func @transform_10(%arg0: i32) -> (i32, i32) {
    %c0_i32 = arith.constant 0 : i32
    %c0_i32_0 = arith.constant 0 : i32
    %c0_i32_1 = arith.constant 0 : i32
    return %c0_i32, %c0_i32_0 : i32, i32
  }
  func.func @transform_11(%arg0: i32) -> (i32, i32) {
    %c0_i32 = arith.constant 0 : i32
    %c0_i32_0 = arith.constant 0 : i32
    %c0_i32_1 = arith.constant 0 : i32
    return %c0_i32, %c0_i32_0 : i32, i32
  }
  func.func @transform_12(%arg0: i32) -> (i32, i32) {
    %c0_i32 = arith.constant 0 : i32
    %c0_i32_0 = arith.constant 0 : i32
    %c0_i32_1 = arith.constant 0 : i32
    return %c0_i32, %c0_i32_0 : i32, i32
  }
  func.func @transform_13(%arg0: i32) -> (i32, i32, i32) {
    %c0_i32 = arith.constant 0 : i32
    %c0_i32_0 = arith.constant 0 : i32
    %c0_i32_1 = arith.constant 0 : i32
    return %arg0, %c0_i32, %c0_i32_0 : i32, i32, i32
  }
}

</mosaic_0001>

<llo_original>
// kernel: tpu_custom_call.1
$region0: #{tpu_custom_call.1}
  #allocation0 [shape = 'u32[]', space=smem, size = 0x4, offset = 0x4, fixed_abs, tag = 'smem constant byte address 0x4 - core index']
  #allocation1 [shape = 'u32[144,128]{1,0:T(1,128)}', space=vmem, size = 0x12000, scoped, tag = 'internal scratch']
  %s0 = inlined_call_operand.hbm [shape: f32[2,128,128], index: 0, kind: input, shape index: {}]
  %s1 = inlined_call_operand.vmem [shape: f32[1,128], index: 1, kind: input, shape index: {}]
  %s2 = inlined_call_operand.vmem [shape: f32[1,128], index: 2, kind: input, shape index: {}]
  %s3 = inlined_call_operand.hbm [shape: bf16[128,384], index: 3, kind: input, shape index: {}]
  %s4 = inlined_call_operand.vmem [shape: f32[1,384], index: 4, kind: input, shape index: {}]
  %s5 = inlined_call_operand.hbm [shape: bf16[128,128], index: 5, kind: input, shape index: {}]
  %s6 = inlined_call_operand.vmem [shape: f32[1,128], index: 6, kind: input, shape index: {}]
  %s7 = inlined_call_operand.vmem [shape: f32[1,128], index: 7, kind: input, shape index: {}]
  %s8 = inlined_call_operand.vmem [shape: f32[1,128], index: 8, kind: input, shape index: {}]
  %s9 = inlined_call_operand.hbm [shape: bf16[128,256], index: 9, kind: input, shape index: {}]
  %s10 = inlined_call_operand.vmem [shape: f32[1,256], index: 10, kind: input, shape index: {}]
  %s11 = inlined_call_operand.hbm [shape: bf16[256,128], index: 11, kind: input, shape index: {}]
  %s12 = inlined_call_operand.vmem [shape: f32[1,128], index: 12, kind: input, shape index: {}]
  %s13 = inlined_call_operand.hbm [shape: f32[2,128,128], index: 13, kind: output, shape index: {}]
  %s14 = sld [smem:[#allocation0]]
  $region105: #{tpu_custom_call.1} parent=0
    _
  %s16 = ssub.s32 1, %s14
  %s17 = scalar_select 0, %s16, %s14
  $region1: #{tpu_custom_call.1} parent=0
    #allocation2 [shape = 'u8[131072]{0}', space=vmem, size = 0x20000, scoped, tag = 'input window, operand 0']
    #allocation3 [shape = 's32[2]{0}', space=sflag, size = 0x8, scoped, tag = 'scoped memory for tpu_custom_call.1']
    #allocation4 [shape = 's32[2]{0}', space=sflag, size = 0x8, scoped, tag = 'scoped memory for tpu_custom_call.1']
    #allocation5 [shape = 'u8[98304]{0}', space=vmem, size = 0x18000, scoped, tag = 'input window, operand 3, single buffered']
    #allocation6 [shape = 's32[1]{0}', space=sflag, size = 0x4, scoped, tag = 'scoped memory for tpu_custom_call.1']
    #allocation7 [shape = 'u8[32768]{0}', space=vmem, size = 0x8000, scoped, tag = 'input window, operand 5, single buffered']
    #allocation8 [shape = 'u8[65536]{0}', space=vmem, size = 0x10000, scoped, tag = 'input window, operand 9, single buffered']
    #allocation9 [shape = 's32[1]{0}', space=sflag, size = 0x4, scoped, tag = 'scoped memory for tpu_custom_call.1']
    #allocation10 [shape = 'u8[65536]{0}', space=vmem, size = 0x10000, scoped, tag = 'input window, operand 11, single buffered']
    #allocation11 [shape = 'u8[131072]{0}', space=vmem, size = 0x20000, scoped, tag = 'output window, operand 0']
    %18 = vsyncpa [#allocation3], 0
    %s19 = scalar_lea.sflag [#allocation3], 1
    %20 = vsyncpa %s19, 0
    %21 = vsyncpa [#allocation6], 0
    %22 = vsyncpa [#allocation9], 0
    %23 = vsyncpa [#allocation4], 0
    %s24 = scalar_lea.sflag [#allocation4], 1
    %25 = vsyncpa %s24, 0
    loop: start=0, step=1, limit=4
    $region2: #{tpu_custom_call.1} parent=1 // loop_pre_header
      _
    $region3: #{tpu_custom_call.1} parent=1 // loop_header
      %s27 = sphi 0, %s31
      %p28 = scmp.ge.s32.totalorder %s27, 4
      %s37 = sphi 0, %s39
      %s40 = sphi 0, %s37
      %s41 = sphi 0, %s40
      %s57 = sphi 0, %s41
      %s61 = sphi 0, %s61
      %s63 = sphi 0, %s61
      %s64 = sphi 0, %s63
      %s78 = sphi 0, %s64
      %s82 = sphi 0, %s82
      %s84 = sphi 0, %s82
      %s85 = sphi 0, %s84
      %s99 = sphi 0, %s85
      %s103 = sphi 0, %s103
      %s105 = sphi 0, %s103
      %s106 = sphi 0, %s105
      %s120 = sphi 0, %s106
      %s124 = sphi 0, %s124
      %s126 = sphi 0, %s124
      %s127 = sphi 0, %s126
      %s141 = sphi 0, %s127
      %s145 = sphi 0, %s145
      %s147 = sphi 0, %s145
      %s148 = sphi 0, %s147
      %s162 = sphi 0, %s148
      %s166 = sphi 0, %s166
      %s168 = sphi 0, %s166
      %s169 = sphi 0, %s168
      %s183 = sphi 0, %s169
      %s187 = sphi 0, %s187
      %s189 = sphi 0, %s187
      %s190 = sphi 0, %s189
      %s204 = sphi 0, %s190
      %s208 = sphi 0, %s208
      %s210 = sphi 0, %s208
      %s211 = sphi 0, %s210
      %s225 = sphi 0, %s211
      %s229 = sphi 0, %s229
      %s231 = sphi 0, %s229
      %s232 = sphi 0, %s231
      %s246 = sphi 0, %s232
      %s250 = sphi 0, %s250
      %s252 = sphi 0, %s250
      %s253 = sphi 0, %s252
      %s267 = sphi 0, %s253
      %s271 = sphi 0, %s271
      %s273 = sphi 0, %s271
      %s274 = sphi 0, %s273
      %s288 = sphi 0, %s274
      %s292 = sphi 0, %s292
      %s294 = sphi 0, %s292
      %s295 = sphi 0, %s294
      %s309 = sphi 0, %s295
      %s315 = sphi 0, %s317
      %s318 = sphi 0, %s315
      %s319 = sphi 0, %s318
      %s335 = sphi 0, %s319
    $region4: #{tpu_custom_call.1} parent=1 // loop_header_branch
      %30 = sbr.rel (%p28) target = $region8
    $region5: #{tpu_custom_call.1} parent=1 // loop_body
      %s32 = ssub.s32 %s27, 1
      %s33 = ssub.s32 %s27, 2
      %s34 = sadd.s32 %s27, 1
      %s35 = ssub.s32 %s27, %s34
      %p36 = scmp.eq.s32.totalorder %s35, 0
      %s38 = sadd.s32 %s37, 1
      %s39 = scalar_select %p36, %s37, %s38
      %p42 = pneg %p36
      %p43 = scmp.eq.s32.totalorder %s27, 1
      %p44 = por %p42, %p43
      %p45 = scmp.ne.s32.totalorder %s37, %s40
      %p46 = scmp.eq.s32.totalorder %s27, 0
      %p47 = por %p45, %p46
      %p48 = scmp.ne.s32.totalorder %s37, %s40
      %p49 = scmp.eq.s32.totalorder %s32, 1
      %p50 = por %p48, %p49
      %p51 = scmp.ne.s32.totalorder %s40, %s41
      %p52 = scmp.eq.s32.totalorder %s32, 0
      %p53 = por %p51, %p52
      %p54 = scmp.ne.s32.totalorder %s40, %s41
      %p55 = scmp.eq.s32.totalorder %s33, 1
      %p56 = por %p54, %p55
      %p58 = scmp.ne.s32.totalorder %s41, %s57
      %p59 = scmp.eq.s32.totalorder %s33, 0
      %p60 = por %p58, %p59
      %s62 = sadd.s32 %s61, 1
      %p65 = scmp.eq.s32.totalorder %s27, 1
      %p66 = scmp.ne.s32.totalorder %s61, %s63
      %p67 = scmp.eq.s32.totalorder %s27, 0
      %p68 = por %p66, %p67
      %p69 = scmp.ne.s32.totalorder %s61, %s63
      %p70 = scmp.eq.s32.totalorder %s32, 1
      %p71 = por %p69, %p70
      %p72 = scmp.ne.s32.totalorder %s63, %s64
      %p73 = scmp.eq.s32.totalorder %s32, 0
      %p74 = por %p72, %p73
      %p75 = scmp.ne.s32.totalorder %s63, %s64
      %p76 = scmp.eq.s32.totalorder %s33, 1
      %p77 = por %p75, %p76
      %p79 = scmp.ne.s32.totalorder %s64, %s78
      %p80 = scmp.eq.s32.totalorder %s33, 0
      %p81 = por %p79, %p80
      %s83 = sadd.s32 %s82, 1
      %p86 = scmp.eq.s32.totalorder %s27, 1
      %p87 = scmp.ne.s32.totalorder %s82, %s84
      %p88 = scmp.eq.s32.totalorder %s27, 0
      %p89 = por %p87, %p88
      %p90 = scmp.ne.s32.totalorder %s82, %s84
      %p91 = scmp.eq.s32.totalorder %s32, 1
      %p92 = por %p90, %p91
      %p93 = scmp.ne.s32.totalorder %s84, %s85
      %p94 = scmp.eq.s32.totalorder %s32, 0
      %p95 = por %p93, %p94
      %p96 = scmp.ne.s32.totalorder %s84, %s85
      %p97 = scmp.eq.s32.totalorder %s33, 1
      %p98 = por %p96, %p97
      %p100 = scmp.ne.s32.totalorder %s85, %s99
      %p101 = scmp.eq.s32.totalorder %s33, 0
      %p102 = por %p100, %p101
      %s104 = sadd.s32 %s103, 1
      %p107 = scmp.eq.s32.totalorder %s27, 1
      %p108 = scmp.ne.s32.totalorder %s103, %s105
      %p109 = scmp.eq.s32.totalorder %s27, 0
      %p110 = por %p108, %p109
      %p111 = scmp.ne.s32.totalorder %s103, %s105
      %p112 = scmp.eq.s32.totalorder %s32, 1
      %p113 = por %p111, %p112
      %p114 = scmp.ne.s32.totalorder %s105, %s106
      %p115 = scmp.eq.s32.totalorder %s32, 0
      %p116 = por %p114, %p115
      %p117 = scmp.ne.s32.totalorder %s105, %s106
      %p118 = scmp.eq.s32.totalorder %s33, 1
      %p119 = por %p117, %p118
      %p121 = scmp.ne.s32.totalorder %s106, %s120
      %p122 = scmp.eq.s32.totalorder %s33, 0
      %p123 = por %p121, %p122
      %s125 = sadd.s32 %s124, 1
      %p128 = scmp.eq.s32.totalorder %s27, 1
      %p129 = scmp.ne.s32.totalorder %s124, %s126
      %p130 = scmp.eq.s32.totalorder %s27, 0
      %p131 = por %p129, %p130
      %p132 = scmp.ne.s32.totalorder %s124, %s126
      %p133 = scmp.eq.s32.totalorder %s32, 1
      %p134 = por %p132, %p133
      %p135 = scmp.ne.s32.totalorder %s126, %s127
      %p136 = scmp.eq.s32.totalorder %s32, 0
      %p137 = por %p135, %p136
      %p138 = scmp.ne.s32.totalorder %s126, %s127
      %p139 = scmp.eq.s32.totalorder %s33, 1
      %p140 = por %p138, %p139
      %p142 = scmp.ne.s32.totalorder %s127, %s141
      %p143 = scmp.eq.s32.totalorder %s33, 0
      %p144 = por %p142, %p143
      %s146 = sadd.s32 %s145, 1
      %p149 = scmp.eq.s32.totalorder %s27, 1
      %p150 = scmp.ne.s32.totalorder %s145, %s147
      %p151 = scmp.eq.s32.totalorder %s27, 0
      %p152 = por %p150, %p151
      %p153 = scmp.ne.s32.totalorder %s145, %s147
      %p154 = scmp.eq.s32.totalorder %s32, 1
      %p155 = por %p153, %p154
      %p156 = scmp.ne.s32.totalorder %s147, %s148
      %p157 = scmp.eq.s32.totalorder %s32, 0
      %p158 = por %p156, %p157
      %p159 = scmp.ne.s32.totalorder %s147, %s148
      %p160 = scmp.eq.s32.totalorder %s33, 1
      %p161 = por %p159, %p160
      %p163 = scmp.ne.s32.totalorder %s148, %s162
      %p164 = scmp.eq.s32.totalorder %s33, 0
      %p165 = por %p163, %p164
      %s167 = sadd.s32 %s166, 1
      %p170 = scmp.eq.s32.totalorder %s27, 1
      %p171 = scmp.ne.s32.totalorder %s166, %s168
      %p172 = scmp.eq.s32.totalorder %s27, 0
      %p173 = por %p171, %p172
      %p174 = scmp.ne.s32.totalorder %s166, %s168
      %p175 = scmp.eq.s32.totalorder %s32, 1
      %p176 = por %p174, %p175
      %p177 = scmp.ne.s32.totalorder %s168, %s169
      %p178 = scmp.eq.s32.totalorder %s32, 0
      %p179 = por %p177, %p178
      %p180 = scmp.ne.s32.totalorder %s168, %s169
      %p181 = scmp.eq.s32.totalorder %s33, 1
      %p182 = por %p180, %p181
      %p184 = scmp.ne.s32.totalorder %s169, %s183
      %p185 = scmp.eq.s32.totalorder %s33, 0
      %p186 = por %p184, %p185
      %s188 = sadd.s32 %s187, 1
      %p191 = scmp.eq.s32.totalorder %s27, 1
      %p192 = scmp.ne.s32.totalorder %s187, %s189
      %p193 = scmp.eq.s32.totalorder %s27, 0
      %p194 = por %p192, %p193
      %p195 = scmp.ne.s32.totalorder %s187, %s189
      %p196 = scmp.eq.s32.totalorder %s32, 1
      %p197 = por %p195, %p196
      %p198 = scmp.ne.s32.totalorder %s189, %s190
      %p199 = scmp.eq.s32.totalorder %s32, 0
      %p200 = por %p198, %p199
      %p201 = scmp.ne.s32.totalorder %s189, %s190
      %p202 = scmp.eq.s32.totalorder %s33, 1
      %p203 = por %p201, %p202
      %p205 = scmp.ne.s32.totalorder %s190, %s204
      %p206 = scmp.eq.s32.totalorder %s33, 0
      %p207 = por %p205, %p206
      %s209 = sadd.s32 %s208, 1
      %p212 = scmp.eq.s32.totalorder %s27, 1
      %p213 = scmp.ne.s32.totalorder %s208, %s210
      %p214 = scmp.eq.s32.totalorder %s27, 0
      %p215 = por %p213, %p214
      %p216 = scmp.ne.s32.totalorder %s208, %s210
      %p217 = scmp.eq.s32.totalorder %s32, 1
      %p218 = por %p216, %p217
      %p219 = scmp.ne.s32.totalorder %s210, %s211
      %p220 = scmp.eq.s32.totalorder %s32, 0
      %p221 = por %p219, %p220
      %p222 = scmp.ne.s32.totalorder %s210, %s211
      %p223 = scmp.eq.s32.totalorder %s33, 1
      %p224 = por %p222, %p223
      %p226 = scmp.ne.s32.totalorder %s211, %s225
      %p227 = scmp.eq.s32.totalorder %s33, 0
      %p228 = por %p226, %p227
      %s230 = sadd.s32 %s229, 1
      %p233 = scmp.eq.s32.totalorder %s27, 1
      %p234 = scmp.ne.s32.totalorder %s229, %s231
      %p235 = scmp.eq.s32.totalorder %s27, 0
      %p236 = por %p234, %p235
      %p237 = scmp.ne.s32.totalorder %s229, %s231
      %p238 = scmp.eq.s32.totalorder %s32, 1
      %p239 = por %p237, %p238
      %p240 = scmp.ne.s32.totalorder %s231, %s232
      %p241 = scmp.eq.s32.totalorder %s32, 0
      %p242 = por %p240, %p241
      %p243 = scmp.ne.s32.totalorder %s231, %s232
      %p244 = scmp.eq.s32.totalorder %s33, 1
      %p245 = por %p243, %p244
      %p247 = scmp.ne.s32.totalorder %s232, %s246
      %p248 = scmp.eq.s32.totalorder %s33, 0
      %p249 = por %p247, %p248
      %s251 = sadd.s32 %s250, 1
      %p254 = scmp.eq.s32.totalorder %s27, 1
      %p255 = scmp.ne.s32.totalorder %s250, %s252
      %p256 = scmp.eq.s32.totalorder %s27, 0
      %p257 = por %p255, %p256
      %p258 = scmp.ne.s32.totalorder %s250, %s252
      %p259 = scmp.eq.s32.totalorder %s32, 1
      %p260 = por %p258, %p259
      %p261 = scmp.ne.s32.totalorder %s252, %s253
      %p262 = scmp.eq.s32.totalorder %s32, 0
      %p263 = por %p261, %p262
      %p264 = scmp.ne.s32.totalorder %s252, %s253
      %p265 = scmp.eq.s32.totalorder %s33, 1
      %p266 = por %p264, %p265
      %p268 = scmp.ne.s32.totalorder %s253, %s267
      %p269 = scmp.eq.s32.totalorder %s33, 0
      %p270 = por %p268, %p269
      %s272 = sadd.s32 %s271, 1
      %p275 = scmp.eq.s32.totalorder %s27, 1
      %p276 = scmp.ne.s32.totalorder %s271, %s273
      %p277 = scmp.eq.s32.totalorder %s27, 0
      %p278 = por %p276, %p277
      %p279 = scmp.ne.s32.totalorder %s271, %s273
      %p280 = scmp.eq.s32.totalorder %s32, 1
      %p281 = por %p279, %p280
      %p282 = scmp.ne.s32.totalorder %s273, %s274
      %p283 = scmp.eq.s32.totalorder %s32, 0
      %p284 = por %p282, %p283
      %p285 = scmp.ne.s32.totalorder %s273, %s274
      %p286 = scmp.eq.s32.totalorder %s33, 1
      %p287 = por %p285, %p286
      %p289 = scmp.ne.s32.totalorder %s274, %s288
      %p290 = scmp.eq.s32.totalorder %s33, 0
      %p291 = por %p289, %p290
      %s293 = sadd.s32 %s292, 1
      %p296 = scmp.eq.s32.totalorder %s27, 1
      %p297 = scmp.ne.s32.totalorder %s292, %s294
      %p298 = scmp.eq.s32.totalorder %s27, 0
      %p299 = por %p297, %p298
      %p300 = scmp.ne.s32.totalorder %s292, %s294
      %p301 = scmp.eq.s32.totalorder %s32, 1
      %p302 = por %p300, %p301
      %p303 = scmp.ne.s32.totalorder %s294, %s295
      %p304 = scmp.eq.s32.totalorder %s32, 0
      %p305 = por %p303, %p304
      %p306 = scmp.ne.s32.totalorder %s294, %s295
      %p307 = scmp.eq.s32.totalorder %s33, 1
      %p308 = por %p306, %p307
      %p310 = scmp.ne.s32.totalorder %s295, %s309
      %p311 = scmp.eq.s32.totalorder %s33, 0
      %p312 = por %p310, %p311
      %s313 = ssub.s32 %s27, %s34
      %p314 = scmp.eq.s32.totalorder %s313, 0
      %s316 = sadd.s32 %s315, 1
      %s317 = scalar_select %p314, %s315, %s316
      %p320 = pneg %p314
      %p321 = scmp.eq.s32.totalorder %s27, 1
      %p322 = por %p320, %p321
      %p323 = scmp.ne.s32.totalorder %s315, %s318
      %p324 = scmp.eq.s32.totalorder %s27, 0
      %p325 = por %p323, %p324
      %p326 = scmp.ne.s32.totalorder %s315, %s318
      %p327 = scmp.eq.s32.totalorder %s32, 1
      %p328 = por %p326, %p327
      %p329 = scmp.ne.s32.totalorder %s318, %s319
      %p330 = scmp.eq.s32.totalorder %s32, 0
      %p331 = por %p329, %p330
      %p332 = scmp.ne.s32.totalorder %s318, %s319
      %p333 = scmp.eq.s32.totalorder %s33, 1
      %p334 = por %p332, %p333
      %p336 = scmp.ne.s32.totalorder %s319, %s335
      %p337 = scmp.eq.s32.totalorder %s33, 0
      %p338 = por %p336, %p337
      %p339 = scmp.le.s32.totalorder 1, %s27
      %p340 = scmp.lt.s32.totalorder %s27, 3
      %p341 = pnand %p339, %p340
      %p342 = pneg %p341
      // Predicated region
      $region9: #{tpu_custom_call.1} parent=5 // pred_check
        _
      $region10: #{tpu_custom_call.1} parent=5 // pred_check_branch
        %344 = sbr.rel (%p341) target = $region12
      $region11: #{tpu_custom_call.1} parent=5 // pred_region
        %s345 = ssub.s32 %s27, 1
        // Predicated region
        $region13: #{tpu_custom_call.1} parent=11 // pred_check
          %p346 = pneg %p74
        $region14: #{tpu_custom_call.1} parent=11 // pred_check_branch
          %348 = sbr.rel (%p346) target = $region16
        $region15: #{tpu_custom_call.1} parent=11 // pred_region
          _
        $region16: #{tpu_custom_call.1} parent=11 // pred_fallthru
          _
        // Predicated region
        $region17: #{tpu_custom_call.1} parent=11 // pred_check
          %p349 = pneg %p95
        $region18: #{tpu_custom_call.1} parent=11 // pred_check_branch
          %351 = sbr.rel (%p349) target = $region20
        $region19: #{tpu_custom_call.1} parent=11 // pred_region
          _
        $region20: #{tpu_custom_call.1} parent=11 // pred_fallthru
          _
        // Predicated region
        $region21: #{tpu_custom_call.1} parent=11 // pred_check
          %p352 = pneg %p116
        $region22: #{tpu_custom_call.1} parent=11 // pred_check_branch
          %354 = sbr.rel (%p352) target = $region24
        $region23: #{tpu_custom_call.1} parent=11 // pred_region
          %s356 = ssub.s32 3072, 3072
          %357 = vsyncadd [#allocation6], %s356
          %s358 = sshll.u32 [#allocation5], 4
          %s359 = int_to_ptr.vmem [resolvable:$true] %s358
          %364 = dma.hbm_to_vmem [thread:$0]  %s3, 3072, %s359, [#allocation6], 192, 192, 12
        $region24: #{tpu_custom_call.1} parent=11 // pred_fallthru
          _
        // Predicated region
        $region25: #{tpu_custom_call.1} parent=11 // pred_check
          %p365 = pneg %p137
        $region26: #{tpu_custom_call.1} parent=11 // pred_check_branch
          %367 = sbr.rel (%p365) target = $region28
        $region27: #{tpu_custom_call.1} parent=11 // pred_region
          _
        $region28: #{tpu_custom_call.1} parent=11 // pred_fallthru
          _
        // Predicated region
        $region29: #{tpu_custom_call.1} parent=11 // pred_check
          %p368 = pneg %p158
        $region30: #{tpu_custom_call.1} parent=11 // pred_check_branch
          %370 = sbr.rel (%p368) target = $region32
        $region31: #{tpu_custom_call.1} parent=11 // pred_region
          %s372 = ssub.s32 1024, 1024
          %373 = vsyncadd [#allocation6], %s372
          %s374 = sshll.u32 [#allocation7], 4
          %s375 = int_to_ptr.vmem [resolvable:$true] %s374
          %380 = dma.hbm_to_vmem [thread:$0]  %s5, 1024, %s375, [#allocation6], 64, 64, 4
        $region32: #{tpu_custom_call.1} parent=11 // pred_fallthru
          _
        // Predicated region
        $region33: #{tpu_custom_call.1} parent=11 // pred_check
          %p381 = pneg %p179
        $region34: #{tpu_custom_call.1} parent=11 // pred_check_branch
          %383 = sbr.rel (%p381) target = $region36
        $region35: #{tpu_custom_call.1} parent=11 // pred_region
          _
        $region36: #{tpu_custom_call.1} parent=11 // pred_fallthru
          _
        // Predicated region
        $region37: #{tpu_custom_call.1} parent=11 // pred_check
          %p384 = pneg %p200
        $region38: #{tpu_custom_call.1} parent=11 // pred_check_branch
          %386 = sbr.rel (%p384) target = $region40
        $region39: #{tpu_custom_call.1} parent=11 // pred_region
          _
        $region40: #{tpu_custom_call.1} parent=11 // pred_fallthru
          _
        // Predicated region
        $region41: #{tpu_custom_call.1} parent=11 // pred_check
          %p387 = pneg %p221
        $region42: #{tpu_custom_call.1} parent=11 // pred_check_branch
          %389 = sbr.rel (%p387) target = $region44
        $region43: #{tpu_custom_call.1} parent=11 // pred_region
          _
        $region44: #{tpu_custom_call.1} parent=11 // pred_fallthru
          _
        // Predicated region
        $region45: #{tpu_custom_call.1} parent=11 // pred_check
          %p390 = pneg %p242
        $region46: #{tpu_custom_call.1} parent=11 // pred_check_branch
          %392 = sbr.rel (%p390) target = $region48
        $region47: #{tpu_custom_call.1} parent=11 // pred_region
          %s394 = ssub.s32 2048, 2048
          %395 = vsyncadd [#allocation9], %s394
          %s396 = sshll.u32 [#allocation8], 4
          %s397 = int_to_ptr.vmem [resolvable:$true] %s396
          %402 = dma.hbm_to_vmem [thread:$0]  %s9, 2048, %s397, [#allocation9], 128, 128, 8
        $region48: #{tpu_custom_call.1} parent=11 // pred_fallthru
          _
        // Predicated region
        $region49: #{tpu_custom_call.1} parent=11 // pred_check
          %p403 = pneg %p263
        $region50: #{tpu_custom_call.1} parent=11 // pred_check_branch
          %405 = sbr.rel (%p403) target = $region52
        $region51: #{tpu_custom_call.1} parent=11 // pred_region
          _
        $region52: #{tpu_custom_call.1} parent=11 // pred_fallthru
          _
        // Predicated region
        $region53: #{tpu_custom_call.1} parent=11 // pred_check
          %p406 = pneg %p284
        $region54: #{tpu_custom_call.1} parent=11 // pred_check_branch
          %408 = sbr.rel (%p406) target = $region56
        $region55: #{tpu_custom_call.1} parent=11 // pred_region
          %s410 = ssub.s32 2048, 2048
          %411 = vsyncadd [#allocation9], %s410
          %s412 = sshll.u32 [#allocation10], 4
          %s413 = int_to_ptr.vmem [resolvable:$true] %s412
          %418 = dma.hbm_to_vmem [thread:$0]  %s11, 2048, %s413, [#allocation9], 64, 64, 4
        $region56: #{tpu_custom_call.1} parent=11 // pred_fallthru
          _
        // Predicated region
        $region57: #{tpu_custom_call.1} parent=11 // pred_check
          %p419 = pneg %p305
        $region58: #{tpu_custom_call.1} parent=11 // pred_check_branch
          %421 = sbr.rel (%p419) target = $region60
        $region59: #{tpu_custom_call.1} parent=11 // pred_region
          _
        $region60: #{tpu_custom_call.1} parent=11 // pred_fallthru
          _
      $region12: #{tpu_custom_call.1} parent=5 // pred_fallthru
        _
      %p422 = scmp.lt.s32.totalorder %s27, 2
      // Predicated region
      $region61: #{tpu_custom_call.1} parent=5 // pred_check
        %p423 = pneg %p422
      $region62: #{tpu_custom_call.1} parent=5 // pred_check_branch
        %425 = sbr.rel (%p423) target = $region64
      $region63: #{tpu_custom_call.1} parent=5 // pred_region
        // Predicated region
        $region65: #{tpu_custom_call.1} parent=63 // pred_check
          %p426 = pneg %p47
        $region66: #{tpu_custom_call.1} parent=63 // pred_check_branch
          %428 = sbr.rel (%p426) target = $region68
        $region67: #{tpu_custom_call.1} parent=63 // pred_region
          %s429 = sand.u32 %s37, 1
          %s430 = scalar_lea.sflag [#allocation3], %s429
          %s431 = sand.u32 %s37, 1
          %s432 = smul.addr %s431, 128
          %s433 = scalar_lea.vmem [#allocation2], %s432
          %s435 = ssub.s32 2048, 2048
          %436 = vsyncadd %s430, %s435
          %s437 = smul.addr %s27, 16
          %s438 = smul.addr %s437, 128
          %s439 = scalar_lea.hbm %s0, %s438
          %s440 = sshll.u32 %s433, 4
          %s441 = int_to_ptr.vmem [resolvable:$true] %s440
          %446 = dma.hbm_to_vmem [thread:$0]  %s439, 2048, %s441, %s430, 128, 128, 8
        $region68: #{tpu_custom_call.1} parent=63 // pred_fallthru
          _
      $region64: #{tpu_custom_call.1} parent=5 // pred_fallthru
        _
      %p447 = scmp.le.s32.totalorder 1, %s27
      %p448 = scmp.lt.s32.totalorder %s27, 3
      %p449 = pnand %p447, %p448
      %p450 = pneg %p449
      // Predicated region
      $region69: #{tpu_custom_call.1} parent=5 // pred_check
        _
      $region70: #{tpu_custom_call.1} parent=5 // pred_check_branch
        %452 = sbr.rel (%p449) target = $region72
      $region71: #{tpu_custom_call.1} parent=5 // pred_region
        %s453 = ssub.s32 %s27, 1
        %s454 = sand.u32 %s40, 1
        %s455 = scalar_lea.sflag [#allocation3], %s454
        %s456 = sand.u32 %s40, 1
        %s457 = smul.addr %s456, 128
        %s458 = scalar_lea.vmem [#allocation2], %s457
        // Predicated region
        $region73: #{tpu_custom_call.1} parent=71 // pred_check
          %p459 = pneg %p53
        $region74: #{tpu_custom_call.1} parent=71 // pred_check_branch
          %461 = sbr.rel (%p459) target = $region76
        $region75: #{tpu_custom_call.1} parent=71 // pred_region
          %462 = dma.done %s455, 2048
        $region76: #{tpu_custom_call.1} parent=71 // pred_fallthru
          _
        // Predicated region
        $region77: #{tpu_custom_call.1} parent=71 // pred_check
          %p463 = pneg %p116
        $region78: #{tpu_custom_call.1} parent=71 // pred_check_branch
          %465 = sbr.rel (%p463) target = $region80
        $region79: #{tpu_custom_call.1} parent=71 // pred_region
          %466 = dma.done [#allocation6], 3072
        $region80: #{tpu_custom_call.1} parent=71 // pred_fallthru
          _
        // Predicated region
        $region81: #{tpu_custom_call.1} parent=71 // pred_check
          %p467 = pneg %p158
        $region82: #{tpu_custom_call.1} parent=71 // pred_check_branch
          %469 = sbr.rel (%p467) target = $region84
        $region83: #{tpu_custom_call.1} parent=71 // pred_region
          %470 = dma.done [#allocation6], 1024
        $region84: #{tpu_custom_call.1} parent=71 // pred_fallthru
          _
        // Predicated region
        $region85: #{tpu_custom_call.1} parent=71 // pred_check
          %p471 = pneg %p242
        $region86: #{tpu_custom_call.1} parent=71 // pred_check_branch
          %473 = sbr.rel (%p471) target = $region88
        $region87: #{tpu_custom_call.1} parent=71 // pred_region
          %474 = dma.done [#allocation9], 2048
        $region88: #{tpu_custom_call.1} parent=71 // pred_fallthru
          _
        // Predicated region
        $region89: #{tpu_custom_call.1} parent=71 // pred_check
          %p475 = pneg %p284
        $region90: #{tpu_custom_call.1} parent=71 // pred_check_branch
          %477 = sbr.rel (%p475) target = $region92
        $region91: #{tpu_custom_call.1} parent=71 // pred_region
          %478 = dma.done [#allocation9], 2048
        $region92: #{tpu_custom_call.1} parent=71 // pred_fallthru
          _
        %s479 = sand.u32 %s40, 1
        %s480 = scalar_lea.sflag [#allocation3], %s479
        %s481 = sand.u32 %s40, 1
        %s482 = smul.addr %s481, 128
        %s483 = scalar_lea.vmem [#allocation2], %s482
        %p484 = pneg %p53
        %p485 = pneg %p50
        %p486 = pneg %p74
        %p487 = pneg %p71
        %p488 = pneg %p95
        %p489 = pneg %p92
        %p490 = pneg %p116
        %p491 = pneg %p113
        %p492 = pneg %p137
        %p493 = pneg %p134
        %p494 = pneg %p158
        %p495 = pneg %p155
        %p496 = pneg %p179
        %p497 = pneg %p176
        %p498 = pneg %p200
        %p499 = pneg %p197
        %p500 = pneg %p221
        %p501 = pneg %p218
        %p502 = pneg %p242
        %p503 = pneg %p239
        %p504 = pneg %p263
        %p505 = pneg %p260
        %p506 = pneg %p284
        %p507 = pneg %p281
        %p508 = pneg %p305
        %p509 = pneg %p302
        %p510 = pneg %p331
        %p511 = pneg %p328
        %s512 = sand.u32 %s318, 1
        %s513 = scalar_lea.sflag [#allocation4], %s512
        %s514 = sand.u32 %s318, 1
        %s515 = smul.addr %s514, 128
        %s516 = scalar_lea.vmem [#allocation11], %s515
        %v518 = vld [vmem:[%s458] sm:$0xff]
        %v519 = vld [vmem:[%s458 + $0x8] sm:$0xff]
        %v520 = vld [vmem:[%s458 + $0x10] sm:$0xff]
        %v521 = vld [vmem:[%s458 + $0x18] sm:$0xff]
        %v522 = vld [vmem:[%s458 + $0x20] sm:$0xff]
        %v523 = vld [vmem:[%s458 + $0x28] sm:$0xff]
        %v524 = vld [vmem:[%s458 + $0x30] sm:$0xff]
        %v525 = vld [vmem:[%s458 + $0x38] sm:$0xff]
        %v526 = vld [vmem:[%s458 + $0x40] sm:$0xff]
        %v527 = vld [vmem:[%s458 + $0x48] sm:$0xff]
        %v528 = vld [vmem:[%s458 + $0x50] sm:$0xff]
        %v529 = vld [vmem:[%s458 + $0x58] sm:$0xff]
        %v530 = vld [vmem:[%s458 + $0x60] sm:$0xff]
        %v531 = vld [vmem:[%s458 + $0x68] sm:$0xff]
        %v532 = vld [vmem:[%s458 + $0x70] sm:$0xff]
        %v533 = vld [vmem:[%s458 + $0x78] sm:$0xff]
        %534 = vadd.xlane.f32.xlu0 %v518
        %v535 = vpop.xlane.xlu0 %534
        %536 = vadd.xlane.f32.xlu0 %v519
        %v537 = vpop.xlane.xlu0 %536
        %538 = vadd.xlane.f32.xlu0 %v520
        %v539 = vpop.xlane.xlu0 %538
        %540 = vadd.xlane.f32.xlu0 %v521
        %v541 = vpop.xlane.xlu0 %540
        %542 = vadd.xlane.f32.xlu0 %v522
        %v543 = vpop.xlane.xlu0 %542
        %544 = vadd.xlane.f32.xlu0 %v523
        %v545 = vpop.xlane.xlu0 %544
        %546 = vadd.xlane.f32.xlu0 %v524
        %v547 = vpop.xlane.xlu0 %546
        %548 = vadd.xlane.f32.xlu0 %v525
        %v549 = vpop.xlane.xlu0 %548
        %550 = vadd.xlane.f32.xlu0 %v526
        %v551 = vpop.xlane.xlu0 %550
        %552 = vadd.xlane.f32.xlu0 %v527
        %v553 = vpop.xlane.xlu0 %552
        %554 = vadd.xlane.f32.xlu0 %v528
        %v555 = vpop.xlane.xlu0 %554
        %556 = vadd.xlane.f32.xlu0 %v529
        %v557 = vpop.xlane.xlu0 %556
        %558 = vadd.xlane.f32.xlu0 %v530
        %v559 = vpop.xlane.xlu0 %558
        %560 = vadd.xlane.f32.xlu0 %v531
        %v561 = vpop.xlane.xlu0 %560
        %562 = vadd.xlane.f32.xlu0 %v532
        %v563 = vpop.xlane.xlu0 %562
        %564 = vadd.xlane.f32.xlu0 %v533
        %v565 = vpop.xlane.xlu0 %564
        %v566 = vrcp.pop 128.0
        %v567 = vmul.f32 %v535, %v566
        %v568 = vmul.f32 %v537, %v566
        %v569 = vmul.f32 %v539, %v566
        %v570 = vmul.f32 %v541, %v566
        %v571 = vmul.f32 %v543, %v566
        %v572 = vmul.f32 %v545, %v566
        %v573 = vmul.f32 %v547, %v566
        %v574 = vmul.f32 %v549, %v566
        %v575 = vmul.f32 %v551, %v566
        %v576 = vmul.f32 %v553, %v566
        %v577 = vmul.f32 %v555, %v566
        %v578 = vmul.f32 %v557, %v566
        %v579 = vmul.f32 %v559, %v566
        %v580 = vmul.f32 %v561, %v566
        %v581 = vmul.f32 %v563, %v566
        %v582 = vmul.f32 %v565, %v566
        %v583 = vsub.f32 %v518, %v567
        %v584 = vsub.f32 %v519, %v568
        %v585 = vsub.f32 %v520, %v569
        %v586 = vsub.f32 %v521, %v570
        %v587 = vsub.f32 %v522, %v571
        %v588 = vsub.f32 %v523, %v572
        %v589 = vsub.f32 %v524, %v573
        %v590 = vsub.f32 %v525, %v574
        %v591 = vsub.f32 %v526, %v575
        %v592 = vsub.f32 %v527, %v576
        %v593 = vsub.f32 %v528, %v577
        %v594 = vsub.f32 %v529, %v578
        %v595 = vsub.f32 %v530, %v579
        %v596 = vsub.f32 %v531, %v580
        %v597 = vsub.f32 %v532, %v581
        %v598 = vsub.f32 %v533, %v582
        %v599 = vmul.f32 %v583, %v583
        %v600 = vmul.f32 %v584, %v584
        %v601 = vmul.f32 %v585, %v585
        %v602 = vmul.f32 %v586, %v586
        %v603 = vmul.f32 %v587, %v587
        %v604 = vmul.f32 %v588, %v588
        %v605 = vmul.f32 %v589, %v589
        %v606 = vmul.f32 %v590, %v590
        %v607 = vmul.f32 %v591, %v591
        %v608 = vmul.f32 %v592, %v592
        %v609 = vmul.f32 %v593, %v593
        %v610 = vmul.f32 %v594, %v594
        %v611 = vmul.f32 %v595, %v595
        %v612 = vmul.f32 %v596, %v596
        %v613 = vmul.f32 %v597, %v597
        %v614 = vmul.f32 %v598, %v598
        %615 = vadd.xlane.f32.xlu0 %v599
        %v616 = vpop.xlane.xlu0 %615
        %617 = vadd.xlane.f32.xlu0 %v600
        %v618 = vpop.xlane.xlu0 %617
        %619 = vadd.xlane.f32.xlu0 %v601
        %v620 = vpop.xlane.xlu0 %619
        %621 = vadd.xlane.f32.xlu0 %v602
        %v622 = vpop.xlane.xlu0 %621
        %623 = vadd.xlane.f32.xlu0 %v603
        %v624 = vpop.xlane.xlu0 %623
        %625 = vadd.xlane.f32.xlu0 %v604
        %v626 = vpop.xlane.xlu0 %625
        %627 = vadd.xlane.f32.xlu0 %v605
        %v628 = vpop.xlane.xlu0 %627
        %629 = vadd.xlane.f32.xlu0 %v606
        %v630 = vpop.xlane.xlu0 %629
        %631 = vadd.xlane.f32.xlu0 %v607
        %v632 = vpop.xlane.xlu0 %631
        %633 = vadd.xlane.f32.xlu0 %v608
        %v634 = vpop.xlane.xlu0 %633
        %635 = vadd.xlane.f32.xlu0 %v609
        %v636 = vpop.xlane.xlu0 %635
        %637 = vadd.xlane.f32.xlu0 %v610
        %v638 = vpop.xlane.xlu0 %637
        %639 = vadd.xlane.f32.xlu0 %v611
        %v640 = vpop.xlane.xlu0 %639
        %641 = vadd.xlane.f32.xlu0 %v612
        %v642 = vpop.xlane.xlu0 %641
        %643 = vadd.xlane.f32.xlu0 %v613
        %v644 = vpop.xlane.xlu0 %643
        %645 = vadd.xlane.f32.xlu0 %v614
        %v646 = vpop.xlane.xlu0 %645
        %v647 = vmul.f32 %v616, %v566
        %v648 = vmul.f32 %v618, %v566
        %v649 = vmul.f32 %v620, %v566
        %v650 = vmul.f32 %v622, %v566
        %v651 = vmul.f32 %v624, %v566
        %v652 = vmul.f32 %v626, %v566
        %v653 = vmul.f32 %v628, %v566
        %v654 = vmul.f32 %v630, %v566
        %v655 = vmul.f32 %v632, %v566
        %v656 = vmul.f32 %v634, %v566
        %v657 = vmul.f32 %v636, %v566
        %v658 = vmul.f32 %v638, %v566
        %v659 = vmul.f32 %v640, %v566
        %v660 = vmul.f32 %v642, %v566
        %v661 = vmul.f32 %v644, %v566
        %v662 = vmul.f32 %v646, %v566
        %v663 = vadd.f32 %v647, 1e-05
        %v664 = vadd.f32 %v648, 1e-05
        %v665 = vadd.f32 %v649, 1e-05
        %v666 = vadd.f32 %v650, 1e-05
        %v667 = vadd.f32 %v651, 1e-05
        %v668 = vadd.f32 %v652, 1e-05
        %v669 = vadd.f32 %v653, 1e-05
        %v670 = vadd.f32 %v654, 1e-05
        %v671 = vadd.f32 %v655, 1e-05
        %v672 = vadd.f32 %v656, 1e-05
        %v673 = vadd.f32 %v657, 1e-05
        %v674 = vadd.f32 %v658, 1e-05
        %v675 = vadd.f32 %v659, 1e-05
        %v676 = vadd.f32 %v660, 1e-05
        %v677 = vadd.f32 %v661, 1e-05
        %v678 = vadd.f32 %v662, 1e-05
        %v679 = vrsqrt.pop %v663
        %v680 = vrsqrt.pop %v664
        %v681 = vrsqrt.pop %v665
        %v682 = vrsqrt.pop %v666
        %v683 = vrsqrt.pop %v667
        %v684 = vrsqrt.pop %v668
        %v685 = vrsqrt.pop %v669
        %v686 = vrsqrt.pop %v670
        %v687 = vrsqrt.pop %v671
        %v688 = vrsqrt.pop %v672
        %v689 = vrsqrt.pop %v673
        %v690 = vrsqrt.pop %v674
        %v691 = vrsqrt.pop %v675
        %v692 = vrsqrt.pop %v676
        %v693 = vrsqrt.pop %v677
        %v694 = vrsqrt.pop %v678
        %v695 = vmul.f32 %v583, %v679
        %v696 = vmul.f32 %v584, %v680
        %v697 = vmul.f32 %v585, %v681
        %v698 = vmul.f32 %v586, %v682
        %v699 = vmul.f32 %v587, %v683
        %v700 = vmul.f32 %v588, %v684
        %v701 = vmul.f32 %v589, %v685
        %v702 = vmul.f32 %v590, %v686
        %v703 = vmul.f32 %v591, %v687
        %v704 = vmul.f32 %v592, %v688
        %v705 = vmul.f32 %v593, %v689
        %v706 = vmul.f32 %v594, %v690
        %v707 = vmul.f32 %v595, %v691
        %v708 = vmul.f32 %v596, %v692
        %v709 = vmul.f32 %v597, %v693
        %v710 = vmul.f32 %v598, %v694
        %v711 = vld [vmem:[%s1] sm:$0x1]
        %v713 = vlaneseq
        %v714 = vshrl.u32 %v713, 7
        %v715 = vsub.s32 0, %v714
        %v716 = vrot.slane %v711, %v715
        %v718 = vmul.f32 %v695, %v716
        %v719 = vmul.f32 %v696, %v716
        %v720 = vmul.f32 %v697, %v716
        %v721 = vmul.f32 %v698, %v716
        %v722 = vmul.f32 %v699, %v716
        %v723 = vmul.f32 %v700, %v716
        %v724 = vmul.f32 %v701, %v716
        %v725 = vmul.f32 %v702, %v716
        %v726 = vmul.f32 %v703, %v716
        %v727 = vmul.f32 %v704, %v716
        %v728 = vmul.f32 %v705, %v716
        %v729 = vmul.f32 %v706, %v716
        %v730 = vmul.f32 %v707, %v716
        %v731 = vmul.f32 %v708, %v716
        %v732 = vmul.f32 %v709, %v716
        %v733 = vmul.f32 %v710, %v716
        %v734 = vld [vmem:[%s2] sm:$0x1]
        %v736 = vlaneseq
        %v737 = vshrl.u32 %v736, 7
        %v738 = vsub.s32 0, %v737
        %v739 = vrot.slane %v734, %v738
        %v741 = vadd.f32 %v718, %v739
        %v742 = vadd.f32 %v719, %v739
        %v743 = vadd.f32 %v720, %v739
        %v744 = vadd.f32 %v721, %v739
        %v745 = vadd.f32 %v722, %v739
        %v746 = vadd.f32 %v723, %v739
        %v747 = vadd.f32 %v724, %v739
        %v748 = vadd.f32 %v725, %v739
        %v749 = vadd.f32 %v726, %v739
        %v750 = vadd.f32 %v727, %v739
        %v751 = vadd.f32 %v728, %v739
        %v752 = vadd.f32 %v729, %v739
        %v753 = vadd.f32 %v730, %v739
        %v754 = vadd.f32 %v731, %v739
        %v755 = vadd.f32 %v732, %v739
        %v756 = vadd.f32 %v733, %v739
        %v757 = vpack.c.bf16 %v742, %v741
        %v758 = vpack.c.bf16 %v744, %v743
        %v759 = vpack.c.bf16 %v746, %v745
        %v760 = vpack.c.bf16 %v748, %v747
        %v761 = vpack.c.bf16 %v750, %v749
        %v762 = vpack.c.bf16 %v752, %v751
        %v763 = vpack.c.bf16 %v754, %v753
        %v764 = vpack.c.bf16 %v756, %v755
        %v765 = vld [vmem:[#allocation5] sm:$0xff]
        %v766 = vld [vmem:[#allocation5 + $0x8] sm:$0xf]
        %v767 = vld [vmem:[#allocation5 + $0xc] sm:$0xff]
        %v768 = vld [vmem:[#allocation5 + $0x14] sm:$0xf]
        %v769 = vld [vmem:[#allocation5 + $0x18] sm:$0xff]
        %v770 = vld [vmem:[#allocation5 + $0x20] sm:$0xf]
        %v771 = vld [vmem:[#allocation5 + $0x24] sm:$0xff]
        %v772 = vld [vmem:[#allocation5 + $0x2c] sm:$0xf]
        %v773 = vld [vmem:[#allocation5 + $0x30] sm:$0xff]
        %v774 = vld [vmem:[#allocation5 + $0x38] sm:$0xf]
        %v775 = vld [vmem:[#allocation5 + $0x3c] sm:$0xff]
        %v776 = vld [vmem:[#allocation5 + $0x44] sm:$0xf]
        %v777 = vld [vmem:[#allocation5 + $0x48] sm:$0xff]
        %v778 = vld [vmem:[#allocation5 + $0x50] sm:$0xf]
        %v779 = vld [vmem:[#allocation5 + $0x54] sm:$0xff]
        %v780 = vld [vmem:[#allocation5 + $0x5c] sm:$0xf]
        %v781 = vld [vmem:[#allocation5 + $0x60] sm:$0xff]
        %v782 = vld [vmem:[#allocation5 + $0x68] sm:$0xf]
        %v783 = vld [vmem:[#allocation5 + $0x6c] sm:$0xff]
        %v784 = vld [vmem:[#allocation5 + $0x74] sm:$0xf]
        %v785 = vld [vmem:[#allocation5 + $0x78] sm:$0xff]
        %v786 = vld [vmem:[#allocation5 + $0x80] sm:$0xf]
        %v787 = vld [vmem:[#allocation5 + $0x84] sm:$0xff]
        %v788 = vld [vmem:[#allocation5 + $0x8c] sm:$0xf]
        %v789 = vld [vmem:[#allocation5 + $0x90] sm:$0xff]
        %v790 = vld [vmem:[#allocation5 + $0x98] sm:$0xf]
        %v791 = vld [vmem:[#allocation5 + $0x9c] sm:$0xff]
        %v792 = vld [vmem:[#allocation5 + $0xa4] sm:$0xf]
        %v793 = vld [vmem:[#allocation5 + $0xa8] sm:$0xff]
        %v794 = vld [vmem:[#allocation5 + $0xb0] sm:$0xf]
        %v795 = vld [vmem:[#allocation5 + $0xb4] sm:$0xff]
        %v796 = vld [vmem:[#allocation5 + $0xbc] sm:$0xf]
        %v797 = vld [vmem:[%s4] sm:$0x7]
        %v799 = vlaneseq
        %v800 = vshrl.u32 %v799, 7
        %v801 = vsub.s32 0, %v800
        %v802 = vrot.slane %v797, %v801
        %v803 = vlaneseq
        %v804 = vshrl.u32 %v803, 7
        %v805 = vsub.s32 1, %v804
        %v806 = vrot.slane %v797, %v805
        %v807 = vlaneseq
        %v808 = vshrl.u32 %v807, 7
        %v809 = vsub.s32 2, %v808
        %v810 = vrot.slane %v797, %v809
        %v846 = vunpack.c.l.b16 %v765
        %v847 = vunpack.c.h.b16 %v765
        %v848 = vunpack.c.l.b16 %v766
        %v849 = vunpack.c.l.b16 %v767
        %v850 = vunpack.c.h.b16 %v767
        %v851 = vunpack.c.l.b16 %v768
        %v852 = vunpack.c.l.b16 %v769
        %v853 = vunpack.c.h.b16 %v769
        %v854 = vunpack.c.l.b16 %v770
        %v855 = vunpack.c.l.b16 %v771
        %v856 = vunpack.c.h.b16 %v771
        %v857 = vunpack.c.l.b16 %v772
        %v858 = vunpack.c.l.b16 %v773
        %v859 = vunpack.c.h.b16 %v773
        %v860 = vunpack.c.l.b16 %v774
        %v861 = vunpack.c.l.b16 %v775
        %v862 = vunpack.c.h.b16 %v775
        %v863 = vunpack.c.l.b16 %v776
        %v864 = vunpack.c.l.b16 %v777
        %v865 = vunpack.c.h.b16 %v777
        %v866 = vunpack.c.l.b16 %v778
        %v867 = vunpack.c.l.b16 %v779
        %v868 = vunpack.c.h.b16 %v779
        %v869 = vunpack.c.l.b16 %v780
        %v870 = vunpack.c.l.b16 %v781
        %v871 = vunpack.c.h.b16 %v781
        %v872 = vunpack.c.l.b16 %v782
        %v873 = vunpack.c.l.b16 %v783
        %v874 = vunpack.c.h.b16 %v783
        %v875 = vunpack.c.l.b16 %v784
        %v876 = vunpack.c.l.b16 %v785
        %v877 = vunpack.c.h.b16 %v785
        %v878 = vunpack.c.l.b16 %v786
        %v879 = vunpack.c.l.b16 %v787
        %v880 = vunpack.c.h.b16 %v787
        %v881 = vunpack.c.l.b16 %v788
        %v882 = vunpack.c.l.b16 %v789
        %v883 = vunpack.c.h.b16 %v789
        %v884 = vunpack.c.l.b16 %v790
        %v885 = vunpack.c.l.b16 %v791
        %v886 = vunpack.c.h.b16 %v791
        %v887 = vunpack.c.l.b16 %v792
        %v888 = vunpack.c.l.b16 %v793
        %v889 = vunpack.c.h.b16 %v793
        %v890 = vunpack.c.l.b16 %v794
        %v891 = vunpack.c.l.b16 %v795
        %v892 = vunpack.c.h.b16 %v795
        %v893 = vunpack.c.l.b16 %v796
        %v894 = vpack.c.b16 %v849, %v846
        %v895 = vpack.c.b16 %v850, %v847
        %v896 = vpack.c.b16 %v851, %v848
        %v897 = vpack.c.b16 %v855, %v852
        %v898 = vpack.c.b16 %v856, %v853
        %v899 = vpack.c.b16 %v857, %v854
        %v900 = vpack.c.b16 %v861, %v858
        %v901 = vpack.c.b16 %v862, %v859
        %v902 = vpack.c.b16 %v863, %v860
        %v903 = vpack.c.b16 %v867, %v864
        %v904 = vpack.c.b16 %v868, %v865
        %v905 = vpack.c.b16 %v869, %v866
        %v906 = vpack.c.b16 %v873, %v870
        %v907 = vpack.c.b16 %v874, %v871
        %v908 = vpack.c.b16 %v875, %v872
        %v909 = vpack.c.b16 %v879, %v876
        %v910 = vpack.c.b16 %v880, %v877
        %v911 = vpack.c.b16 %v881, %v878
        %v912 = vpack.c.b16 %v885, %v882
        %v913 = vpack.c.b16 %v886, %v883
        %v914 = vpack.c.b16 %v887, %v884
        %v915 = vpack.c.b16 %v891, %v888
        %v916 = vpack.c.b16 %v892, %v889
        %v917 = vpack.c.b16 %v893, %v890
        %942 = vmatprep.subr.bf16.mxu0 %v895
        %943 = vmatpush1.bf16.msra.mxu0 %v894
        %944 = vmatprep.subr.bf16.mxu0 %v898
        %945 = vmatpush1.bf16.msra.mxu0 %v897
        %946 = vmatprep.subr.bf16.mxu0 %v901
        %947 = vmatpush1.bf16.msra.mxu0 %v900
        %948 = vmatprep.subr.bf16.mxu0 %v904
        %949 = vmatpush1.bf16.msra.mxu0 %v903
        %950 = vmatprep.subr.bf16.mxu0 %v907
        %951 = vmatpush1.bf16.msra.mxu0 %v906
        %952 = vmatprep.subr.bf16.mxu0 %v910
        %953 = vmatpush1.bf16.msra.mxu0 %v909
        %954 = vmatprep.subr.bf16.mxu0 %v913
        %955 = vmatpush1.bf16.msra.mxu0 %v912
        %956 = vmatprep.subr.bf16.mxu0 %v916
        %957 = vmatpush1.bf16.msra.mxu0 %v915
        %958 = vmatprep.subr.bf16.mxu0 0
        %959 = vmatpush1.bf16.msra.mxu0 0
        %960 = vmatprep.subr.bf16.mxu0 0
        %961 = vmatpush1.bf16.msra.mxu0 0
        %962 = vmatprep.subr.bf16.mxu0 0
        %963 = vmatpush1.bf16.msra.mxu0 0
        %964 = vmatprep.subr.bf16.mxu0 0
        %965 = vmatpush1.bf16.msra.mxu0 0
        %966 = vmatprep.subr.bf16.mxu0 0
        %967 = vmatpush1.bf16.msra.mxu0 0
        %968 = vmatprep.subr.bf16.mxu0 0
        %969 = vmatpush1.bf16.msra.mxu0 0
        %970 = vmatprep.subr.bf16.mxu0 0
        %971 = vmatpush1.bf16.msra.mxu0 0
        %972 = vmatprep.subr.bf16.mxu0 0
        %973 = vmatpush1.bf16.msra.mxu0 0
        %974 = vmatprep.mubr.bf16.mxu0 0
        %975 = vmatmul.mubr.bf16.gmra.mrb[0].mxu0 %v757
        %v976 = vpop.f32.mrb[0].mxu0
        %v977 = vadd.f32 %v802, %v976
        %v978 = vpop.f32.mrb[0].mxu0
        %v979 = vadd.f32 %v806, %v978
        %v980 = vpop.f32.mrb[0].mxu0
        %v981 = vadd.f32 %v802, %v980
        %v982 = vpop.f32.mrb[0].mxu0
        %v983 = vadd.f32 %v806, %v982
        %984 = vmatprep.mubr.bf16.mxu0 0
        %985 = vmatmul.mubr.bf16.gmra.mrb[0].mxu0 %v758
        %v986 = vpop.f32.mrb[0].mxu0
        %v987 = vadd.f32 %v802, %v986
        %v988 = vpop.f32.mrb[0].mxu0
        %v989 = vadd.f32 %v806, %v988
        %v990 = vpop.f32.mrb[0].mxu0
        %v991 = vadd.f32 %v802, %v990
        %v992 = vpop.f32.mrb[0].mxu0
        %v993 = vadd.f32 %v806, %v992
        %994 = vmatprep.mubr.bf16.mxu0 0
        %995 = vmatmul.mubr.bf16.gmra.mrb[0].mxu0 %v759
        %v996 = vpop.f32.mrb[0].mxu0
        %v997 = vadd.f32 %v802, %v996
        %v998 = vpop.f32.mrb[0].mxu0
        %v999 = vadd.f32 %v806, %v998
        %v1000 = vpop.f32.mrb[0].mxu0
        %v1001 = vadd.f32 %v802, %v1000
        %v1002 = vpop.f32.mrb[0].mxu0
        %v1003 = vadd.f32 %v806, %v1002
        %1004 = vmatprep.mubr.bf16.mxu0 0
        %1005 = vmatmul.mubr.bf16.gmra.mrb[0].mxu0 %v760
        %v1006 = vpop.f32.mrb[0].mxu0
        %v1007 = vadd.f32 %v802, %v1006
        %v1008 = vpop.f32.mrb[0].mxu0
        %v1009 = vadd.f32 %v806, %v1008
        %v1010 = vpop.f32.mrb[0].mxu0
        %v1011 = vadd.f32 %v802, %v1010
        %v1012 = vpop.f32.mrb[0].mxu0
        %v1013 = vadd.f32 %v806, %v1012
        %1014 = vmatprep.mubr.bf16.mxu0 0
        %1015 = vmatmul.mubr.bf16.gmra.mrb[0].mxu0 %v761
        %v1016 = vpop.f32.mrb[0].mxu0
        %v1017 = vadd.f32 %v802, %v1016
        %v1018 = vpop.f32.mrb[0].mxu0
        %v1019 = vadd.f32 %v806, %v1018
        %v1020 = vpop.f32.mrb[0].mxu0
        %v1021 = vadd.f32 %v802, %v1020
        %v1022 = vpop.f32.mrb[0].mxu0
        %v1023 = vadd.f32 %v806, %v1022
        %1024 = vmatprep.mubr.bf16.mxu0 0
        %1025 = vmatmul.mubr.bf16.gmra.mrb[0].mxu0 %v762
        %v1026 = vpop.f32.mrb[0].mxu0
        %v1027 = vadd.f32 %v802, %v1026
        %v1028 = vpop.f32.mrb[0].mxu0
        %v1029 = vadd.f32 %v806, %v1028
        %v1030 = vpop.f32.mrb[0].mxu0
        %v1031 = vadd.f32 %v802, %v1030
        %v1032 = vpop.f32.mrb[0].mxu0
        %v1033 = vadd.f32 %v806, %v1032
        %1034 = vmatprep.mubr.bf16.mxu0 0
        %1035 = vmatmul.mubr.bf16.gmra.mrb[0].mxu0 %v763
        %v1036 = vpop.f32.mrb[0].mxu0
        %v1037 = vadd.f32 %v802, %v1036
        %v1038 = vpop.f32.mrb[0].mxu0
        %v1039 = vadd.f32 %v806, %v1038
        %v1040 = vpop.f32.mrb[0].mxu0
        %v1041 = vadd.f32 %v802, %v1040
        %v1042 = vpop.f32.mrb[0].mxu0
        %v1043 = vadd.f32 %v806, %v1042
        %1044 = vmatprep.mubr.bf16.mxu0 0
        %1045 = vmatmul.mubr.bf16.gmra.mrb[0].mxu0 %v764
        %v1046 = vpop.f32.mrb[0].mxu0
        %v1047 = vadd.f32 %v802, %v1046
        %v1048 = vpop.f32.mrb[0].mxu0
        %v1049 = vadd.f32 %v806, %v1048
        %v1050 = vpop.f32.mrb[0].mxu0
        %v1051 = vadd.f32 %v802, %v1050
        %v1052 = vpop.f32.mrb[0].mxu0
        %v1053 = vadd.f32 %v806, %v1052
        %1054 = vdwg.mxu0
        %1055 = vmatprep.subr.bf16.mxu0 0
        %1056 = vmatpush1.bf16.msra.mxu0 %v896
        %1057 = vmatprep.subr.bf16.mxu0 0
        %1058 = vmatpush1.bf16.msra.mxu0 %v899
        %1059 = vmatprep.subr.bf16.mxu0 0
        %1060 = vmatpush1.bf16.msra.mxu0 %v902
        %1061 = vmatprep.subr.bf16.mxu0 0
        %1062 = vmatpush1.bf16.msra.mxu0 %v905
        %1063 = vmatprep.subr.bf16.mxu0 0
        %1064 = vmatpush1.bf16.msra.mxu0 %v908
        %1065 = vmatprep.subr.bf16.mxu0 0
        %1066 = vmatpush1.bf16.msra.mxu0 %v911
        %1067 = vmatprep.subr.bf16.mxu0 0
        %1068 = vmatpush1.bf16.msra.mxu0 %v914
        %1069 = vmatprep.subr.bf16.mxu0 0
        %1070 = vmatpush1.bf16.msra.mxu0 %v917
        %1071 = vmatprep.subr.bf16.mxu0 0
        %1072 = vmatpush1.bf16.msra.mxu0 0
        %1073 = vmatprep.subr.bf16.mxu0 0
        %1074 = vmatpush1.bf16.msra.mxu0 0
        %1075 = vmatprep.subr.bf16.mxu0 0
        %1076 = vmatpush1.bf16.msra.mxu0 0
        %1077 = vmatprep.subr.bf16.mxu0 0
        %1078 = vmatpush1.bf16.msra.mxu0 0
        %1079 = vmatprep.subr.bf16.mxu0 0
        %1080 = vmatpush1.bf16.msra.mxu0 0
        %1081 = vmatprep.subr.bf16.mxu0 0
        %1082 = vmatpush1.bf16.msra.mxu0 0
        %1083 = vmatprep.subr.bf16.mxu0 0
        %1084 = vmatpush1.bf16.msra.mxu0 0
        %1085 = vmatprep.subr.bf16.mxu0 0
        %1086 = vmatpush1.bf16.msra.mxu0 0
        %1087 = vmatprep.mubr.bf16.mxu0 0
        %1088 = vmatmul.mubr.bf16.gmra.mrb[0].mxu0 %v757
        %v1089 = vpop.f32.mrb[0].mxu0
        %v1090 = vadd.f32 %v810, %v1089
        %v1091 = vpop.f32.mrb[0].mxu0
        %v1092 = vpop.f32.mrb[0].mxu0
        %v1093 = vadd.f32 %v810, %v1092
        %v1094 = vpop.f32.mrb[0].mxu0
        %1095 = vmatprep.mubr.bf16.mxu0 0
        %1096 = vmatmul.mubr.bf16.gmra.mrb[0].mxu0 %v758
        %v1097 = vpop.f32.mrb[0].mxu0
        %v1098 = vadd.f32 %v810, %v1097
        %v1099 = vpop.f32.mrb[0].mxu0
        %v1100 = vpop.f32.mrb[0].mxu0
        %v1101 = vadd.f32 %v810, %v1100
        %v1102 = vpop.f32.mrb[0].mxu0
        %1103 = vmatprep.mubr.bf16.mxu0 0
        %1104 = vmatmul.mubr.bf16.gmra.mrb[0].mxu0 %v759
        %v1105 = vpop.f32.mrb[0].mxu0
        %v1106 = vadd.f32 %v810, %v1105
        %v1107 = vpop.f32.mrb[0].mxu0
        %v1108 = vpop.f32.mrb[0].mxu0
        %v1109 = vadd.f32 %v810, %v1108
        %v1110 = vpop.f32.mrb[0].mxu0
        %1111 = vmatprep.mubr.bf16.mxu0 0
        %1112 = vmatmul.mubr.bf16.gmra.mrb[0].mxu0 %v760
        %v1113 = vpop.f32.mrb[0].mxu0
        %v1114 = vadd.f32 %v810, %v1113
        %v1115 = vpop.f32.mrb[0].mxu0
        %v1116 = vpop.f32.mrb[0].mxu0
        %v1117 = vadd.f32 %v810, %v1116
        %v1118 = vpop.f32.mrb[0].mxu0
        %1119 = vmatprep.mubr.bf16.mxu0 0
        %1120 = vmatmul.mubr.bf16.gmra.mrb[0].mxu0 %v761
        %v1121 = vpop.f32.mrb[0].mxu0
        %v1122 = vadd.f32 %v810, %v1121
        %v1123 = vpop.f32.mrb[0].mxu0
        %v1124 = vpop.f32.mrb[0].mxu0
        %v1125 = vadd.f32 %v810, %v1124
        %v1126 = vpop.f32.mrb[0].mxu0
        %1127 = vmatprep.mubr.bf16.mxu0 0
        %1128 = vmatmul.mubr.bf16.gmra.mrb[0].mxu0 %v762
        %v1129 = vpop.f32.mrb[0].mxu0
        %v1130 = vadd.f32 %v810, %v1129
        %v1131 = vpop.f32.mrb[0].mxu0
        %v1132 = vpop.f32.mrb[0].mxu0
        %v1133 = vadd.f32 %v810, %v1132
        %v1134 = vpop.f32.mrb[0].mxu0
        %1135 = vmatprep.mubr.bf16.mxu0 0
        %1136 = vmatmul.mubr.bf16.gmra.mrb[0].mxu0 %v763
        %v1137 = vpop.f32.mrb[0].mxu0
        %v1138 = vadd.f32 %v810, %v1137
        %v1139 = vpop.f32.mrb[0].mxu0
        %v1140 = vpop.f32.mrb[0].mxu0
        %v1141 = vadd.f32 %v810, %v1140
        %v1142 = vpop.f32.mrb[0].mxu0
        %1143 = vmatprep.mubr.bf16.mxu0 0
        %1144 = vmatmul.mubr.bf16.gmra.mrb[0].mxu0 %v764
        %v1145 = vpop.f32.mrb[0].mxu0
        %v1146 = vadd.f32 %v810, %v1145
        %v1147 = vpop.f32.mrb[0].mxu0
        %v1148 = vpop.f32.mrb[0].mxu0
        %v1149 = vadd.f32 %v810, %v1148
        %v1150 = vpop.f32.mrb[0].mxu0
        %1151 = vdwg.mxu0
        %v1152 = vpack.c.bf16 %v981, %v977
        %v1153 = vpack.c.bf16 %v991, %v987
        %v1154 = vpack.c.bf16 %v1001, %v997
        %v1155 = vpack.c.bf16 %v1011, %v1007
        %v1156 = vpack.c.bf16 %v1021, %v1017
        %v1157 = vpack.c.bf16 %v1031, %v1027
        %v1158 = vpack.c.bf16 %v1041, %v1037
        %v1159 = vpack.c.bf16 %v1051, %v1047
        %v1160 = vpack.c.bf16 %v983, %v979
        %v1161 = vpack.c.bf16 %v993, %v989
        %v1162 = vpack.c.bf16 %v1003, %v999
        %v1163 = vpack.c.bf16 %v1013, %v1009
        %v1164 = vpack.c.bf16 %v1023, %v1019
        %v1165 = vpack.c.bf16 %v1033, %v1029
        %v1166 = vpack.c.bf16 %v1043, %v1039
        %v1167 = vpack.c.bf16 %v1053, %v1049
        %v1168 = vpack.c.bf16 %v1093, %v1090
        %v1169 = vpack.c.bf16 %v1101, %v1098
        %v1170 = vpack.c.bf16 %v1109, %v1106
        %v1171 = vpack.c.bf16 %v1117, %v1114
        %v1172 = vpack.c.bf16 %v1125, %v1122
        %v1173 = vpack.c.bf16 %v1133, %v1130
        %v1174 = vpack.c.bf16 %v1141, %v1138
        %v1175 = vpack.c.bf16 %v1149, %v1146
        %vm1176 = vcmask 523264
        %v1178 = vsel %vm1176, %v1152, 0
        %v1181 = vsel %vm1176, %v1153, 0
        %v1184 = vsel %vm1176, %v1154, 0
        %v1187 = vsel %vm1176, %v1155, 0
        %v1190 = vsel %vm1176, %v1156, 0
        %v1193 = vsel %vm1176, %v1157, 0
        %v1196 = vsel %vm1176, %v1158, 0
        %v1199 = vsel %vm1176, %v1159, 0
        %v1202 = vsel %vm1176, %v1160, 0
        %v1205 = vsel %vm1176, %v1161, 0
        %v1208 = vsel %vm1176, %v1162, 0
        %v1211 = vsel %vm1176, %v1163, 0
        %v1214 = vsel %vm1176, %v1164, 0
        %v1217 = vsel %vm1176, %v1165, 0
        %v1220 = vsel %vm1176, %v1166, 0
        %v1223 = vsel %vm1176, %v1167, 0
        %1225 = vmatprep.subr.bf16.mxu0 0
        %1226 = vmatpush1.bf16.xpose.msra.mxu0 %v1202
        %1227 = vmatprep.subr.bf16.mxu0 0
        %1228 = vmatpush1.bf16.xpose.msra.mxu0 %v1205
        %1229 = vmatprep.subr.bf16.mxu0 0
        %1230 = vmatpush1.bf16.xpose.msra.mxu0 %v1208
        %1231 = vmatprep.subr.bf16.mxu0 0
        %1232 = vmatpush1.bf16.xpose.msra.mxu0 %v1211
        %1233 = vmatprep.subr.bf16.mxu0 0
        %1234 = vmatpush1.bf16.xpose.msra.mxu0 %v1214
        %1235 = vmatprep.subr.bf16.mxu0 0
        %1236 = vmatpush1.bf16.xpose.msra.mxu0 %v1217
        %1237 = vmatprep.subr.bf16.mxu0 0
        %1238 = vmatpush1.bf16.xpose.msra.mxu0 %v1220
        %1239 = vmatprep.subr.bf16.mxu0 0
        %1240 = vmatpush1.bf16.xpose.msra.mxu0 %v1223
        %1241 = vmatprep.subr.bf16.mxu0 0
        %1242 = vmatpush1.bf16.xpose.msra.mxu0 0
        %1243 = vmatprep.subr.bf16.mxu0 0
        %1244 = vmatpush1.bf16.xpose.msra.mxu0 0
        %1245 = vmatprep.subr.bf16.mxu0 0
        %1246 = vmatpush1.bf16.xpose.msra.mxu0 0
        %1247 = vmatprep.subr.bf16.mxu0 0
        %1248 = vmatpush1.bf16.xpose.msra.mxu0 0
        %1249 = vmatprep.subr.bf16.mxu0 0
        %1250 = vmatpush1.bf16.xpose.msra.mxu0 0
        %1251 = vmatprep.subr.bf16.mxu0 0
        %1252 = vmatpush1.bf16.xpose.msra.mxu0 0
        %1253 = vmatprep.subr.bf16.mxu0 0
        %1254 = vmatpush1.bf16.xpose.msra.mxu0 0
        %1255 = vmatprep.subr.bf16.mxu0 0
        %1256 = vmatpush1.bf16.xpose.msra.mxu0 0
        %1257 = vmatprep.mubr.bf16.mxu0 0
        %1258 = vmatmul.mubr.bf16.gmra.mrb[0].mxu0 %v1178
        %v1259 = vpop.f32.mrb[0].mxu0
        %v1260 = vadd.f32 0.0, %v1259
        %v1261 = vpop.f32.mrb[0].mxu0
        %v1262 = vpop.f32.mrb[0].mxu0
        %v1263 = vadd.f32 0.0, %v1262
        %v1264 = vpop.f32.mrb[0].mxu0
        %1265 = vmatprep.mubr.bf16.mxu0 0
        %1266 = vmatmul.mubr.bf16.gmra.mrb[0].mxu0 %v1181
        %v1267 = vpop.f32.mrb[0].mxu0
        %v1268 = vadd.f32 0.0, %v1267
        %v1269 = vpop.f32.mrb[0].mxu0
        %v1270 = vpop.f32.mrb[0].mxu0
        %v1271 = vadd.f32 0.0, %v1270
        %v1272 = vpop.f32.mrb[0].mxu0
        %1273 = vmatprep.mubr.bf16.mxu0 0
        %1274 = vmatmul.mubr.bf16.gmra.mrb[0].mxu0 %v1184
        %v1275 = vpop.f32.mrb[0].mxu0
        %v1276 = vadd.f32 0.0, %v1275
        %v1277 = vpop.f32.mrb[0].mxu0
        %v1278 = vpop.f32.mrb[0].mxu0
        %v1279 = vadd.f32 0.0, %v1278
        %v1280 = vpop.f32.mrb[0].mxu0
        %1281 = vmatprep.mubr.bf16.mxu0 0
        %1282 = vmatmul.mubr.bf16.gmra.mrb[0].mxu0 %v1187
        %v1283 = vpop.f32.mrb[0].mxu0
        %v1284 = vadd.f32 0.0, %v1283
        %v1285 = vpop.f32.mrb[0].mxu0
        %v1286 = vpop.f32.mrb[0].mxu0
        %v1287 = vadd.f32 0.0, %v1286
        %v1288 = vpop.f32.mrb[0].mxu0
        %1289 = vmatprep.mubr.bf16.mxu0 0
        %1290 = vmatmul.mubr.bf16.gmra.mrb[0].mxu0 %v1190
        %v1291 = vpop.f32.mrb[0].mxu0
        %v1292 = vadd.f32 0.0, %v1291
        %v1293 = vpop.f32.mrb[0].mxu0
        %v1294 = vpop.f32.mrb[0].mxu0
        %v1295 = vadd.f32 0.0, %v1294
        %v1296 = vpop.f32.mrb[0].mxu0
        %1297 = vmatprep.mubr.bf16.mxu0 0
        %1298 = vmatmul.mubr.bf16.gmra.mrb[0].mxu0 %v1193
        %v1299 = vpop.f32.mrb[0].mxu0
        %v1300 = vadd.f32 0.0, %v1299
        %v1301 = vpop.f32.mrb[0].mxu0
        %v1302 = vpop.f32.mrb[0].mxu0
        %v1303 = vadd.f32 0.0, %v1302
        %v1304 = vpop.f32.mrb[0].mxu0
        %1305 = vmatprep.mubr.bf16.mxu0 0
        %1306 = vmatmul.mubr.bf16.gmra.mrb[0].mxu0 %v1196
        %v1307 = vpop.f32.mrb[0].mxu0
        %v1308 = vadd.f32 0.0, %v1307
        %v1309 = vpop.f32.mrb[0].mxu0
        %v1310 = vpop.f32.mrb[0].mxu0
        %v1311 = vadd.f32 0.0, %v1310
        %v1312 = vpop.f32.mrb[0].mxu0
        %1313 = vmatprep.mubr.bf16.mxu0 0
        %1314 = vmatmul.mubr.bf16.gmra.mrb[0].mxu0 %v1199
        %v1315 = vpop.f32.mrb[0].mxu0
        %v1316 = vadd.f32 0.0, %v1315
        %v1317 = vpop.f32.mrb[0].mxu0
        %v1318 = vpop.f32.mrb[0].mxu0
        %v1319 = vadd.f32 0.0, %v1318
        %v1320 = vpop.f32.mrb[0].mxu0
        %1321 = vdwg.mxu0
        %1322 = vmax.xlane.f32.xlu0 %v1260
        %v1323 = vpop.xlane.xlu0 %1322
        %1324 = vmax.xlane.f32.xlu0 %v1263
        %v1325 = vpop.xlane.xlu0 %1324
        %1326 = vmax.xlane.f32.xlu0 %v1268
        %v1327 = vpop.xlane.xlu0 %1326
        %1328 = vmax.xlane.f32.xlu0 %v1271
        %v1329 = vpop.xlane.xlu0 %1328
        %1330 = vmax.xlane.f32.xlu0 %v1276
        %v1331 = vpop.xlane.xlu0 %1330
        %1332 = vmax.xlane.f32.xlu0 %v1279
        %v1333 = vpop.xlane.xlu0 %1332
        %1334 = vmax.xlane.f32.xlu0 %v1284
        %v1335 = vpop.xlane.xlu0 %1334
        %1336 = vmax.xlane.f32.xlu0 %v1287
        %v1337 = vpop.xlane.xlu0 %1336
        %1338 = vmax.xlane.f32.xlu0 %v1292
        %v1339 = vpop.xlane.xlu0 %1338
        %1340 = vmax.xlane.f32.xlu0 %v1295
        %v1341 = vpop.xlane.xlu0 %1340
        %1342 = vmax.xlane.f32.xlu0 %v1300
        %v1343 = vpop.xlane.xlu0 %1342
        %1344 = vmax.xlane.f32.xlu0 %v1303
        %v1345 = vpop.xlane.xlu0 %1344
        %1346 = vmax.xlane.f32.xlu0 %v1308
        %v1347 = vpop.xlane.xlu0 %1346
        %1348 = vmax.xlane.f32.xlu0 %v1311
        %v1349 = vpop.xlane.xlu0 %1348
        %1350 = vmax.xlane.f32.xlu0 %v1316
        %v1351 = vpop.xlane.xlu0 %1350
        %1352 = vmax.xlane.f32.xlu0 %v1319
        %v1353 = vpop.xlane.xlu0 %1352
        %v1354 = vsub.f32 %v1260, %v1323
        %v1355 = vsub.f32 %v1263, %v1325
        %v1356 = vsub.f32 %v1268, %v1327
        %v1357 = vsub.f32 %v1271, %v1329
        %v1358 = vsub.f32 %v1276, %v1331
        %v1359 = vsub.f32 %v1279, %v1333
        %v1360 = vsub.f32 %v1284, %v1335
        %v1361 = vsub.f32 %v1287, %v1337
        %v1362 = vsub.f32 %v1292, %v1339
        %v1363 = vsub.f32 %v1295, %v1341
        %v1364 = vsub.f32 %v1300, %v1343
        %v1365 = vsub.f32 %v1303, %v1345
        %v1366 = vsub.f32 %v1308, %v1347
        %v1367 = vsub.f32 %v1311, %v1349
        %v1368 = vsub.f32 %v1316, %v1351
        %v1369 = vsub.f32 %v1319, %v1353
        %v1370 = vmul.f32 %v1354, 1.442695
        %v1371 = vpow.pop %v1370
        %v1372 = vmul.f32 %v1355, 1.442695
        %v1373 = vpow.pop %v1372
        %v1374 = vmul.f32 %v1356, 1.442695
        %v1375 = vpow.pop %v1374
        %v1376 = vmul.f32 %v1357, 1.442695
        %v1377 = vpow.pop %v1376
        %v1378 = vmul.f32 %v1358, 1.442695
        %v1379 = vpow.pop %v1378
        %v1380 = vmul.f32 %v1359, 1.442695
        %v1381 = vpow.pop %v1380
        %v1382 = vmul.f32 %v1360, 1.442695
        %v1383 = vpow.pop %v1382
        %v1384 = vmul.f32 %v1361, 1.442695
        %v1385 = vpow.pop %v1384
        %v1386 = vmul.f32 %v1362, 1.442695
        %v1387 = vpow.pop %v1386
        %v1388 = vmul.f32 %v1363, 1.442695
        %v1389 = vpow.pop %v1388
        %v1390 = vmul.f32 %v1364, 1.442695
        %v1391 = vpow.pop %v1390
        %v1392 = vmul.f32 %v1365, 1.442695
        %v1393 = vpow.pop %v1392
        %v1394 = vmul.f32 %v1366, 1.442695
        %v1395 = vpow.pop %v1394
        %v1396 = vmul.f32 %v1367, 1.442695
        %v1397 = vpow.pop %v1396
        %v1398 = vmul.f32 %v1368, 1.442695
        %v1399 = vpow.pop %v1398
        %v1400 = vmul.f32 %v1369, 1.442695
        %v1401 = vpow.pop %v1400
        %1402 = vadd.xlane.f32.xlu0 %v1371
        %v1403 = vpop.xlane.xlu0 %1402
        %1404 = vadd.xlane.f32.xlu0 %v1373
        %v1405 = vpop.xlane.xlu0 %1404
        %1406 = vadd.xlane.f32.xlu0 %v1375
        %v1407 = vpop.xlane.xlu0 %1406
        %1408 = vadd.xlane.f32.xlu0 %v1377
        %v1409 = vpop.xlane.xlu0 %1408
        %1410 = vadd.xlane.f32.xlu0 %v1379
        %v1411 = vpop.xlane.xlu0 %1410
        %1412 = vadd.xlane.f32.xlu0 %v1381
        %v1413 = vpop.xlane.xlu0 %1412
        %1414 = vadd.xlane.f32.xlu0 %v1383
        %v1415 = vpop.xlane.xlu0 %1414
        %1416 = vadd.xlane.f32.xlu0 %v1385
        %v1417 = vpop.xlane.xlu0 %1416
        %1418 = vadd.xlane.f32.xlu0 %v1387
        %v1419 = vpop.xlane.xlu0 %1418
        %1420 = vadd.xlane.f32.xlu0 %v1389
        %v1421 = vpop.xlane.xlu0 %1420
        %1422 = vadd.xlane.f32.xlu0 %v1391
        %v1423 = vpop.xlane.xlu0 %1422
        %1424 = vadd.xlane.f32.xlu0 %v1393
        %v1425 = vpop.xlane.xlu0 %1424
        %1426 = vadd.xlane.f32.xlu0 %v1395
        %v1427 = vpop.xlane.xlu0 %1426
        %1428 = vadd.xlane.f32.xlu0 %v1397
        %v1429 = vpop.xlane.xlu0 %1428
        %1430 = vadd.xlane.f32.xlu0 %v1399
        %v1431 = vpop.xlane.xlu0 %1430
        %1432 = vadd.xlane.f32.xlu0 %v1401
        %v1433 = vpop.xlane.xlu0 %1432
        %v1434 = vpack.c.bf16 %v1373, %v1371
        %v1435 = vpack.c.bf16 %v1377, %v1375
        %v1436 = vpack.c.bf16 %v1381, %v1379
        %v1437 = vpack.c.bf16 %v1385, %v1383
        %v1438 = vpack.c.bf16 %v1389, %v1387
        %v1439 = vpack.c.bf16 %v1393, %v1391
        %v1440 = vpack.c.bf16 %v1397, %v1395
        %v1441 = vpack.c.bf16 %v1401, %v1399
        %1442 = vmatprep.subr.bf16.mxu0 0
        %1443 = vmatpush1.bf16.msra.mxu0 %v1168
        %1444 = vmatprep.subr.bf16.mxu0 0
        %1445 = vmatpush1.bf16.msra.mxu0 %v1169
        %1446 = vmatprep.subr.bf16.mxu0 0
        %1447 = vmatpush1.bf16.msra.mxu0 %v1170
        %1448 = vmatprep.subr.bf16.mxu0 0
        %1449 = vmatpush1.bf16.msra.mxu0 %v1171
        %1450 = vmatprep.subr.bf16.mxu0 0
        %1451 = vmatpush1.bf16.msra.mxu0 %v1172
        %1452 = vmatprep.subr.bf16.mxu0 0
        %1453 = vmatpush1.bf16.msra.mxu0 %v1173
        %1454 = vmatprep.subr.bf16.mxu0 0
        %1455 = vmatpush1.bf16.msra.mxu0 %v1174
        %1456 = vmatprep.subr.bf16.mxu0 0
        %1457 = vmatpush1.bf16.msra.mxu0 %v1175
        %1458 = vmatprep.subr.bf16.mxu0 0
        %1459 = vmatpush1.bf16.msra.mxu0 0
        %1460 = vmatprep.subr.bf16.mxu0 0
        %1461 = vmatpush1.bf16.msra.mxu0 0
        %1462 = vmatprep.subr.bf16.mxu0 0
        %1463 = vmatpush1.bf16.msra.mxu0 0
        %1464 = vmatprep.subr.bf16.mxu0 0
        %1465 = vmatpush1.bf16.msra.mxu0 0
        %1466 = vmatprep.subr.bf16.mxu0 0
        %1467 = vmatpush1.bf16.msra.mxu0 0
        %1468 = vmatprep.subr.bf16.mxu0 0
        %1469 = vmatpush1.bf16.msra.mxu0 0
        %1470 = vmatprep.subr.bf16.mxu0 0
        %1471 = vmatpush1.bf16.msra.mxu0 0
        %1472 = vmatprep.subr.bf16.mxu0 0
        %1473 = vmatpush1.bf16.msra.mxu0 0
        %1474 = vmatprep.mubr.bf16.mxu0 0
        %1475 = vmatmul.mubr.bf16.gmra.mrb[0].mxu0 %v1434
        %v1476 = vpop.f32.mrb[0].mxu0
        %v1477 = vadd.f32 0.0, %v1476
        %v1478 = vpop.f32.mrb[0].mxu0
        %v1479 = vpop.f32.mrb[0].mxu0
        %v1480 = vadd.f32 0.0, %v1479
        %v1481 = vpop.f32.mrb[0].mxu0
        %1482 = vmatprep.mubr.bf16.mxu0 0
        %1483 = vmatmul.mubr.bf16.gmra.mrb[0].mxu0 %v1435
        %v1484 = vpop.f32.mrb[0].mxu0
        %v1485 = vadd.f32 0.0, %v1484
        %v1486 = vpop.f32.mrb[0].mxu0
        %v1487 = vpop.f32.mrb[0].mxu0
        %v1488 = vadd.f32 0.0, %v1487
        %v1489 = vpop.f32.mrb[0].mxu0
        %1490 = vmatprep.mubr.bf16.mxu0 0
        %1491 = vmatmul.mubr.bf16.gmra.mrb[0].mxu0 %v1436
        %v1492 = vpop.f32.mrb[0].mxu0
        %v1493 = vadd.f32 0.0, %v1492
        %v1494 = vpop.f32.mrb[0].mxu0
        %v1495 = vpop.f32.mrb[0].mxu0
        %v1496 = vadd.f32 0.0, %v1495
        %v1497 = vpop.f32.mrb[0].mxu0
        %1498 = vmatprep.mubr.bf16.mxu0 0
        %1499 = vmatmul.mubr.bf16.gmra.mrb[0].mxu0 %v1437
        %v1500 = vpop.f32.mrb[0].mxu0
        %v1501 = vadd.f32 0.0, %v1500
        %v1502 = vpop.f32.mrb[0].mxu0
        %v1503 = vpop.f32.mrb[0].mxu0
        %v1504 = vadd.f32 0.0, %v1503
        %v1505 = vpop.f32.mrb[0].mxu0
        %1506 = vmatprep.mubr.bf16.mxu0 0
        %1507 = vmatmul.mubr.bf16.gmra.mrb[0].mxu0 %v1438
        %v1508 = vpop.f32.mrb[0].mxu0
        %v1509 = vadd.f32 0.0, %v1508
        %v1510 = vpop.f32.mrb[0].mxu0
        %v1511 = vpop.f32.mrb[0].mxu0
        %v1512 = vadd.f32 0.0, %v1511
        %v1513 = vpop.f32.mrb[0].mxu0
        %1514 = vmatprep.mubr.bf16.mxu0 0
        %1515 = vmatmul.mubr.bf16.gmra.mrb[0].mxu0 %v1439
        %v1516 = vpop.f32.mrb[0].mxu0
        %v1517 = vadd.f32 0.0, %v1516
        %v1518 = vpop.f32.mrb[0].mxu0
        %v1519 = vpop.f32.mrb[0].mxu0
        %v1520 = vadd.f32 0.0, %v1519
        %v1521 = vpop.f32.mrb[0].mxu0
        %1522 = vmatprep.mubr.bf16.mxu0 0
        %1523 = vmatmul.mubr.bf16.gmra.mrb[0].mxu0 %v1440
        %v1524 = vpop.f32.mrb[0].mxu0
        %v1525 = vadd.f32 0.0, %v1524
        %v1526 = vpop.f32.mrb[0].mxu0
        %v1527 = vpop.f32.mrb[0].mxu0
        %v1528 = vadd.f32 0.0, %v1527
        %v1529 = vpop.f32.mrb[0].mxu0
        %1530 = vmatprep.mubr.bf16.mxu0 0
        %1531 = vmatmul.mubr.bf16.gmra.mrb[0].mxu0 %v1441
        %v1532 = vpop.f32.mrb[0].mxu0
        %v1533 = vadd.f32 0.0, %v1532
        %v1534 = vpop.f32.mrb[0].mxu0
        %v1535 = vpop.f32.mrb[0].mxu0
        %v1536 = vadd.f32 0.0, %v1535
        %v1537 = vpop.f32.mrb[0].mxu0
        %1538 = vdwg.mxu0
        %v1539 = vrcp.pop %v1403
        %v1540 = vrcp.pop %v1405
        %v1541 = vrcp.pop %v1407
        %v1542 = vrcp.pop %v1409
        %v1543 = vrcp.pop %v1411
        %v1544 = vrcp.pop %v1413
        %v1545 = vrcp.pop %v1415
        %v1546 = vrcp.pop %v1417
        %v1547 = vrcp.pop %v1419
        %v1548 = vrcp.pop %v1421
        %v1549 = vrcp.pop %v1423
        %v1550 = vrcp.pop %v1425
        %v1551 = vrcp.pop %v1427
        %v1552 = vrcp.pop %v1429
        %v1553 = vrcp.pop %v1431
        %v1554 = vrcp.pop %v1433
        %v1555 = vmul.f32 %v1477, %v1539
        %v1556 = vmul.f32 %v1480, %v1540
        %v1557 = vmul.f32 %v1485, %v1541
        %v1558 = vmul.f32 %v1488, %v1542
        %v1559 = vmul.f32 %v1493, %v1543
        %v1560 = vmul.f32 %v1496, %v1544
        %v1561 = vmul.f32 %v1501, %v1545
        %v1562 = vmul.f32 %v1504, %v1546
        %v1563 = vmul.f32 %v1509, %v1547
        %v1564 = vmul.f32 %v1512, %v1548
        %v1565 = vmul.f32 %v1517, %v1549
        %v1566 = vmul.f32 %v1520, %v1550
        %v1567 = vmul.f32 %v1525, %v1551
        %v1568 = vmul.f32 %v1528, %v1552
        %v1569 = vmul.f32 %v1533, %v1553
        %v1570 = vmul.f32 %v1536, %v1554
        %1579 = vrot.lane.b32.xlu0 %v1152, 64
        %v1580 = vpop.permute.xlu0 %1579
        %1581 = vrot.lane.b32.xlu0 %v1153, 64
        %v1582 = vpop.permute.xlu0 %1581
        %1583 = vrot.lane.b32.xlu0 %v1154, 64
        %v1584 = vpop.permute.xlu0 %1583
        %1585 = vrot.lane.b32.xlu0 %v1155, 64
        %v1586 = vpop.permute.xlu0 %1585
        %1587 = vrot.lane.b32.xlu0 %v1156, 64
        %v1588 = vpop.permute.xlu0 %1587
        %1589 = vrot.lane.b32.xlu0 %v1157, 64
        %v1590 = vpop.permute.xlu0 %1589
        %1591 = vrot.lane.b32.xlu0 %v1158, 64
        %v1592 = vpop.permute.xlu0 %1591
        %1593 = vrot.lane.b32.xlu0 %v1159, 64
        %v1594 = vpop.permute.xlu0 %1593
        %1603 = vrot.lane.b32.xlu0 %v1160, 64
        %v1604 = vpop.permute.xlu0 %1603
        %1605 = vrot.lane.b32.xlu0 %v1161, 64
        %v1606 = vpop.permute.xlu0 %1605
        %1607 = vrot.lane.b32.xlu0 %v1162, 64
        %v1608 = vpop.permute.xlu0 %1607
        %1609 = vrot.lane.b32.xlu0 %v1163, 64
        %v1610 = vpop.permute.xlu0 %1609
        %1611 = vrot.lane.b32.xlu0 %v1164, 64
        %v1612 = vpop.permute.xlu0 %1611
        %1613 = vrot.lane.b32.xlu0 %v1165, 64
        %v1614 = vpop.permute.xlu0 %1613
        %1615 = vrot.lane.b32.xlu0 %v1166, 64
        %v1616 = vpop.permute.xlu0 %1615
        %1617 = vrot.lane.b32.xlu0 %v1167, 64
        %v1618 = vpop.permute.xlu0 %1617
        %v1620 = vsel %vm1176, %v1580, 0
        %v1623 = vsel %vm1176, %v1582, 0
        %v1626 = vsel %vm1176, %v1584, 0
        %v1629 = vsel %vm1176, %v1586, 0
        %v1632 = vsel %vm1176, %v1588, 0
        %v1635 = vsel %vm1176, %v1590, 0
        %v1638 = vsel %vm1176, %v1592, 0
        %v1641 = vsel %vm1176, %v1594, 0
        %v1644 = vsel %vm1176, %v1604, 0
        %v1647 = vsel %vm1176, %v1606, 0
        %v1650 = vsel %vm1176, %v1608, 0
        %v1653 = vsel %vm1176, %v1610, 0
        %v1656 = vsel %vm1176, %v1612, 0
        %v1659 = vsel %vm1176, %v1614, 0
        %v1662 = vsel %vm1176, %v1616, 0
        %v1665 = vsel %vm1176, %v1618, 0
        %1667 = vmatprep.subr.bf16.mxu0 0
        %1668 = vmatpush1.bf16.xpose.msra.mxu0 %v1644
        %1669 = vmatprep.subr.bf16.mxu0 0
        %1670 = vmatpush1.bf16.xpose.msra.mxu0 %v1647
        %1671 = vmatprep.subr.bf16.mxu0 0
        %1672 = vmatpush1.bf16.xpose.msra.mxu0 %v1650
        %1673 = vmatprep.subr.bf16.mxu0 0
        %1674 = vmatpush1.bf16.xpose.msra.mxu0 %v1653
        %1675 = vmatprep.subr.bf16.mxu0 0
        %1676 = vmatpush1.bf16.xpose.msra.mxu0 %v1656
        %1677 = vmatprep.subr.bf16.mxu0 0
        %1678 = vmatpush1.bf16.xpose.msra.mxu0 %v1659
        %1679 = vmatprep.subr.bf16.mxu0 0
        %1680 = vmatpush1.bf16.xpose.msra.mxu0 %v1662
        %1681 = vmatprep.subr.bf16.mxu0 0
        %1682 = vmatpush1.bf16.xpose.msra.mxu0 %v1665
        %1683 = vmatprep.subr.bf16.mxu0 0
        %1684 = vmatpush1.bf16.xpose.msra.mxu0 0
        %1685 = vmatprep.subr.bf16.mxu0 0
        %1686 = vmatpush1.bf16.xpose.msra.mxu0 0
        %1687 = vmatprep.subr.bf16.mxu0 0
        %1688 = vmatpush1.bf16.xpose.msra.mxu0 0
        %1689 = vmatprep.subr.bf16.mxu0 0
        %1690 = vmatpush1.bf16.xpose.msra.mxu0 0
        %1691 = vmatprep.subr.bf16.mxu0 0
        %1692 = vmatpush1.bf16.xpose.msra.mxu0 0
        %1693 = vmatprep.subr.bf16.mxu0 0
        %1694 = vmatpush1.bf16.xpose.msra.mxu0 0
        %1695 = vmatprep.subr.bf16.mxu0 0
        %1696 = vmatpush1.bf16.xpose.msra.mxu0 0
        %1697 = vmatprep.subr.bf16.mxu0 0
        %1698 = vmatpush1.bf16.xpose.msra.mxu0 0
        %1699 = vmatprep.mubr.bf16.mxu0 0
        %1700 = vmatmul.mubr.bf16.gmra.mrb[0].mxu0 %v1620
        %v1701 = vpop.f32.mrb[0].mxu0
        %v1702 = vadd.f32 0.0, %v1701
        %v1703 = vpop.f32.mrb[0].mxu0
        %v1704 = vpop.f32.mrb[0].mxu0
        %v1705 = vadd.f32 0.0, %v1704
        %v1706 = vpop.f32.mrb[0].mxu0
        %1707 = vmatprep.mubr.bf16.mxu0 0
        %1708 = vmatmul.mubr.bf16.gmra.mrb[0].mxu0 %v1623
        %v1709 = vpop.f32.mrb[0].mxu0
        %v1710 = vadd.f32 0.0, %v1709
        %v1711 = vpop.f32.mrb[0].mxu0
        %v1712 = vpop.f32.mrb[0].mxu0
        %v1713 = vadd.f32 0.0, %v1712
        %v1714 = vpop.f32.mrb[0].mxu0
        %1715 = vmatprep.mubr.bf16.mxu0 0
        %1716 = vmatmul.mubr.bf16.gmra.mrb[0].mxu0 %v1626
        %v1717 = vpop.f32.mrb[0].mxu0
        %v1718 = vadd.f32 0.0, %v1717
        %v1719 = vpop.f32.mrb[0].mxu0
        %v1720 = vpop.f32.mrb[0].mxu0
        %v1721 = vadd.f32 0.0, %v1720
        %v1722 = vpop.f32.mrb[0].mxu0
        %1723 = vmatprep.mubr.bf16.mxu0 0
        %1724 = vmatmul.mubr.bf16.gmra.mrb[0].mxu0 %v1629
        %v1725 = vpop.f32.mrb[0].mxu0
        %v1726 = vadd.f32 0.0, %v1725
        %v1727 = vpop.f32.mrb[0].mxu0
        %v1728 = vpop.f32.mrb[0].mxu0
        %v1729 = vadd.f32 0.0, %v1728
        %v1730 = vpop.f32.mrb[0].mxu0
        %1731 = vmatprep.mubr.bf16.mxu0 0
        %1732 = vmatmul.mubr.bf16.gmra.mrb[0].mxu0 %v1632
        %v1733 = vpop.f32.mrb[0].mxu0
        %v1734 = vadd.f32 0.0, %v1733
        %v1735 = vpop.f32.mrb[0].mxu0
        %v1736 = vpop.f32.mrb[0].mxu0
        %v1737 = vadd.f32 0.0, %v1736
        %v1738 = vpop.f32.mrb[0].mxu0
        %1739 = vmatprep.mubr.bf16.mxu0 0
        %1740 = vmatmul.mubr.bf16.gmra.mrb[0].mxu0 %v1635
        %v1741 = vpop.f32.mrb[0].mxu0
        %v1742 = vadd.f32 0.0, %v1741
        %v1743 = vpop.f32.mrb[0].mxu0
        %v1744 = vpop.f32.mrb[0].mxu0
        %v1745 = vadd.f32 0.0, %v1744
        %v1746 = vpop.f32.mrb[0].mxu0
        %1747 = vmatprep.mubr.bf16.mxu0 0
        %1748 = vmatmul.mubr.bf16.gmra.mrb[0].mxu0 %v1638
        %v1749 = vpop.f32.mrb[0].mxu0
        %v1750 = vadd.f32 0.0, %v1749
        %v1751 = vpop.f32.mrb[0].mxu0
        %v1752 = vpop.f32.mrb[0].mxu0
        %v1753 = vadd.f32 0.0, %v1752
        %v1754 = vpop.f32.mrb[0].mxu0
        %1755 = vmatprep.mubr.bf16.mxu0 0
        %1756 = vmatmul.mubr.bf16.gmra.mrb[0].mxu0 %v1641
        %v1757 = vpop.f32.mrb[0].mxu0
        %v1758 = vadd.f32 0.0, %v1757
        %v1759 = vpop.f32.mrb[0].mxu0
        %v1760 = vpop.f32.mrb[0].mxu0
        %v1761 = vadd.f32 0.0, %v1760
        %v1762 = vpop.f32.mrb[0].mxu0
        %1763 = vdwg.mxu0
        %1764 = vmax.xlane.f32.xlu0 %v1702
        %v1765 = vpop.xlane.xlu0 %1764
        %1766 = vmax.xlane.f32.xlu0 %v1705
        %v1767 = vpop.xlane.xlu0 %1766
        %1768 = vmax.xlane.f32.xlu0 %v1710
        %v1769 = vpop.xlane.xlu0 %1768
        %1770 = vmax.xlane.f32.xlu0 %v1713
        %v1771 = vpop.xlane.xlu0 %1770
        %1772 = vmax.xlane.f32.xlu0 %v1718
        %v1773 = vpop.xlane.xlu0 %1772
        %1774 = vmax.xlane.f32.xlu0 %v1721
        %v1775 = vpop.xlane.xlu0 %1774
        %1776 = vmax.xlane.f32.xlu0 %v1726
        %v1777 = vpop.xlane.xlu0 %1776
        %1778 = vmax.xlane.f32.xlu0 %v1729
        %v1779 = vpop.xlane.xlu0 %1778
        %1780 = vmax.xlane.f32.xlu0 %v1734
        %v1781 = vpop.xlane.xlu0 %1780
        %1782 = vmax.xlane.f32.xlu0 %v1737
        %v1783 = vpop.xlane.xlu0 %1782
        %1784 = vmax.xlane.f32.xlu0 %v1742
        %v1785 = vpop.xlane.xlu0 %1784
        %1786 = vmax.xlane.f32.xlu0 %v1745
        %v1787 = vpop.xlane.xlu0 %1786
        %1788 = vmax.xlane.f32.xlu0 %v1750
        %v1789 = vpop.xlane.xlu0 %1788
        %1790 = vmax.xlane.f32.xlu0 %v1753
        %v1791 = vpop.xlane.xlu0 %1790
        %1792 = vmax.xlane.f32.xlu0 %v1758
        %v1793 = vpop.xlane.xlu0 %1792
        %1794 = vmax.xlane.f32.xlu0 %v1761
        %v1795 = vpop.xlane.xlu0 %1794
        %v1796 = vsub.f32 %v1702, %v1765
        %v1797 = vsub.f32 %v1705, %v1767
        %v1798 = vsub.f32 %v1710, %v1769
        %v1799 = vsub.f32 %v1713, %v1771
        %v1800 = vsub.f32 %v1718, %v1773
        %v1801 = vsub.f32 %v1721, %v1775
        %v1802 = vsub.f32 %v1726, %v1777
        %v1803 = vsub.f32 %v1729, %v1779
        %v1804 = vsub.f32 %v1734, %v1781
        %v1805 = vsub.f32 %v1737, %v1783
        %v1806 = vsub.f32 %v1742, %v1785
        %v1807 = vsub.f32 %v1745, %v1787
        %v1808 = vsub.f32 %v1750, %v1789
        %v1809 = vsub.f32 %v1753, %v1791
        %v1810 = vsub.f32 %v1758, %v1793
        %v1811 = vsub.f32 %v1761, %v1795
        %v1812 = vmul.f32 %v1796, 1.442695
        %v1813 = vpow.pop %v1812
        %v1814 = vmul.f32 %v1797, 1.442695
        %v1815 = vpow.pop %v1814
        %v1816 = vmul.f32 %v1798, 1.442695
        %v1817 = vpow.pop %v1816
        %v1818 = vmul.f32 %v1799, 1.442695
        %v1819 = vpow.pop %v1818
        %v1820 = vmul.f32 %v1800, 1.442695
        %v1821 = vpow.pop %v1820
        %v1822 = vmul.f32 %v1801, 1.442695
        %v1823 = vpow.pop %v1822
        %v1824 = vmul.f32 %v1802, 1.442695
        %v1825 = vpow.pop %v1824
        %v1826 = vmul.f32 %v1803, 1.442695
        %v1827 = vpow.pop %v1826
        %v1828 = vmul.f32 %v1804, 1.442695
        %v1829 = vpow.pop %v1828
        %v1830 = vmul.f32 %v1805, 1.442695
        %v1831 = vpow.pop %v1830
        %v1832 = vmul.f32 %v1806, 1.442695
        %v1833 = vpow.pop %v1832
        %v1834 = vmul.f32 %v1807, 1.442695
        %v1835 = vpow.pop %v1834
        %v1836 = vmul.f32 %v1808, 1.442695
        %v1837 = vpow.pop %v1836
        %v1838 = vmul.f32 %v1809, 1.442695
        %v1839 = vpow.pop %v1838
        %v1840 = vmul.f32 %v1810, 1.442695
        %v1841 = vpow.pop %v1840
        %v1842 = vmul.f32 %v1811, 1.442695
        %v1843 = vpow.pop %v1842
        %1844 = vadd.xlane.f32.xlu0 %v1813
        %v1845 = vpop.xlane.xlu0 %1844
        %1846 = vadd.xlane.f32.xlu0 %v1815
        %v1847 = vpop.xlane.xlu0 %1846
        %1848 = vadd.xlane.f32.xlu0 %v1817
        %v1849 = vpop.xlane.xlu0 %1848
        %1850 = vadd.xlane.f32.xlu0 %v1819
        %v1851 = vpop.xlane.xlu0 %1850
        %1852 = vadd.xlane.f32.xlu0 %v1821
        %v1853 = vpop.xlane.xlu0 %1852
        %1854 = vadd.xlane.f32.xlu0 %v1823
        %v1855 = vpop.xlane.xlu0 %1854
        %1856 = vadd.xlane.f32.xlu0 %v1825
        %v1857 = vpop.xlane.xlu0 %1856
        %1858 = vadd.xlane.f32.xlu0 %v1827
        %v1859 = vpop.xlane.xlu0 %1858
        %1860 = vadd.xlane.f32.xlu0 %v1829
        %v1861 = vpop.xlane.xlu0 %1860
        %1862 = vadd.xlane.f32.xlu0 %v1831
        %v1863 = vpop.xlane.xlu0 %1862
        %1864 = vadd.xlane.f32.xlu0 %v1833
        %v1865 = vpop.xlane.xlu0 %1864
        %1866 = vadd.xlane.f32.xlu0 %v1835
        %v1867 = vpop.xlane.xlu0 %1866
        %1868 = vadd.xlane.f32.xlu0 %v1837
        %v1869 = vpop.xlane.xlu0 %1868
        %1870 = vadd.xlane.f32.xlu0 %v1839
        %v1871 = vpop.xlane.xlu0 %1870
        %1872 = vadd.xlane.f32.xlu0 %v1841
        %v1873 = vpop.xlane.xlu0 %1872
        %1874 = vadd.xlane.f32.xlu0 %v1843
        %v1875 = vpop.xlane.xlu0 %1874
        %v1876 = vpack.c.bf16 %v1815, %v1813
        %v1877 = vpack.c.bf16 %v1819, %v1817
        %v1878 = vpack.c.bf16 %v1823, %v1821
        %v1879 = vpack.c.bf16 %v1827, %v1825
        %v1880 = vpack.c.bf16 %v1831, %v1829
        %v1881 = vpack.c.bf16 %v1835, %v1833
        %v1882 = vpack.c.bf16 %v1839, %v1837
        %v1883 = vpack.c.bf16 %v1843, %v1841
        %1892 = vrot.lane.b32.xlu0 %v1168, 64
        %v1893 = vpop.permute.xlu0 %1892
        %1894 = vrot.lane.b32.xlu0 %v1169, 64
        %v1895 = vpop.permute.xlu0 %1894
        %1896 = vrot.lane.b32.xlu0 %v1170, 64
        %v1897 = vpop.permute.xlu0 %1896
        %1898 = vrot.lane.b32.xlu0 %v1171, 64
        %v1899 = vpop.permute.xlu0 %1898
        %1900 = vrot.lane.b32.xlu0 %v1172, 64
        %v1901 = vpop.permute.xlu0 %1900
        %1902 = vrot.lane.b32.xlu0 %v1173, 64
        %v1903 = vpop.permute.xlu0 %1902
        %1904 = vrot.lane.b32.xlu0 %v1174, 64
        %v1905 = vpop.permute.xlu0 %1904
        %1906 = vrot.lane.b32.xlu0 %v1175, 64
        %v1907 = vpop.permute.xlu0 %1906
        %1916 = vmatprep.subr.bf16.mxu0 0
        %1917 = vmatpush1.bf16.msra.mxu0 %v1893
        %1918 = vmatprep.subr.bf16.mxu0 0
        %1919 = vmatpush1.bf16.msra.mxu0 %v1895
        %1920 = vmatprep.subr.bf16.mxu0 0
        %1921 = vmatpush1.bf16.msra.mxu0 %v1897
        %1922 = vmatprep.subr.bf16.mxu0 0
        %1923 = vmatpush1.bf16.msra.mxu0 %v1899
        %1924 = vmatprep.subr.bf16.mxu0 0
        %1925 = vmatpush1.bf16.msra.mxu0 %v1901
        %1926 = vmatprep.subr.bf16.mxu0 0
        %1927 = vmatpush1.bf16.msra.mxu0 %v1903
        %1928 = vmatprep.subr.bf16.mxu0 0
        %1929 = vmatpush1.bf16.msra.mxu0 %v1905
        %1930 = vmatprep.subr.bf16.mxu0 0
        %1931 = vmatpush1.bf16.msra.mxu0 %v1907
        %1932 = vmatprep.subr.bf16.mxu0 0
        %1933 = vmatpush1.bf16.msra.mxu0 0
        %1934 = vmatprep.subr.bf16.mxu0 0
        %1935 = vmatpush1.bf16.msra.mxu0 0
        %1936 = vmatprep.subr.bf16.mxu0 0
        %1937 = vmatpush1.bf16.msra.mxu0 0
        %1938 = vmatprep.subr.bf16.mxu0 0
        %1939 = vmatpush1.bf16.msra.mxu0 0
        %1940 = vmatprep.subr.bf16.mxu0 0
        %1941 = vmatpush1.bf16.msra.mxu0 0
        %1942 = vmatprep.subr.bf16.mxu0 0
        %1943 = vmatpush1.bf16.msra.mxu0 0
        %1944 = vmatprep.subr.bf16.mxu0 0
        %1945 = vmatpush1.bf16.msra.mxu0 0
        %1946 = vmatprep.subr.bf16.mxu0 0
        %1947 = vmatpush1.bf16.msra.mxu0 0
        %1948 = vmatprep.mubr.bf16.mxu0 0
        %1949 = vmatmul.mubr.bf16.gmra.mrb[0].mxu0 %v1876
        %v1950 = vpop.f32.mrb[0].mxu0
        %v1951 = vadd.f32 0.0, %v1950
        %v1952 = vpop.f32.mrb[0].mxu0
        %v1953 = vpop.f32.mrb[0].mxu0
        %v1954 = vadd.f32 0.0, %v1953
        %v1955 = vpop.f32.mrb[0].mxu0
        %1956 = vmatprep.mubr.bf16.mxu0 0
        %1957 = vmatmul.mubr.bf16.gmra.mrb[0].mxu0 %v1877
        %v1958 = vpop.f32.mrb[0].mxu0
        %v1959 = vadd.f32 0.0, %v1958
        %v1960 = vpop.f32.mrb[0].mxu0
        %v1961 = vpop.f32.mrb[0].mxu0
        %v1962 = vadd.f32 0.0, %v1961
        %v1963 = vpop.f32.mrb[0].mxu0
        %1964 = vmatprep.mubr.bf16.mxu0 0
        %1965 = vmatmul.mubr.bf16.gmra.mrb[0].mxu0 %v1878
        %v1966 = vpop.f32.mrb[0].mxu0
        %v1967 = vadd.f32 0.0, %v1966
        %v1968 = vpop.f32.mrb[0].mxu0
        %v1969 = vpop.f32.mrb[0].mxu0
        %v1970 = vadd.f32 0.0, %v1969
        %v1971 = vpop.f32.mrb[0].mxu0
        %1972 = vmatprep.mubr.bf16.mxu0 0
        %1973 = vmatmul.mubr.bf16.gmra.mrb[0].mxu0 %v1879
        %v1974 = vpop.f32.mrb[0].mxu0
        %v1975 = vadd.f32 0.0, %v1974
        %v1976 = vpop.f32.mrb[0].mxu0
        %v1977 = vpop.f32.mrb[0].mxu0
        %v1978 = vadd.f32 0.0, %v1977
        %v1979 = vpop.f32.mrb[0].mxu0
        %1980 = vmatprep.mubr.bf16.mxu0 0
        %1981 = vmatmul.mubr.bf16.gmra.mrb[0].mxu0 %v1880
        %v1982 = vpop.f32.mrb[0].mxu0
        %v1983 = vadd.f32 0.0, %v1982
        %v1984 = vpop.f32.mrb[0].mxu0
        %v1985 = vpop.f32.mrb[0].mxu0
        %v1986 = vadd.f32 0.0, %v1985
        %v1987 = vpop.f32.mrb[0].mxu0
        %1988 = vmatprep.mubr.bf16.mxu0 0
        %1989 = vmatmul.mubr.bf16.gmra.mrb[0].mxu0 %v1881
        %v1990 = vpop.f32.mrb[0].mxu0
        %v1991 = vadd.f32 0.0, %v1990
        %v1992 = vpop.f32.mrb[0].mxu0
        %v1993 = vpop.f32.mrb[0].mxu0
        %v1994 = vadd.f32 0.0, %v1993
        %v1995 = vpop.f32.mrb[0].mxu0
        %1996 = vmatprep.mubr.bf16.mxu0 0
        %1997 = vmatmul.mubr.bf16.gmra.mrb[0].mxu0 %v1882
        %v1998 = vpop.f32.mrb[0].mxu0
        %v1999 = vadd.f32 0.0, %v1998
        %v2000 = vpop.f32.mrb[0].mxu0
        %v2001 = vpop.f32.mrb[0].mxu0
        %v2002 = vadd.f32 0.0, %v2001
        %v2003 = vpop.f32.mrb[0].mxu0
        %2004 = vmatprep.mubr.bf16.mxu0 0
        %2005 = vmatmul.mubr.bf16.gmra.mrb[0].mxu0 %v1883
        %v2006 = vpop.f32.mrb[0].mxu0
        %v2007 = vadd.f32 0.0, %v2006
        %v2008 = vpop.f32.mrb[0].mxu0
        %v2009 = vpop.f32.mrb[0].mxu0
        %v2010 = vadd.f32 0.0, %v2009
        %v2011 = vpop.f32.mrb[0].mxu0
        %2012 = vdwg.mxu0
        %v2013 = vrcp.pop %v1845
        %v2014 = vrcp.pop %v1847
        %v2015 = vrcp.pop %v1849
        %v2016 = vrcp.pop %v1851
        %v2017 = vrcp.pop %v1853
        %v2018 = vrcp.pop %v1855
        %v2019 = vrcp.pop %v1857
        %v2020 = vrcp.pop %v1859
        %v2021 = vrcp.pop %v1861
        %v2022 = vrcp.pop %v1863
        %v2023 = vrcp.pop %v1865
        %v2024 = vrcp.pop %v1867
        %v2025 = vrcp.pop %v1869
        %v2026 = vrcp.pop %v1871
        %v2027 = vrcp.pop %v1873
        %v2028 = vrcp.pop %v1875
        %v2029 = vmul.f32 %v1951, %v2013
        %v2030 = vmul.f32 %v1954, %v2014
        %v2031 = vmul.f32 %v1959, %v2015
        %v2032 = vmul.f32 %v1962, %v2016
        %v2033 = vmul.f32 %v1967, %v2017
        %v2034 = vmul.f32 %v1970, %v2018
        %v2035 = vmul.f32 %v1975, %v2019
        %v2036 = vmul.f32 %v1978, %v2020
        %v2037 = vmul.f32 %v1983, %v2021
        %v2038 = vmul.f32 %v1986, %v2022
        %v2039 = vmul.f32 %v1991, %v2023
        %v2040 = vmul.f32 %v1994, %v2024
        %v2041 = vmul.f32 %v1999, %v2025
        %v2042 = vmul.f32 %v2002, %v2026
        %v2043 = vmul.f32 %v2007, %v2027
        %v2044 = vmul.f32 %v2010, %v2028
        %2061 = vrot.lane.b32.xlu0 %v2029, 64
        %v2062 = vpop.permute.xlu0 %2061
        %2063 = vrot.lane.b32.xlu0 %v2030, 64
        %v2064 = vpop.permute.xlu0 %2063
        %2065 = vrot.lane.b32.xlu0 %v2031, 64
        %v2066 = vpop.permute.xlu0 %2065
        %2067 = vrot.lane.b32.xlu0 %v2032, 64
        %v2068 = vpop.permute.xlu0 %2067
        %2069 = vrot.lane.b32.xlu0 %v2033, 64
        %v2070 = vpop.permute.xlu0 %2069
        %2071 = vrot.lane.b32.xlu0 %v2034, 64
        %v2072 = vpop.permute.xlu0 %2071
        %2073 = vrot.lane.b32.xlu0 %v2035, 64
        %v2074 = vpop.permute.xlu0 %2073
        %2075 = vrot.lane.b32.xlu0 %v2036, 64
        %v2076 = vpop.permute.xlu0 %2075
        %2077 = vrot.lane.b32.xlu0 %v2037, 64
        %v2078 = vpop.permute.xlu0 %2077
        %2079 = vrot.lane.b32.xlu0 %v2038, 64
        %v2080 = vpop.permute.xlu0 %2079
        %2081 = vrot.lane.b32.xlu0 %v2039, 64
        %v2082 = vpop.permute.xlu0 %2081
        %2083 = vrot.lane.b32.xlu0 %v2040, 64
        %v2084 = vpop.permute.xlu0 %2083
        %2085 = vrot.lane.b32.xlu0 %v2041, 64
        %v2086 = vpop.permute.xlu0 %2085
        %2087 = vrot.lane.b32.xlu0 %v2042, 64
        %v2088 = vpop.permute.xlu0 %2087
        %2089 = vrot.lane.b32.xlu0 %v2043, 64
        %v2090 = vpop.permute.xlu0 %2089
        %2091 = vrot.lane.b32.xlu0 %v2044, 64
        %v2092 = vpop.permute.xlu0 %2091
        %v2109 = vsel %vm1176, %v1555, %v2062
        %v2110 = vsel %vm1176, %v1556, %v2064
        %v2111 = vsel %vm1176, %v1557, %v2066
        %v2112 = vsel %vm1176, %v1558, %v2068
        %v2113 = vsel %vm1176, %v1559, %v2070
        %v2114 = vsel %vm1176, %v1560, %v2072
        %v2115 = vsel %vm1176, %v1561, %v2074
        %v2116 = vsel %vm1176, %v1562, %v2076
        %v2117 = vsel %vm1176, %v1563, %v2078
        %v2118 = vsel %vm1176, %v1564, %v2080
        %v2119 = vsel %vm1176, %v1565, %v2082
        %v2120 = vsel %vm1176, %v1566, %v2084
        %v2121 = vsel %vm1176, %v1567, %v2086
        %v2122 = vsel %vm1176, %v1568, %v2088
        %v2123 = vsel %vm1176, %v1569, %v2090
        %v2124 = vsel %vm1176, %v1570, %v2092
        %v2125 = vpack.c.bf16 %v2110, %v2109
        %v2126 = vpack.c.bf16 %v2112, %v2111
        %v2127 = vpack.c.bf16 %v2114, %v2113
        %v2128 = vpack.c.bf16 %v2116, %v2115
        %v2129 = vpack.c.bf16 %v2118, %v2117
        %v2130 = vpack.c.bf16 %v2120, %v2119
        %v2131 = vpack.c.bf16 %v2122, %v2121
        %v2132 = vpack.c.bf16 %v2124, %v2123
        %v2133 = vld [vmem:[#allocation7] sm:$0xf]
        %v2134 = vld [vmem:[#allocation7 + $0x4] sm:$0xf]
        %v2135 = vld [vmem:[#allocation7 + $0x8] sm:$0xf]
        %v2136 = vld [vmem:[#allocation7 + $0xc] sm:$0xf]
        %v2137 = vld [vmem:[#allocation7 + $0x10] sm:$0xf]
        %v2138 = vld [vmem:[#allocation7 + $0x14] sm:$0xf]
        %v2139 = vld [vmem:[#allocation7 + $0x18] sm:$0xf]
        %v2140 = vld [vmem:[#allocation7 + $0x1c] sm:$0xf]
        %v2141 = vld [vmem:[#allocation7 + $0x20] sm:$0xf]
        %v2142 = vld [vmem:[#allocation7 + $0x24] sm:$0xf]
        %v2143 = vld [vmem:[#allocation7 + $0x28] sm:$0xf]
        %v2144 = vld [vmem:[#allocation7 + $0x2c] sm:$0xf]
        %v2145 = vld [vmem:[#allocation7 + $0x30] sm:$0xf]
        %v2146 = vld [vmem:[#allocation7 + $0x34] sm:$0xf]
        %v2147 = vld [vmem:[#allocation7 + $0x38] sm:$0xf]
        %v2148 = vld [vmem:[#allocation7 + $0x3c] sm:$0xf]
        %v2149 = vld [vmem:[%s6] sm:$0x1]
        %v2151 = vlaneseq
        %v2152 = vshrl.u32 %v2151, 7
        %v2153 = vsub.s32 0, %v2152
        %v2154 = vrot.slane %v2149, %v2153
        %v2172 = vunpack.c.l.b16 %v2133
        %v2173 = vunpack.c.l.b16 %v2134
        %v2174 = vunpack.c.l.b16 %v2135
        %v2175 = vunpack.c.l.b16 %v2136
        %v2176 = vunpack.c.l.b16 %v2137
        %v2177 = vunpack.c.l.b16 %v2138
        %v2178 = vunpack.c.l.b16 %v2139
        %v2179 = vunpack.c.l.b16 %v2140
        %v2180 = vunpack.c.l.b16 %v2141
        %v2181 = vunpack.c.l.b16 %v2142
        %v2182 = vunpack.c.l.b16 %v2143
        %v2183 = vunpack.c.l.b16 %v2144
        %v2184 = vunpack.c.l.b16 %v2145
        %v2185 = vunpack.c.l.b16 %v2146
        %v2186 = vunpack.c.l.b16 %v2147
        %v2187 = vunpack.c.l.b16 %v2148
        %v2188 = vpack.c.b16 %v2173, %v2172
        %v2189 = vpack.c.b16 %v2175, %v2174
        %v2190 = vpack.c.b16 %v2177, %v2176
        %v2191 = vpack.c.b16 %v2179, %v2178
        %v2192 = vpack.c.b16 %v2181, %v2180
        %v2193 = vpack.c.b16 %v2183, %v2182
        %v2194 = vpack.c.b16 %v2185, %v2184
        %v2195 = vpack.c.b16 %v2187, %v2186
        %2204 = vmatprep.subr.bf16.mxu0 0
        %2205 = vmatpush1.bf16.msra.mxu0 %v2188
        %2206 = vmatprep.subr.bf16.mxu0 0
        %2207 = vmatpush1.bf16.msra.mxu0 %v2189
        %2208 = vmatprep.subr.bf16.mxu0 0
        %2209 = vmatpush1.bf16.msra.mxu0 %v2190
        %2210 = vmatprep.subr.bf16.mxu0 0
        %2211 = vmatpush1.bf16.msra.mxu0 %v2191
        %2212 = vmatprep.subr.bf16.mxu0 0
        %2213 = vmatpush1.bf16.msra.mxu0 %v2192
        %2214 = vmatprep.subr.bf16.mxu0 0
        %2215 = vmatpush1.bf16.msra.mxu0 %v2193
        %2216 = vmatprep.subr.bf16.mxu0 0
        %2217 = vmatpush1.bf16.msra.mxu0 %v2194
        %2218 = vmatprep.subr.bf16.mxu0 0
        %2219 = vmatpush1.bf16.msra.mxu0 %v2195
        %2220 = vmatprep.subr.bf16.mxu0 0
        %2221 = vmatpush1.bf16.msra.mxu0 0
        %2222 = vmatprep.subr.bf16.mxu0 0
        %2223 = vmatpush1.bf16.msra.mxu0 0
        %2224 = vmatprep.subr.bf16.mxu0 0
        %2225 = vmatpush1.bf16.msra.mxu0 0
        %2226 = vmatprep.subr.bf16.mxu0 0
        %2227 = vmatpush1.bf16.msra.mxu0 0
        %2228 = vmatprep.subr.bf16.mxu0 0
        %2229 = vmatpush1.bf16.msra.mxu0 0
        %2230 = vmatprep.subr.bf16.mxu0 0
        %2231 = vmatpush1.bf16.msra.mxu0 0
        %2232 = vmatprep.subr.bf16.mxu0 0
        %2233 = vmatpush1.bf16.msra.mxu0 0
        %2234 = vmatprep.subr.bf16.mxu0 0
        %2235 = vmatpush1.bf16.msra.mxu0 0
        %2236 = vmatprep.mubr.bf16.mxu0 0
        %2237 = vmatmul.mubr.bf16.gmra.mrb[0].mxu0 %v2125
        %v2238 = vpop.f32.mrb[0].mxu0
        %v2239 = vadd.f32 %v2154, %v2238
        %v2240 = vpop.f32.mrb[0].mxu0
        %v2241 = vpop.f32.mrb[0].mxu0
        %v2242 = vadd.f32 %v2154, %v2241
        %v2243 = vpop.f32.mrb[0].mxu0
        %2244 = vmatprep.mubr.bf16.mxu0 0
        %2245 = vmatmul.mubr.bf16.gmra.mrb[0].mxu0 %v2126
        %v2246 = vpop.f32.mrb[0].mxu0
        %v2247 = vadd.f32 %v2154, %v2246
        %v2248 = vpop.f32.mrb[0].mxu0
        %v2249 = vpop.f32.mrb[0].mxu0
        %v2250 = vadd.f32 %v2154, %v2249
        %v2251 = vpop.f32.mrb[0].mxu0
        %2252 = vmatprep.mubr.bf16.mxu0 0
        %2253 = vmatmul.mubr.bf16.gmra.mrb[0].mxu0 %v2127
        %v2254 = vpop.f32.mrb[0].mxu0
        %v2255 = vadd.f32 %v2154, %v2254
        %v2256 = vpop.f32.mrb[0].mxu0
        %v2257 = vpop.f32.mrb[0].mxu0
        %v2258 = vadd.f32 %v2154, %v2257
        %v2259 = vpop.f32.mrb[0].mxu0
        %2260 = vmatprep.mubr.bf16.mxu0 0
        %2261 = vmatmul.mubr.bf16.gmra.mrb[0].mxu0 %v2128
        %v2262 = vpop.f32.mrb[0].mxu0
        %v2263 = vadd.f32 %v2154, %v2262
        %v2264 = vpop.f32.mrb[0].mxu0
        %v2265 = vpop.f32.mrb[0].mxu0
        %v2266 = vadd.f32 %v2154, %v2265
        %v2267 = vpop.f32.mrb[0].mxu0
        %2268 = vmatprep.mubr.bf16.mxu0 0
        %2269 = vmatmul.mubr.bf16.gmra.mrb[0].mxu0 %v2129
        %v2270 = vpop.f32.mrb[0].mxu0
        %v2271 = vadd.f32 %v2154, %v2270
        %v2272 = vpop.f32.mrb[0].mxu0
        %v2273 = vpop.f32.mrb[0].mxu0
        %v2274 = vadd.f32 %v2154, %v2273
        %v2275 = vpop.f32.mrb[0].mxu0
        %2276 = vmatprep.mubr.bf16.mxu0 0
        %2277 = vmatmul.mubr.bf16.gmra.mrb[0].mxu0 %v2130
        %v2278 = vpop.f32.mrb[0].mxu0
        %v2279 = vadd.f32 %v2154, %v2278
        %v2280 = vpop.f32.mrb[0].mxu0
        %v2281 = vpop.f32.mrb[0].mxu0
        %v2282 = vadd.f32 %v2154, %v2281
        %v2283 = vpop.f32.mrb[0].mxu0
        %2284 = vmatprep.mubr.bf16.mxu0 0
        %2285 = vmatmul.mubr.bf16.gmra.mrb[0].mxu0 %v2131
        %v2286 = vpop.f32.mrb[0].mxu0
        %v2287 = vadd.f32 %v2154, %v2286
        %v2288 = vpop.f32.mrb[0].mxu0
        %v2289 = vpop.f32.mrb[0].mxu0
        %v2290 = vadd.f32 %v2154, %v2289
        %v2291 = vpop.f32.mrb[0].mxu0
        %2292 = vmatprep.mubr.bf16.mxu0 0
        %2293 = vmatmul.mubr.bf16.gmra.mrb[0].mxu0 %v2132
        %v2294 = vpop.f32.mrb[0].mxu0
        %v2295 = vadd.f32 %v2154, %v2294
        %v2296 = vpop.f32.mrb[0].mxu0
        %v2297 = vpop.f32.mrb[0].mxu0
        %v2298 = vadd.f32 %v2154, %v2297
        %v2299 = vpop.f32.mrb[0].mxu0
        %2300 = vdwg.mxu0
        %v2301 = vadd.f32 %v518, %v2239
        %v2302 = vadd.f32 %v519, %v2242
        %v2303 = vadd.f32 %v520, %v2247
        %v2304 = vadd.f32 %v521, %v2250
        %v2305 = vadd.f32 %v522, %v2255
        %v2306 = vadd.f32 %v523, %v2258
        %v2307 = vadd.f32 %v524, %v2263
        %v2308 = vadd.f32 %v525, %v2266
        %v2309 = vadd.f32 %v526, %v2271
        %v2310 = vadd.f32 %v527, %v2274
        %v2311 = vadd.f32 %v528, %v2279
        %v2312 = vadd.f32 %v529, %v2282
        %v2313 = vadd.f32 %v530, %v2287
        %v2314 = vadd.f32 %v531, %v2290
        %v2315 = vadd.f32 %v532, %v2295
        %v2316 = vadd.f32 %v533, %v2298
        %2317 = vadd.xlane.f32.xlu0 %v2301
        %v2318 = vpop.xlane.xlu0 %2317
        %2319 = vadd.xlane.f32.xlu0 %v2302
        %v2320 = vpop.xlane.xlu0 %2319
        %2321 = vadd.xlane.f32.xlu0 %v2303
        %v2322 = vpop.xlane.xlu0 %2321
        %2323 = vadd.xlane.f32.xlu0 %v2304
        %v2324 = vpop.xlane.xlu0 %2323
        %2325 = vadd.xlane.f32.xlu0 %v2305
        %v2326 = vpop.xlane.xlu0 %2325
        %2327 = vadd.xlane.f32.xlu0 %v2306
        %v2328 = vpop.xlane.xlu0 %2327
        %2329 = vadd.xlane.f32.xlu0 %v2307
        %v2330 = vpop.xlane.xlu0 %2329
        %2331 = vadd.xlane.f32.xlu0 %v2308
        %v2332 = vpop.xlane.xlu0 %2331
        %2333 = vadd.xlane.f32.xlu0 %v2309
        %v2334 = vpop.xlane.xlu0 %2333
        %2335 = vadd.xlane.f32.xlu0 %v2310
        %v2336 = vpop.xlane.xlu0 %2335
        %2337 = vadd.xlane.f32.xlu0 %v2311
        %v2338 = vpop.xlane.xlu0 %2337
        %2339 = vadd.xlane.f32.xlu0 %v2312
        %v2340 = vpop.xlane.xlu0 %2339
        %2341 = vadd.xlane.f32.xlu0 %v2313
        %v2342 = vpop.xlane.xlu0 %2341
        %2343 = vadd.xlane.f32.xlu0 %v2314
        %v2344 = vpop.xlane.xlu0 %2343
        %2345 = vadd.xlane.f32.xlu0 %v2315
        %v2346 = vpop.xlane.xlu0 %2345
        %2347 = vadd.xlane.f32.xlu0 %v2316
        %v2348 = vpop.xlane.xlu0 %2347
        %v2349 = vmul.f32 %v2318, %v566
        %v2350 = vmul.f32 %v2320, %v566
        %v2351 = vmul.f32 %v2322, %v566
        %v2352 = vmul.f32 %v2324, %v566
        %v2353 = vmul.f32 %v2326, %v566
        %v2354 = vmul.f32 %v2328, %v566
        %v2355 = vmul.f32 %v2330, %v566
        %v2356 = vmul.f32 %v2332, %v566
        %v2357 = vmul.f32 %v2334, %v566
        %v2358 = vmul.f32 %v2336, %v566
        %v2359 = vmul.f32 %v2338, %v566
        %v2360 = vmul.f32 %v2340, %v566
        %v2361 = vmul.f32 %v2342, %v566
        %v2362 = vmul.f32 %v2344, %v566
        %v2363 = vmul.f32 %v2346, %v566
        %v2364 = vmul.f32 %v2348, %v566
        %v2365 = vsub.f32 %v2301, %v2349
        %v2366 = vsub.f32 %v2302, %v2350
        %v2367 = vsub.f32 %v2303, %v2351
        %v2368 = vsub.f32 %v2304, %v2352
        %v2369 = vsub.f32 %v2305, %v2353
        %v2370 = vsub.f32 %v2306, %v2354
        %v2371 = vsub.f32 %v2307, %v2355
        %v2372 = vsub.f32 %v2308, %v2356
        %v2373 = vsub.f32 %v2309, %v2357
        %v2374 = vsub.f32 %v2310, %v2358
        %v2375 = vsub.f32 %v2311, %v2359
        %v2376 = vsub.f32 %v2312, %v2360
        %v2377 = vsub.f32 %v2313, %v2361
        %v2378 = vsub.f32 %v2314, %v2362
        %v2379 = vsub.f32 %v2315, %v2363
        %v2380 = vsub.f32 %v2316, %v2364
        %v2381 = vmul.f32 %v2365, %v2365
        %v2382 = vmul.f32 %v2366, %v2366
        %v2383 = vmul.f32 %v2367, %v2367
        %v2384 = vmul.f32 %v2368, %v2368
        %v2385 = vmul.f32 %v2369, %v2369
        %v2386 = vmul.f32 %v2370, %v2370
        %v2387 = vmul.f32 %v2371, %v2371
        %v2388 = vmul.f32 %v2372, %v2372
        %v2389 = vmul.f32 %v2373, %v2373
        %v2390 = vmul.f32 %v2374, %v2374
        %v2391 = vmul.f32 %v2375, %v2375
        %v2392 = vmul.f32 %v2376, %v2376
        %v2393 = vmul.f32 %v2377, %v2377
        %v2394 = vmul.f32 %v2378, %v2378
        %v2395 = vmul.f32 %v2379, %v2379
        %v2396 = vmul.f32 %v2380, %v2380
        %2397 = vadd.xlane.f32.xlu0 %v2381
        %v2398 = vpop.xlane.xlu0 %2397
        %2399 = vadd.xlane.f32.xlu0 %v2382
        %v2400 = vpop.xlane.xlu0 %2399
        %2401 = vadd.xlane.f32.xlu0 %v2383
        %v2402 = vpop.xlane.xlu0 %2401
        %2403 = vadd.xlane.f32.xlu0 %v2384
        %v2404 = vpop.xlane.xlu0 %2403
        %2405 = vadd.xlane.f32.xlu0 %v2385
        %v2406 = vpop.xlane.xlu0 %2405
        %2407 = vadd.xlane.f32.xlu0 %v2386
        %v2408 = vpop.xlane.xlu0 %2407
        %2409 = vadd.xlane.f32.xlu0 %v2387
        %v2410 = vpop.xlane.xlu0 %2409
        %2411 = vadd.xlane.f32.xlu0 %v2388
        %v2412 = vpop.xlane.xlu0 %2411
        %2413 = vadd.xlane.f32.xlu0 %v2389
        %v2414 = vpop.xlane.xlu0 %2413
        %2415 = vadd.xlane.f32.xlu0 %v2390
        %v2416 = vpop.xlane.xlu0 %2415
        %2417 = vadd.xlane.f32.xlu0 %v2391
        %v2418 = vpop.xlane.xlu0 %2417
        %2419 = vadd.xlane.f32.xlu0 %v2392
        %v2420 = vpop.xlane.xlu0 %2419
        %2421 = vadd.xlane.f32.xlu0 %v2393
        %v2422 = vpop.xlane.xlu0 %2421
        %2423 = vadd.xlane.f32.xlu0 %v2394
        %v2424 = vpop.xlane.xlu0 %2423
        %2425 = vadd.xlane.f32.xlu0 %v2395
        %v2426 = vpop.xlane.xlu0 %2425
        %2427 = vadd.xlane.f32.xlu0 %v2396
        %v2428 = vpop.xlane.xlu0 %2427
        %v2429 = vmul.f32 %v2398, %v566
        %v2430 = vmul.f32 %v2400, %v566
        %v2431 = vmul.f32 %v2402, %v566
        %v2432 = vmul.f32 %v2404, %v566
        %v2433 = vmul.f32 %v2406, %v566
        %v2434 = vmul.f32 %v2408, %v566
        %v2435 = vmul.f32 %v2410, %v566
        %v2436 = vmul.f32 %v2412, %v566
        %v2437 = vmul.f32 %v2414, %v566
        %v2438 = vmul.f32 %v2416, %v566
        %v2439 = vmul.f32 %v2418, %v566
        %v2440 = vmul.f32 %v2420, %v566
        %v2441 = vmul.f32 %v2422, %v566
        %v2442 = vmul.f32 %v2424, %v566
        %v2443 = vmul.f32 %v2426, %v566
        %v2444 = vmul.f32 %v2428, %v566
        %v2445 = vadd.f32 %v2429, 1e-05
        %v2446 = vadd.f32 %v2430, 1e-05
        %v2447 = vadd.f32 %v2431, 1e-05
        %v2448 = vadd.f32 %v2432, 1e-05
        %v2449 = vadd.f32 %v2433, 1e-05
        %v2450 = vadd.f32 %v2434, 1e-05
        %v2451 = vadd.f32 %v2435, 1e-05
        %v2452 = vadd.f32 %v2436, 1e-05
        %v2453 = vadd.f32 %v2437, 1e-05
        %v2454 = vadd.f32 %v2438, 1e-05
        %v2455 = vadd.f32 %v2439, 1e-05
        %v2456 = vadd.f32 %v2440, 1e-05
        %v2457 = vadd.f32 %v2441, 1e-05
        %v2458 = vadd.f32 %v2442, 1e-05
        %v2459 = vadd.f32 %v2443, 1e-05
        %v2460 = vadd.f32 %v2444, 1e-05
        %v2461 = vrsqrt.pop %v2445
        %v2462 = vrsqrt.pop %v2446
        %v2463 = vrsqrt.pop %v2447
        %v2464 = vrsqrt.pop %v2448
        %v2465 = vrsqrt.pop %v2449
        %v2466 = vrsqrt.pop %v2450
        %v2467 = vrsqrt.pop %v2451
        %v2468 = vrsqrt.pop %v2452
        %v2469 = vrsqrt.pop %v2453
        %v2470 = vrsqrt.pop %v2454
        %v2471 = vrsqrt.pop %v2455
        %v2472 = vrsqrt.pop %v2456
        %v2473 = vrsqrt.pop %v2457
        %v2474 = vrsqrt.pop %v2458
        %v2475 = vrsqrt.pop %v2459
        %v2476 = vrsqrt.pop %v2460
        %v2477 = vmul.f32 %v2365, %v2461
        %v2478 = vmul.f32 %v2366, %v2462
        %v2479 = vmul.f32 %v2367, %v2463
        %v2480 = vmul.f32 %v2368, %v2464
        %v2481 = vmul.f32 %v2369, %v2465
        %v2482 = vmul.f32 %v2370, %v2466
        %v2483 = vmul.f32 %v2371, %v2467
        %v2484 = vmul.f32 %v2372, %v2468
        %v2485 = vmul.f32 %v2373, %v2469
        %v2486 = vmul.f32 %v2374, %v2470
        %v2487 = vmul.f32 %v2375, %v2471
        %v2488 = vmul.f32 %v2376, %v2472
        %v2489 = vmul.f32 %v2377, %v2473
        %v2490 = vmul.f32 %v2378, %v2474
        %v2491 = vmul.f32 %v2379, %v2475
        %v2492 = vmul.f32 %v2380, %v2476
        %v2493 = vld [vmem:[%s7] sm:$0x1]
        %v2495 = vlaneseq
        %v2496 = vshrl.u32 %v2495, 7
        %v2497 = vsub.s32 0, %v2496
        %v2498 = vrot.slane %v2493, %v2497
        %v2500 = vmul.f32 %v2477, %v2498
        %v2501 = vmul.f32 %v2478, %v2498
        %v2502 = vmul.f32 %v2479, %v2498
        %v2503 = vmul.f32 %v2480, %v2498
        %v2504 = vmul.f32 %v2481, %v2498
        %v2505 = vmul.f32 %v2482, %v2498
        %v2506 = vmul.f32 %v2483, %v2498
        %v2507 = vmul.f32 %v2484, %v2498
        %v2508 = vmul.f32 %v2485, %v2498
        %v2509 = vmul.f32 %v2486, %v2498
        %v2510 = vmul.f32 %v2487, %v2498
        %v2511 = vmul.f32 %v2488, %v2498
        %v2512 = vmul.f32 %v2489, %v2498
        %v2513 = vmul.f32 %v2490, %v2498
        %v2514 = vmul.f32 %v2491, %v2498
        %v2515 = vmul.f32 %v2492, %v2498
        %v2516 = vld [vmem:[%s8] sm:$0x1]
        %v2518 = vlaneseq
        %v2519 = vshrl.u32 %v2518, 7
        %v2520 = vsub.s32 0, %v2519
        %v2521 = vrot.slane %v2516, %v2520
        %v2523 = vadd.f32 %v2500, %v2521
        %v2524 = vadd.f32 %v2501, %v2521
        %v2525 = vadd.f32 %v2502, %v2521
        %v2526 = vadd.f32 %v2503, %v2521
        %v2527 = vadd.f32 %v2504, %v2521
        %v2528 = vadd.f32 %v2505, %v2521
        %v2529 = vadd.f32 %v2506, %v2521
        %v2530 = vadd.f32 %v2507, %v2521
        %v2531 = vadd.f32 %v2508, %v2521
        %v2532 = vadd.f32 %v2509, %v2521
        %v2533 = vadd.f32 %v2510, %v2521
        %v2534 = vadd.f32 %v2511, %v2521
        %v2535 = vadd.f32 %v2512, %v2521
        %v2536 = vadd.f32 %v2513, %v2521
        %v2537 = vadd.f32 %v2514, %v2521
        %v2538 = vadd.f32 %v2515, %v2521
        %v2539 = vpack.c.bf16 %v2524, %v2523
        %v2540 = vpack.c.bf16 %v2526, %v2525
        %v2541 = vpack.c.bf16 %v2528, %v2527
        %v2542 = vpack.c.bf16 %v2530, %v2529
        %v2543 = vpack.c.bf16 %v2532, %v2531
        %v2544 = vpack.c.bf16 %v2534, %v2533
        %v2545 = vpack.c.bf16 %v2536, %v2535
        %v2546 = vpack.c.bf16 %v2538, %v2537
        %v2547 = vld [vmem:[#allocation8] sm:$0xff]
        %v2548 = vld [vmem:[#allocation8 + $0x8] sm:$0xff]
        %v2549 = vld [vmem:[#allocation8 + $0x10] sm:$0xff]
        %v2550 = vld [vmem:[#allocation8 + $0x18] sm:$0xff]
        %v2551 = vld [vmem:[#allocation8 + $0x20] sm:$0xff]
        %v2552 = vld [vmem:[#allocation8 + $0x28] sm:$0xff]
        %v2553 = vld [vmem:[#allocation8 + $0x30] sm:$0xff]
        %v2554 = vld [vmem:[#allocation8 + $0x38] sm:$0xff]
        %v2555 = vld [vmem:[#allocation8 + $0x40] sm:$0xff]
        %v2556 = vld [vmem:[#allocation8 + $0x48] sm:$0xff]
        %v2557 = vld [vmem:[#allocation8 + $0x50] sm:$0xff]
        %v2558 = vld [vmem:[#allocation8 + $0x58] sm:$0xff]
        %v2559 = vld [vmem:[#allocation8 + $0x60] sm:$0xff]
        %v2560 = vld [vmem:[#allocation8 + $0x68] sm:$0xff]
        %v2561 = vld [vmem:[#allocation8 + $0x70] sm:$0xff]
        %v2562 = vld [vmem:[#allocation8 + $0x78] sm:$0xff]
        %v2563 = vld [vmem:[%s10] sm:$0x3]
        %v2565 = vlaneseq
        %v2566 = vshrl.u32 %v2565, 7
        %v2567 = vsub.s32 0, %v2566
        %v2568 = vrot.slane %v2563, %v2567
        %v2569 = vlaneseq
        %v2570 = vshrl.u32 %v2569, 7
        %v2571 = vsub.s32 1, %v2570
        %v2572 = vrot.slane %v2563, %v2571
        %v2591 = vunpack.c.l.b16 %v2547
        %v2592 = vunpack.c.h.b16 %v2547
        %v2593 = vunpack.c.l.b16 %v2548
        %v2594 = vunpack.c.h.b16 %v2548
        %v2595 = vunpack.c.l.b16 %v2549
        %v2596 = vunpack.c.h.b16 %v2549
        %v2597 = vunpack.c.l.b16 %v2550
        %v2598 = vunpack.c.h.b16 %v2550
        %v2599 = vunpack.c.l.b16 %v2551
        %v2600 = vunpack.c.h.b16 %v2551
        %v2601 = vunpack.c.l.b16 %v2552
        %v2602 = vunpack.c.h.b16 %v2552
        %v2603 = vunpack.c.l.b16 %v2553
        %v2604 = vunpack.c.h.b16 %v2553
        %v2605 = vunpack.c.l.b16 %v2554
        %v2606 = vunpack.c.h.b16 %v2554
        %v2607 = vunpack.c.l.b16 %v2555
        %v2608 = vunpack.c.h.b16 %v2555
        %v2609 = vunpack.c.l.b16 %v2556
        %v2610 = vunpack.c.h.b16 %v2556
        %v2611 = vunpack.c.l.b16 %v2557
        %v2612 = vunpack.c.h.b16 %v2557
        %v2613 = vunpack.c.l.b16 %v2558
        %v2614 = vunpack.c.h.b16 %v2558
        %v2615 = vunpack.c.l.b16 %v2559
        %v2616 = vunpack.c.h.b16 %v2559
        %v2617 = vunpack.c.l.b16 %v2560
        %v2618 = vunpack.c.h.b16 %v2560
        %v2619 = vunpack.c.l.b16 %v2561
        %v2620 = vunpack.c.h.b16 %v2561
        %v2621 = vunpack.c.l.b16 %v2562
        %v2622 = vunpack.c.h.b16 %v2562
        %v2623 = vpack.c.b16 %v2593, %v2591
        %v2624 = vpack.c.b16 %v2594, %v2592
        %v2625 = vpack.c.b16 %v2597, %v2595
        %v2626 = vpack.c.b16 %v2598, %v2596
        %v2627 = vpack.c.b16 %v2601, %v2599
        %v2628 = vpack.c.b16 %v2602, %v2600
        %v2629 = vpack.c.b16 %v2605, %v2603
        %v2630 = vpack.c.b16 %v2606, %v2604
        %v2631 = vpack.c.b16 %v2609, %v2607
        %v2632 = vpack.c.b16 %v2610, %v2608
        %v2633 = vpack.c.b16 %v2613, %v2611
        %v2634 = vpack.c.b16 %v2614, %v2612
        %v2635 = vpack.c.b16 %v2617, %v2615
        %v2636 = vpack.c.b16 %v2618, %v2616
        %v2637 = vpack.c.b16 %v2621, %v2619
        %v2638 = vpack.c.b16 %v2622, %v2620
        %2655 = vmatprep.subr.bf16.mxu0 %v2624
        %2656 = vmatpush1.bf16.msra.mxu0 %v2623
        %2657 = vmatprep.subr.bf16.mxu0 %v2626
        %2658 = vmatpush1.bf16.msra.mxu0 %v2625
        %2659 = vmatprep.subr.bf16.mxu0 %v2628
        %2660 = vmatpush1.bf16.msra.mxu0 %v2627
        %2661 = vmatprep.subr.bf16.mxu0 %v2630
        %2662 = vmatpush1.bf16.msra.mxu0 %v2629
        %2663 = vmatprep.subr.bf16.mxu0 %v2632
        %2664 = vmatpush1.bf16.msra.mxu0 %v2631
        %2665 = vmatprep.subr.bf16.mxu0 %v2634
        %2666 = vmatpush1.bf16.msra.mxu0 %v2633
        %2667 = vmatprep.subr.bf16.mxu0 %v2636
        %2668 = vmatpush1.bf16.msra.mxu0 %v2635
        %2669 = vmatprep.subr.bf16.mxu0 %v2638
        %2670 = vmatpush1.bf16.msra.mxu0 %v2637
        %2671 = vmatprep.subr.bf16.mxu0 0
        %2672 = vmatpush1.bf16.msra.mxu0 0
        %2673 = vmatprep.subr.bf16.mxu0 0
        %2674 = vmatpush1.bf16.msra.mxu0 0
        %2675 = vmatprep.subr.bf16.mxu0 0
        %2676 = vmatpush1.bf16.msra.mxu0 0
        %2677 = vmatprep.subr.bf16.mxu0 0
        %2678 = vmatpush1.bf16.msra.mxu0 0
        %2679 = vmatprep.subr.bf16.mxu0 0
        %2680 = vmatpush1.bf16.msra.mxu0 0
        %2681 = vmatprep.subr.bf16.mxu0 0
        %2682 = vmatpush1.bf16.msra.mxu0 0
        %2683 = vmatprep.subr.bf16.mxu0 0
        %2684 = vmatpush1.bf16.msra.mxu0 0
        %2685 = vmatprep.subr.bf16.mxu0 0
        %2686 = vmatpush1.bf16.msra.mxu0 0
        %2687 = vmatprep.mubr.bf16.mxu0 0
        %2688 = vmatmul.mubr.bf16.gmra.mrb[0].mxu0 %v2539
        %v2689 = vpop.f32.mrb[0].mxu0
        %v2690 = vadd.f32 %v2568, %v2689
        %v2691 = vpop.f32.mrb[0].mxu0
        %v2692 = vadd.f32 %v2572, %v2691
        %v2693 = vpop.f32.mrb[0].mxu0
        %v2694 = vadd.f32 %v2568, %v2693
        %v2695 = vpop.f32.mrb[0].mxu0
        %v2696 = vadd.f32 %v2572, %v2695
        %2697 = vmatprep.mubr.bf16.mxu0 0
        %2698 = vmatmul.mubr.bf16.gmra.mrb[0].mxu0 %v2540
        %v2699 = vpop.f32.mrb[0].mxu0
        %v2700 = vadd.f32 %v2568, %v2699
        %v2701 = vpop.f32.mrb[0].mxu0
        %v2702 = vadd.f32 %v2572, %v2701
        %v2703 = vpop.f32.mrb[0].mxu0
        %v2704 = vadd.f32 %v2568, %v2703
        %v2705 = vpop.f32.mrb[0].mxu0
        %v2706 = vadd.f32 %v2572, %v2705
        %2707 = vmatprep.mubr.bf16.mxu0 0
        %2708 = vmatmul.mubr.bf16.gmra.mrb[0].mxu0 %v2541
        %v2709 = vpop.f32.mrb[0].mxu0
        %v2710 = vadd.f32 %v2568, %v2709
        %v2711 = vpop.f32.mrb[0].mxu0
        %v2712 = vadd.f32 %v2572, %v2711
        %v2713 = vpop.f32.mrb[0].mxu0
        %v2714 = vadd.f32 %v2568, %v2713
        %v2715 = vpop.f32.mrb[0].mxu0
        %v2716 = vadd.f32 %v2572, %v2715
        %2717 = vmatprep.mubr.bf16.mxu0 0
        %2718 = vmatmul.mubr.bf16.gmra.mrb[0].mxu0 %v2542
        %v2719 = vpop.f32.mrb[0].mxu0
        %v2720 = vadd.f32 %v2568, %v2719
        %v2721 = vpop.f32.mrb[0].mxu0
        %v2722 = vadd.f32 %v2572, %v2721
        %v2723 = vpop.f32.mrb[0].mxu0
        %v2724 = vadd.f32 %v2568, %v2723
        %v2725 = vpop.f32.mrb[0].mxu0
        %v2726 = vadd.f32 %v2572, %v2725
        %2727 = vmatprep.mubr.bf16.mxu0 0
        %2728 = vmatmul.mubr.bf16.gmra.mrb[0].mxu0 %v2543
        %v2729 = vpop.f32.mrb[0].mxu0
        %v2730 = vadd.f32 %v2568, %v2729
        %v2731 = vpop.f32.mrb[0].mxu0
        %v2732 = vadd.f32 %v2572, %v2731
        %v2733 = vpop.f32.mrb[0].mxu0
        %v2734 = vadd.f32 %v2568, %v2733
        %v2735 = vpop.f32.mrb[0].mxu0
        %v2736 = vadd.f32 %v2572, %v2735
        %2737 = vmatprep.mubr.bf16.mxu0 0
        %2738 = vmatmul.mubr.bf16.gmra.mrb[0].mxu0 %v2544
        %v2739 = vpop.f32.mrb[0].mxu0
        %v2740 = vadd.f32 %v2568, %v2739
        %v2741 = vpop.f32.mrb[0].mxu0
        %v2742 = vadd.f32 %v2572, %v2741
        %v2743 = vpop.f32.mrb[0].mxu0
        %v2744 = vadd.f32 %v2568, %v2743
        %v2745 = vpop.f32.mrb[0].mxu0
        %v2746 = vadd.f32 %v2572, %v2745
        %2747 = vmatprep.mubr.bf16.mxu0 0
        %2748 = vmatmul.mubr.bf16.gmra.mrb[0].mxu0 %v2545
        %v2749 = vpop.f32.mrb[0].mxu0
        %v2750 = vadd.f32 %v2568, %v2749
        %v2751 = vpop.f32.mrb[0].mxu0
        %v2752 = vadd.f32 %v2572, %v2751
        %v2753 = vpop.f32.mrb[0].mxu0
        %v2754 = vadd.f32 %v2568, %v2753
        %v2755 = vpop.f32.mrb[0].mxu0
        %v2756 = vadd.f32 %v2572, %v2755
        %2757 = vmatprep.mubr.bf16.mxu0 0
        %2758 = vmatmul.mubr.bf16.gmra.mrb[0].mxu0 %v2546
        %v2759 = vpop.f32.mrb[0].mxu0
        %v2760 = vadd.f32 %v2568, %v2759
        %v2761 = vpop.f32.mrb[0].mxu0
        %v2762 = vadd.f32 %v2572, %v2761
        %v2763 = vpop.f32.mrb[0].mxu0
        %v2764 = vadd.f32 %v2568, %v2763
        %v2765 = vpop.f32.mrb[0].mxu0
        %v2766 = vadd.f32 %v2572, %v2765
        %2767 = vdwg.mxu0
        %v2768 = vmul.f32 %v2690, 0.5
        %v2769 = vmul.f32 %v2692, 0.5
        %v2770 = vmul.f32 %v2694, 0.5
        %v2771 = vmul.f32 %v2696, 0.5
        %v2772 = vmul.f32 %v2700, 0.5
        %v2773 = vmul.f32 %v2702, 0.5
        %v2774 = vmul.f32 %v2704, 0.5
        %v2775 = vmul.f32 %v2706, 0.5
        %v2776 = vmul.f32 %v2710, 0.5
        %v2777 = vmul.f32 %v2712, 0.5
        %v2778 = vmul.f32 %v2714, 0.5
        %v2779 = vmul.f32 %v2716, 0.5
        %v2780 = vmul.f32 %v2720, 0.5
        %v2781 = vmul.f32 %v2722, 0.5
        %v2782 = vmul.f32 %v2724, 0.5
        %v2783 = vmul.f32 %v2726, 0.5
        %v2784 = vmul.f32 %v2730, 0.5
        %v2785 = vmul.f32 %v2732, 0.5
        %v2786 = vmul.f32 %v2734, 0.5
        %v2787 = vmul.f32 %v2736, 0.5
        %v2788 = vmul.f32 %v2740, 0.5
        %v2789 = vmul.f32 %v2742, 0.5
        %v2790 = vmul.f32 %v2744, 0.5
        %v2791 = vmul.f32 %v2746, 0.5
        %v2792 = vmul.f32 %v2750, 0.5
        %v2793 = vmul.f32 %v2752, 0.5
        %v2794 = vmul.f32 %v2754, 0.5
        %v2795 = vmul.f32 %v2756, 0.5
        %v2796 = vmul.f32 %v2760, 0.5
        %v2797 = vmul.f32 %v2762, 0.5
        %v2798 = vmul.f32 %v2764, 0.5
        %v2799 = vmul.f32 %v2766, 0.5
        %v2800 = vmul.f32 %v2690, %v2690
        %v2801 = vmul.f32 %v2692, %v2692
        %v2802 = vmul.f32 %v2694, %v2694
        %v2803 = vmul.f32 %v2696, %v2696
        %v2804 = vmul.f32 %v2700, %v2700
        %v2805 = vmul.f32 %v2702, %v2702
        %v2806 = vmul.f32 %v2704, %v2704
        %v2807 = vmul.f32 %v2706, %v2706
        %v2808 = vmul.f32 %v2710, %v2710
        %v2809 = vmul.f32 %v2712, %v2712
        %v2810 = vmul.f32 %v2714, %v2714
        %v2811 = vmul.f32 %v2716, %v2716
        %v2812 = vmul.f32 %v2720, %v2720
        %v2813 = vmul.f32 %v2722, %v2722
        %v2814 = vmul.f32 %v2724, %v2724
        %v2815 = vmul.f32 %v2726, %v2726
        %v2816 = vmul.f32 %v2730, %v2730
        %v2817 = vmul.f32 %v2732, %v2732
        %v2818 = vmul.f32 %v2734, %v2734
        %v2819 = vmul.f32 %v2736, %v2736
        %v2820 = vmul.f32 %v2740, %v2740
        %v2821 = vmul.f32 %v2742, %v2742
        %v2822 = vmul.f32 %v2744, %v2744
        %v2823 = vmul.f32 %v2746, %v2746
        %v2824 = vmul.f32 %v2750, %v2750
        %v2825 = vmul.f32 %v2752, %v2752
        %v2826 = vmul.f32 %v2754, %v2754
        %v2827 = vmul.f32 %v2756, %v2756
        %v2828 = vmul.f32 %v2760, %v2760
        %v2829 = vmul.f32 %v2762, %v2762
        %v2830 = vmul.f32 %v2764, %v2764
        %v2831 = vmul.f32 %v2766, %v2766
        %v2832 = vmul.f32 %v2800, %v2690
        %v2833 = vmul.f32 %v2801, %v2692
        %v2834 = vmul.f32 %v2802, %v2694
        %v2835 = vmul.f32 %v2803, %v2696
        %v2836 = vmul.f32 %v2804, %v2700
        %v2837 = vmul.f32 %v2805, %v2702
        %v2838 = vmul.f32 %v2806, %v2704
        %v2839 = vmul.f32 %v2807, %v2706
        %v2840 = vmul.f32 %v2808, %v2710
        %v2841 = vmul.f32 %v2809, %v2712
        %v2842 = vmul.f32 %v2810, %v2714
        %v2843 = vmul.f32 %v2811, %v2716
        %v2844 = vmul.f32 %v2812, %v2720
        %v2845 = vmul.f32 %v2813, %v2722
        %v2846 = vmul.f32 %v2814, %v2724
        %v2847 = vmul.f32 %v2815, %v2726
        %v2848 = vmul.f32 %v2816, %v2730
        %v2849 = vmul.f32 %v2817, %v2732
        %v2850 = vmul.f32 %v2818, %v2734
        %v2851 = vmul.f32 %v2819, %v2736
        %v2852 = vmul.f32 %v2820, %v2740
        %v2853 = vmul.f32 %v2821, %v2742
        %v2854 = vmul.f32 %v2822, %v2744
        %v2855 = vmul.f32 %v2823, %v2746
        %v2856 = vmul.f32 %v2824, %v2750
        %v2857 = vmul.f32 %v2825, %v2752
        %v2858 = vmul.f32 %v2826, %v2754
        %v2859 = vmul.f32 %v2827, %v2756
        %v2860 = vmul.f32 %v2828, %v2760
        %v2861 = vmul.f32 %v2829, %v2762
        %v2862 = vmul.f32 %v2830, %v2764
        %v2863 = vmul.f32 %v2831, %v2766
        %v2864 = vmul.f32 %v2832, 0.044715
        %v2865 = vmul.f32 %v2833, 0.044715
        %v2866 = vmul.f32 %v2834, 0.044715
        %v2867 = vmul.f32 %v2835, 0.044715
        %v2868 = vmul.f32 %v2836, 0.044715
        %v2869 = vmul.f32 %v2837, 0.044715
        %v2870 = vmul.f32 %v2838, 0.044715
        %v2871 = vmul.f32 %v2839, 0.044715
        %v2872 = vmul.f32 %v2840, 0.044715
        %v2873 = vmul.f32 %v2841, 0.044715
        %v2874 = vmul.f32 %v2842, 0.044715
        %v2875 = vmul.f32 %v2843, 0.044715
        %v2876 = vmul.f32 %v2844, 0.044715
        %v2877 = vmul.f32 %v2845, 0.044715
        %v2878 = vmul.f32 %v2846, 0.044715
        %v2879 = vmul.f32 %v2847, 0.044715
        %v2880 = vmul.f32 %v2848, 0.044715
        %v2881 = vmul.f32 %v2849, 0.044715
        %v2882 = vmul.f32 %v2850, 0.044715
        %v2883 = vmul.f32 %v2851, 0.044715
        %v2884 = vmul.f32 %v2852, 0.044715
        %v2885 = vmul.f32 %v2853, 0.044715
        %v2886 = vmul.f32 %v2854, 0.044715
        %v2887 = vmul.f32 %v2855, 0.044715
        %v2888 = vmul.f32 %v2856, 0.044715
        %v2889 = vmul.f32 %v2857, 0.044715
        %v2890 = vmul.f32 %v2858, 0.044715
        %v2891 = vmul.f32 %v2859, 0.044715
        %v2892 = vmul.f32 %v2860, 0.044715
        %v2893 = vmul.f32 %v2861, 0.044715
        %v2894 = vmul.f32 %v2862, 0.044715
        %v2895 = vmul.f32 %v2863, 0.044715
        %v2896 = vadd.f32 %v2690, %v2864
        %v2897 = vadd.f32 %v2692, %v2865
        %v2898 = vadd.f32 %v2694, %v2866
        %v2899 = vadd.f32 %v2696, %v2867
        %v2900 = vadd.f32 %v2700, %v2868
        %v2901 = vadd.f32 %v2702, %v2869
        %v2902 = vadd.f32 %v2704, %v2870
        %v2903 = vadd.f32 %v2706, %v2871
        %v2904 = vadd.f32 %v2710, %v2872
        %v2905 = vadd.f32 %v2712, %v2873
        %v2906 = vadd.f32 %v2714, %v2874
        %v2907 = vadd.f32 %v2716, %v2875
        %v2908 = vadd.f32 %v2720, %v2876
        %v2909 = vadd.f32 %v2722, %v2877
        %v2910 = vadd.f32 %v2724, %v2878
        %v2911 = vadd.f32 %v2726, %v2879
        %v2912 = vadd.f32 %v2730, %v2880
        %v2913 = vadd.f32 %v2732, %v2881
        %v2914 = vadd.f32 %v2734, %v2882
        %v2915 = vadd.f32 %v2736, %v2883
        %v2916 = vadd.f32 %v2740, %v2884
        %v2917 = vadd.f32 %v2742, %v2885
        %v2918 = vadd.f32 %v2744, %v2886
        %v2919 = vadd.f32 %v2746, %v2887
        %v2920 = vadd.f32 %v2750, %v2888
        %v2921 = vadd.f32 %v2752, %v2889
        %v2922 = vadd.f32 %v2754, %v2890
        %v2923 = vadd.f32 %v2756, %v2891
        %v2924 = vadd.f32 %v2760, %v2892
        %v2925 = vadd.f32 %v2762, %v2893
        %v2926 = vadd.f32 %v2764, %v2894
        %v2927 = vadd.f32 %v2766, %v2895
        %v2928 = vmul.f32 %v2896, 0.7978846
        %v2929 = vmul.f32 %v2897, 0.7978846
        %v2930 = vmul.f32 %v2898, 0.7978846
        %v2931 = vmul.f32 %v2899, 0.7978846
        %v2932 = vmul.f32 %v2900, 0.7978846
        %v2933 = vmul.f32 %v2901, 0.7978846
        %v2934 = vmul.f32 %v2902, 0.7978846
        %v2935 = vmul.f32 %v2903, 0.7978846
        %v2936 = vmul.f32 %v2904, 0.7978846
        %v2937 = vmul.f32 %v2905, 0.7978846
        %v2938 = vmul.f32 %v2906, 0.7978846
        %v2939 = vmul.f32 %v2907, 0.7978846
        %v2940 = vmul.f32 %v2908, 0.7978846
        %v2941 = vmul.f32 %v2909, 0.7978846
        %v2942 = vmul.f32 %v2910, 0.7978846
        %v2943 = vmul.f32 %v2911, 0.7978846
        %v2944 = vmul.f32 %v2912, 0.7978846
        %v2945 = vmul.f32 %v2913, 0.7978846
        %v2946 = vmul.f32 %v2914, 0.7978846
        %v2947 = vmul.f32 %v2915, 0.7978846
        %v2948 = vmul.f32 %v2916, 0.7978846
        %v2949 = vmul.f32 %v2917, 0.7978846
        %v2950 = vmul.f32 %v2918, 0.7978846
        %v2951 = vmul.f32 %v2919, 0.7978846
        %v2952 = vmul.f32 %v2920, 0.7978846
        %v2953 = vmul.f32 %v2921, 0.7978846
        %v2954 = vmul.f32 %v2922, 0.7978846
        %v2955 = vmul.f32 %v2923, 0.7978846
        %v2956 = vmul.f32 %v2924, 0.7978846
        %v2957 = vmul.f32 %v2925, 0.7978846
        %v2958 = vmul.f32 %v2926, 0.7978846
        %v2959 = vmul.f32 %v2927, 0.7978846
        %v2960 = vtanh.pop %v2928
        %v2961 = vtanh.pop %v2929
        %v2962 = vtanh.pop %v2930
        %v2963 = vtanh.pop %v2931
        %v2964 = vtanh.pop %v2932
        %v2965 = vtanh.pop %v2933
        %v2966 = vtanh.pop %v2934
        %v2967 = vtanh.pop %v2935
        %v2968 = vtanh.pop %v2936
        %v2969 = vtanh.pop %v2937
        %v2970 = vtanh.pop %v2938
        %v2971 = vtanh.pop %v2939
        %v2972 = vtanh.pop %v2940
        %v2973 = vtanh.pop %v2941
        %v2974 = vtanh.pop %v2942
        %v2975 = vtanh.pop %v2943
        %v2976 = vtanh.pop %v2944
        %v2977 = vtanh.pop %v2945
        %v2978 = vtanh.pop %v2946
        %v2979 = vtanh.pop %v2947
        %v2980 = vtanh.pop %v2948
        %v2981 = vtanh.pop %v2949
        %v2982 = vtanh.pop %v2950
        %v2983 = vtanh.pop %v2951
        %v2984 = vtanh.pop %v2952
        %v2985 = vtanh.pop %v2953
        %v2986 = vtanh.pop %v2954
        %v2987 = vtanh.pop %v2955
        %v2988 = vtanh.pop %v2956
        %v2989 = vtanh.pop %v2957
        %v2990 = vtanh.pop %v2958
        %v2991 = vtanh.pop %v2959
        %v2992 = vadd.f32 %v2960, 1.0
        %v2993 = vadd.f32 %v2961, 1.0
        %v2994 = vadd.f32 %v2962, 1.0
        %v2995 = vadd.f32 %v2963, 1.0
        %v2996 = vadd.f32 %v2964, 1.0
        %v2997 = vadd.f32 %v2965, 1.0
        %v2998 = vadd.f32 %v2966, 1.0
        %v2999 = vadd.f32 %v2967, 1.0
        %v3000 = vadd.f32 %v2968, 1.0
        %v3001 = vadd.f32 %v2969, 1.0
        %v3002 = vadd.f32 %v2970, 1.0
        %v3003 = vadd.f32 %v2971, 1.0
        %v3004 = vadd.f32 %v2972, 1.0
        %v3005 = vadd.f32 %v2973, 1.0
        %v3006 = vadd.f32 %v2974, 1.0
        %v3007 = vadd.f32 %v2975, 1.0
        %v3008 = vadd.f32 %v2976, 1.0
        %v3009 = vadd.f32 %v2977, 1.0
        %v3010 = vadd.f32 %v2978, 1.0
        %v3011 = vadd.f32 %v2979, 1.0
        %v3012 = vadd.f32 %v2980, 1.0
        %v3013 = vadd.f32 %v2981, 1.0
        %v3014 = vadd.f32 %v2982, 1.0
        %v3015 = vadd.f32 %v2983, 1.0
        %v3016 = vadd.f32 %v2984, 1.0
        %v3017 = vadd.f32 %v2985, 1.0
        %v3018 = vadd.f32 %v2986, 1.0
        %v3019 = vadd.f32 %v2987, 1.0
        %v3020 = vadd.f32 %v2988, 1.0
        %v3021 = vadd.f32 %v2989, 1.0
        %v3022 = vadd.f32 %v2990, 1.0
        %v3023 = vadd.f32 %v2991, 1.0
        %v3024 = vmul.f32 %v2768, %v2992
        %v3025 = vmul.f32 %v2769, %v2993
        %v3026 = vmul.f32 %v2770, %v2994
        %v3027 = vmul.f32 %v2771, %v2995
        %v3028 = vmul.f32 %v2772, %v2996
        %v3029 = vmul.f32 %v2773, %v2997
        %v3030 = vmul.f32 %v2774, %v2998
        %v3031 = vmul.f32 %v2775, %v2999
        %v3032 = vmul.f32 %v2776, %v3000
        %v3033 = vmul.f32 %v2777, %v3001
        %v3034 = vmul.f32 %v2778, %v3002
        %v3035 = vmul.f32 %v2779, %v3003
        %v3036 = vmul.f32 %v2780, %v3004
        %v3037 = vmul.f32 %v2781, %v3005
        %v3038 = vmul.f32 %v2782, %v3006
        %v3039 = vmul.f32 %v2783, %v3007
        %v3040 = vmul.f32 %v2784, %v3008
        %v3041 = vmul.f32 %v2785, %v3009
        %v3042 = vmul.f32 %v2786, %v3010
        %v3043 = vmul.f32 %v2787, %v3011
        %v3044 = vmul.f32 %v2788, %v3012
        %v3045 = vmul.f32 %v2789, %v3013
        %v3046 = vmul.f32 %v2790, %v3014
        %v3047 = vmul.f32 %v2791, %v3015
        %v3048 = vmul.f32 %v2792, %v3016
        %v3049 = vmul.f32 %v2793, %v3017
        %v3050 = vmul.f32 %v2794, %v3018
        %v3051 = vmul.f32 %v2795, %v3019
        %v3052 = vmul.f32 %v2796, %v3020
        %v3053 = vmul.f32 %v2797, %v3021
        %v3054 = vmul.f32 %v2798, %v3022
        %v3055 = vmul.f32 %v2799, %v3023
        %v3056 = vpack.c.bf16 %v3026, %v3024
        %v3057 = vpack.c.bf16 %v3027, %v3025
        %v3058 = vpack.c.bf16 %v3030, %v3028
        %v3059 = vpack.c.bf16 %v3031, %v3029
        %v3060 = vpack.c.bf16 %v3034, %v3032
        %v3061 = vpack.c.bf16 %v3035, %v3033
        %v3062 = vpack.c.bf16 %v3038, %v3036
        %v3063 = vpack.c.bf16 %v3039, %v3037
        %v3064 = vpack.c.bf16 %v3042, %v3040
        %v3065 = vpack.c.bf16 %v3043, %v3041
        %v3066 = vpack.c.bf16 %v3046, %v3044
        %v3067 = vpack.c.bf16 %v3047, %v3045
        %v3068 = vpack.c.bf16 %v3050, %v3048
        %v3069 = vpack.c.bf16 %v3051, %v3049
        %v3070 = vpack.c.bf16 %v3054, %v3052
        %v3071 = vpack.c.bf16 %v3055, %v3053
        %v3072 = vld [vmem:[#allocation10] sm:$0xf]
        %v3073 = vld [vmem:[#allocation10 + $0x4] sm:$0xf]
        %v3074 = vld [vmem:[#allocation10 + $0x8] sm:$0xf]
        %v3075 = vld [vmem:[#allocation10 + $0xc] sm:$0xf]
        %v3076 = vld [vmem:[#allocation10 + $0x10] sm:$0xf]
        %v3077 = vld [vmem:[#allocation10 + $0x14] sm:$0xf]
        %v3078 = vld [vmem:[#allocation10 + $0x18] sm:$0xf]
        %v3079 = vld [vmem:[#allocation10 + $0x1c] sm:$0xf]
        %v3080 = vld [vmem:[#allocation10 + $0x20] sm:$0xf]
        %v3081 = vld [vmem:[#allocation10 + $0x24] sm:$0xf]
        %v3082 = vld [vmem:[#allocation10 + $0x28] sm:$0xf]
        %v3083 = vld [vmem:[#allocation10 + $0x2c] sm:$0xf]
        %v3084 = vld [vmem:[#allocation10 + $0x30] sm:$0xf]
        %v3085 = vld [vmem:[#allocation10 + $0x34] sm:$0xf]
        %v3086 = vld [vmem:[#allocation10 + $0x38] sm:$0xf]
        %v3087 = vld [vmem:[#allocation10 + $0x3c] sm:$0xf]
        %v3088 = vld [vmem:[#allocation10 + $0x40] sm:$0xf]
        %v3089 = vld [vmem:[#allocation10 + $0x44] sm:$0xf]
        %v3090 = vld [vmem:[#allocation10 + $0x48] sm:$0xf]
        %v3091 = vld [vmem:[#allocation10 + $0x4c] sm:$0xf]
        %v3092 = vld [vmem:[#allocation10 + $0x50] sm:$0xf]
        %v3093 = vld [vmem:[#allocation10 + $0x54] sm:$0xf]
        %v3094 = vld [vmem:[#allocation10 + $0x58] sm:$0xf]
        %v3095 = vld [vmem:[#allocation10 + $0x5c] sm:$0xf]
        %v3096 = vld [vmem:[#allocation10 + $0x60] sm:$0xf]
        %v3097 = vld [vmem:[#allocation10 + $0x64] sm:$0xf]
        %v3098 = vld [vmem:[#allocation10 + $0x68] sm:$0xf]
        %v3099 = vld [vmem:[#allocation10 + $0x6c] sm:$0xf]
        %v3100 = vld [vmem:[#allocation10 + $0x70] sm:$0xf]
        %v3101 = vld [vmem:[#allocation10 + $0x74] sm:$0xf]
        %v3102 = vld [vmem:[#allocation10 + $0x78] sm:$0xf]
        %v3103 = vld [vmem:[#allocation10 + $0x7c] sm:$0xf]
        %v3104 = vld [vmem:[%s12] sm:$0x1]
        %v3106 = vlaneseq
        %v3107 = vshrl.u32 %v3106, 7
        %v3108 = vsub.s32 0, %v3107
        %v3109 = vrot.slane %v3104, %v3108
        %v3143 = vunpack.c.l.b16 %v3072
        %v3144 = vunpack.c.l.b16 %v3073
        %v3145 = vunpack.c.l.b16 %v3074
        %v3146 = vunpack.c.l.b16 %v3075
        %v3147 = vunpack.c.l.b16 %v3076
        %v3148 = vunpack.c.l.b16 %v3077
        %v3149 = vunpack.c.l.b16 %v3078
        %v3150 = vunpack.c.l.b16 %v3079
        %v3151 = vunpack.c.l.b16 %v3080
        %v3152 = vunpack.c.l.b16 %v3081
        %v3153 = vunpack.c.l.b16 %v3082
        %v3154 = vunpack.c.l.b16 %v3083
        %v3155 = vunpack.c.l.b16 %v3084
        %v3156 = vunpack.c.l.b16 %v3085
        %v3157 = vunpack.c.l.b16 %v3086
        %v3158 = vunpack.c.l.b16 %v3087
        %v3159 = vunpack.c.l.b16 %v3088
        %v3160 = vunpack.c.l.b16 %v3089
        %v3161 = vunpack.c.l.b16 %v3090
        %v3162 = vunpack.c.l.b16 %v3091
        %v3163 = vunpack.c.l.b16 %v3092
        %v3164 = vunpack.c.l.b16 %v3093
        %v3165 = vunpack.c.l.b16 %v3094
        %v3166 = vunpack.c.l.b16 %v3095
        %v3167 = vunpack.c.l.b16 %v3096
        %v3168 = vunpack.c.l.b16 %v3097
        %v3169 = vunpack.c.l.b16 %v3098
        %v3170 = vunpack.c.l.b16 %v3099
        %v3171 = vunpack.c.l.b16 %v3100
        %v3172 = vunpack.c.l.b16 %v3101
        %v3173 = vunpack.c.l.b16 %v3102
        %v3174 = vunpack.c.l.b16 %v3103
        %v3175 = vpack.c.b16 %v3144, %v3143
        %v3176 = vpack.c.b16 %v3146, %v3145
        %v3177 = vpack.c.b16 %v3148, %v3147
        %v3178 = vpack.c.b16 %v3150, %v3149
        %v3179 = vpack.c.b16 %v3152, %v3151
        %v3180 = vpack.c.b16 %v3154, %v3153
        %v3181 = vpack.c.b16 %v3156, %v3155
        %v3182 = vpack.c.b16 %v3158, %v3157
        %v3183 = vpack.c.b16 %v3160, %v3159
        %v3184 = vpack.c.b16 %v3162, %v3161
        %v3185 = vpack.c.b16 %v3164, %v3163
        %v3186 = vpack.c.b16 %v3166, %v3165
        %v3187 = vpack.c.b16 %v3168, %v3167
        %v3188 = vpack.c.b16 %v3170, %v3169
        %v3189 = vpack.c.b16 %v3172, %v3171
        %v3190 = vpack.c.b16 %v3174, %v3173
        %3207 = vmatprep.subr.bf16.mxu0 0
        %3208 = vmatpush1.bf16.msra.mxu0 %v3175
        %3209 = vmatprep.subr.bf16.mxu0 0
        %3210 = vmatpush1.bf16.msra.mxu0 %v3176
        %3211 = vmatprep.subr.bf16.mxu0 0
        %3212 = vmatpush1.bf16.msra.mxu0 %v3177
        %3213 = vmatprep.subr.bf16.mxu0 0
        %3214 = vmatpush1.bf16.msra.mxu0 %v3178
        %3215 = vmatprep.subr.bf16.mxu0 0
        %3216 = vmatpush1.bf16.msra.mxu0 %v3179
        %3217 = vmatprep.subr.bf16.mxu0 0
        %3218 = vmatpush1.bf16.msra.mxu0 %v3180
        %3219 = vmatprep.subr.bf16.mxu0 0
        %3220 = vmatpush1.bf16.msra.mxu0 %v3181
        %3221 = vmatprep.subr.bf16.mxu0 0
        %3222 = vmatpush1.bf16.msra.mxu0 %v3182
        %3223 = vmatprep.subr.bf16.mxu0 0
        %3224 = vmatpush1.bf16.msra.mxu0 %v3183
        %3225 = vmatprep.subr.bf16.mxu0 0
        %3226 = vmatpush1.bf16.msra.mxu0 %v3184
        %3227 = vmatprep.subr.bf16.mxu0 0
        %3228 = vmatpush1.bf16.msra.mxu0 %v3185
        %3229 = vmatprep.subr.bf16.mxu0 0
        %3230 = vmatpush1.bf16.msra.mxu0 %v3186
        %3231 = vmatprep.subr.bf16.mxu0 0
        %3232 = vmatpush1.bf16.msra.mxu0 %v3187
        %3233 = vmatprep.subr.bf16.mxu0 0
        %3234 = vmatpush1.bf16.msra.mxu0 %v3188
        %3235 = vmatprep.subr.bf16.mxu0 0
        %3236 = vmatpush1.bf16.msra.mxu0 %v3189
        %3237 = vmatprep.subr.bf16.mxu0 0
        %3238 = vmatpush1.bf16.msra.mxu0 %v3190
        %3239 = vmatprep.mubr.bf16.mxu0 %v3057
        %3240 = vmatmul.mubr.bf16.gmra.mrb[0].mxu0 %v3056
        %v3241 = vpop.f32.mrb[0].mxu0
        %v3242 = vadd.f32 %v3109, %v3241
        %v3243 = vpop.f32.mrb[0].mxu0
        %v3244 = vpop.f32.mrb[0].mxu0
        %v3245 = vadd.f32 %v3109, %v3244
        %v3246 = vpop.f32.mrb[0].mxu0
        %3247 = vmatprep.mubr.bf16.mxu0 %v3059
        %3248 = vmatmul.mubr.bf16.gmra.mrb[0].mxu0 %v3058
        %v3249 = vpop.f32.mrb[0].mxu0
        %v3250 = vadd.f32 %v3109, %v3249
        %v3251 = vpop.f32.mrb[0].mxu0
        %v3252 = vpop.f32.mrb[0].mxu0
        %v3253 = vadd.f32 %v3109, %v3252
        %v3254 = vpop.f32.mrb[0].mxu0
        %3255 = vmatprep.mubr.bf16.mxu0 %v3061
        %3256 = vmatmul.mubr.bf16.gmra.mrb[0].mxu0 %v3060
        %v3257 = vpop.f32.mrb[0].mxu0
        %v3258 = vadd.f32 %v3109, %v3257
        %v3259 = vpop.f32.mrb[0].mxu0
        %v3260 = vpop.f32.mrb[0].mxu0
        %v3261 = vadd.f32 %v3109, %v3260
        %v3262 = vpop.f32.mrb[0].mxu0
        %3263 = vmatprep.mubr.bf16.mxu0 %v3063
        %3264 = vmatmul.mubr.bf16.gmra.mrb[0].mxu0 %v3062
        %v3265 = vpop.f32.mrb[0].mxu0
        %v3266 = vadd.f32 %v3109, %v3265
        %v3267 = vpop.f32.mrb[0].mxu0
        %v3268 = vpop.f32.mrb[0].mxu0
        %v3269 = vadd.f32 %v3109, %v3268
        %v3270 = vpop.f32.mrb[0].mxu0
        %3271 = vmatprep.mubr.bf16.mxu0 %v3065
        %3272 = vmatmul.mubr.bf16.gmra.mrb[0].mxu0 %v3064
        %v3273 = vpop.f32.mrb[0].mxu0
        %v3274 = vadd.f32 %v3109, %v3273
        %v3275 = vpop.f32.mrb[0].mxu0
        %v3276 = vpop.f32.mrb[0].mxu0
        %v3277 = vadd.f32 %v3109, %v3276
        %v3278 = vpop.f32.mrb[0].mxu0
        %3279 = vmatprep.mubr.bf16.mxu0 %v3067
        %3280 = vmatmul.mubr.bf16.gmra.mrb[0].mxu0 %v3066
        %v3281 = vpop.f32.mrb[0].mxu0
        %v3282 = vadd.f32 %v3109, %v3281
        %v3283 = vpop.f32.mrb[0].mxu0
        %v3284 = vpop.f32.mrb[0].mxu0
        %v3285 = vadd.f32 %v3109, %v3284
        %v3286 = vpop.f32.mrb[0].mxu0
        %3287 = vmatprep.mubr.bf16.mxu0 %v3069
        %3288 = vmatmul.mubr.bf16.gmra.mrb[0].mxu0 %v3068
        %v3289 = vpop.f32.mrb[0].mxu0
        %v3290 = vadd.f32 %v3109, %v3289
        %v3291 = vpop.f32.mrb[0].mxu0
        %v3292 = vpop.f32.mrb[0].mxu0
        %v3293 = vadd.f32 %v3109, %v3292
        %v3294 = vpop.f32.mrb[0].mxu0
        %3295 = vmatprep.mubr.bf16.mxu0 %v3071
        %3296 = vmatmul.mubr.bf16.gmra.mrb[0].mxu0 %v3070
        %v3297 = vpop.f32.mrb[0].mxu0
        %v3298 = vadd.f32 %v3109, %v3297
        %v3299 = vpop.f32.mrb[0].mxu0
        %v3300 = vpop.f32.mrb[0].mxu0
        %v3301 = vadd.f32 %v3109, %v3300
        %v3302 = vpop.f32.mrb[0].mxu0
        %3303 = vdwg.mxu0
        %v3304 = vadd.f32 %v2301, %v3242
        %v3305 = vadd.f32 %v2302, %v3245
        %v3306 = vadd.f32 %v2303, %v3250
        %v3307 = vadd.f32 %v2304, %v3253
        %v3308 = vadd.f32 %v2305, %v3258
        %v3309 = vadd.f32 %v2306, %v3261
        %v3310 = vadd.f32 %v2307, %v3266
        %v3311 = vadd.f32 %v2308, %v3269
        %v3312 = vadd.f32 %v2309, %v3274
        %v3313 = vadd.f32 %v2310, %v3277
        %v3314 = vadd.f32 %v2311, %v3282
        %v3315 = vadd.f32 %v2312, %v3285
        %v3316 = vadd.f32 %v2313, %v3290
        %v3317 = vadd.f32 %v2314, %v3293
        %v3318 = vadd.f32 %v2315, %v3298
        %v3319 = vadd.f32 %v2316, %v3301
        %3320 = vst [vmem:[%s516] sm:$0xff] %v3304
        %3321 = vst [vmem:[%s516 + $0x8] sm:$0xff] %v3305
        %3322 = vst [vmem:[%s516 + $0x10] sm:$0xff] %v3306
        %3323 = vst [vmem:[%s516 + $0x18] sm:$0xff] %v3307
        %3324 = vst [vmem:[%s516 + $0x20] sm:$0xff] %v3308
        %3325 = vst [vmem:[%s516 + $0x28] sm:$0xff] %v3309
        %3326 = vst [vmem:[%s516 + $0x30] sm:$0xff] %v3310
        %3327 = vst [vmem:[%s516 + $0x38] sm:$0xff] %v3311
        %3328 = vst [vmem:[%s516 + $0x40] sm:$0xff] %v3312
        %3329 = vst [vmem:[%s516 + $0x48] sm:$0xff] %v3313
        %3330 = vst [vmem:[%s516 + $0x50] sm:$0xff] %v3314
        %3331 = vst [vmem:[%s516 + $0x58] sm:$0xff] %v3315
        %3332 = vst [vmem:[%s516 + $0x60] sm:$0xff] %v3316
        %3333 = vst [vmem:[%s516 + $0x68] sm:$0xff] %v3317
        %3334 = vst [vmem:[%s516 + $0x70] sm:$0xff] %v3318
        %3335 = vst [vmem:[%s516 + $0x78] sm:$0xff] %v3319
        %s3336 = sand.u32 %s318, 1
        %s3337 = scalar_lea.sflag [#allocation4], %s3336
        %s3338 = sand.u32 %s318, 1
        %s3339 = smul.addr %s3338, 128
        %s3340 = scalar_lea.vmem [#allocation11], %s3339
        // Predicated region
        $region93: #{tpu_custom_call.1} parent=71 // pred_check
          %p3341 = pneg %p328
        $region94: #{tpu_custom_call.1} parent=71 // pred_check_branch
          %3343 = sbr.rel (%p3341) target = $region96
        $region95: #{tpu_custom_call.1} parent=71 // pred_region
          %s3345 = ssub.s32 2048, 2048
          %3346 = vsyncadd %s3337, %s3345
          %s3347 = smul.addr %s32, 16
          %s3348 = smul.addr %s3347, 128
          %s3349 = scalar_lea.hbm %s13, %s3348
          %s3350 = sshll.u32 %s3340, 4
          %s3351 = int_to_ptr.vmem [resolvable:$true] %s3350
          %3356 = dma.vmem_to_hbm [thread:$0]  %s3351, 2048, %s3349, %s3337, 128, 128, 8
        $region96: #{tpu_custom_call.1} parent=71 // pred_fallthru
          _
      $region72: #{tpu_custom_call.1} parent=5 // pred_fallthru
        _
      %p3357 = scmp.le.s32.totalorder 2, %s27
      // Predicated region
      $region97: #{tpu_custom_call.1} parent=5 // pred_check
        %p3358 = pneg %p3357
      $region98: #{tpu_custom_call.1} parent=5 // pred_check_branch
        %3360 = sbr.rel (%p3358) target = $region100
      $region99: #{tpu_custom_call.1} parent=5 // pred_region
        %s3361 = ssub.s32 %s27, 2
        // Predicated region
        $region101: #{tpu_custom_call.1} parent=99 // pred_check
          %p3362 = pneg %p334
        $region102: #{tpu_custom_call.1} parent=99 // pred_check_branch
          %3364 = sbr.rel (%p3362) target = $region104
        $region103: #{tpu_custom_call.1} parent=99 // pred_region
          %s3365 = sand.u32 %s319, 1
          %s3366 = scalar_lea.sflag [#allocation4], %s3365
          %s3367 = sand.u32 %s319, 1
          %s3368 = smul.addr %s3367, 128
          %s3369 = scalar_lea.vmem [#allocation11], %s3368
          %3370 = dma.done %s3366, 2048
        $region104: #{tpu_custom_call.1} parent=99 // pred_fallthru
          _
      $region100: #{tpu_custom_call.1} parent=5 // pred_fallthru
        _
    $region6: #{tpu_custom_call.1} parent=1 // loop_footer
      %s31 = sadd.s32 1, %s27
    $region7: #{tpu_custom_call.1} parent=1 // loop_footer_branch
      %26 = sbr.rel target = $region3
    $region8: #{tpu_custom_call.1} parent=1 // loop_exit
      _
    %3371 = vsyncpa [#allocation3], 1
    %s3372 = scalar_lea.sflag [#allocation3], 1
    %3373 = vsyncpa %s3372, 1
    %3374 = vsyncpa [#allocation6], 1
    %3375 = vsyncpa [#allocation9], 1
    %3376 = vsyncpa [#allocation4], 1
    %s3377 = scalar_lea.sflag [#allocation4], 1
    %3378 = vsyncpa %s3377, 1

</llo_original>
